<compile_context>
chip_gen: v7x
topology: tpu7x:2x2x1
jax: 0.10.0
libtpu: 0.0.40
codegen_flags: <defaults>
</compile_context>

<pallas_src>
import functools

import jax
import jax.numpy as jnp
from jax.experimental import pallas as pl
from jax.experimental.pallas import tpu as pltpu


def _round_up(x, m):
    return (x + m - 1) // m * m


# ----- Pass 1: fused patch-gather conv (kh*kw shifted matmuls) + per-image channel stats -----
def _conv_stats_kernel(x_ref, w_ref, y_ref, sum_ref, sq_ref, *, kh, kw, wp, hout, wout):
    L = hout * wp
    cout_p = y_ref.shape[-1]

    x = x_ref[0]                                       # (FL, Cin) f32, loaded once
    acc = jnp.zeros((L, cout_p), jnp.float32)
    for i in range(kh):                                # unrolled: kh*kw shifted matmuls on the MXU
        for j in range(kw):
            s = i * wp + j                             # static row offset into the flattened image
            acc = acc + jnp.dot(x[s:s + L, :], w_ref[i * kw + j],
                                preferred_element_type=jnp.float32)

    # bf16 intermediate: halves the (N*L, Coutp) HBM round trip between the two passes.
    y_ref[...] = acc.astype(y_ref.dtype)

    # Per-channel batch stats over VALID output columns only (c < Wout); columns
    # [wout, wp) of each row group are layout junk and are masked out.  Padded
    # output channels are zero by construction.
    col = jax.lax.broadcasted_iota(jnp.int32, (L, 1), 0) % wp
    yv = jnp.where(col < wout, acc, 0.0)
    s1 = jnp.sum(yv, axis=0, keepdims=True)            # (1, Coutp) f32
    s2 = jnp.sum(yv * yv, axis=0, keepdims=True)
    # Tile-aligned (1, 8, Coutp) partial-stat blocks (one per image); epilogue reads row 0.
    sum_ref[...] = jnp.broadcast_to(s1[None], sum_ref.shape)
    sq_ref[...] = jnp.broadcast_to(s2[None], sq_ref.shape)


# ----- Pass 2: folded BatchNorm affine + LeakyReLU (bf16 in, f32 math, f32 out) -----
def _bn_lrelu_kernel(y_ref, scale_ref, shift_ref, o_ref, *, neg_slope):
    z = y_ref[...].astype(jnp.float32) * scale_ref[...] + shift_ref[...]
    o_ref[...] = jnp.where(z > 0, z, neg_slope * z).astype(o_ref.dtype)


def basic_conv_forward(x, weight, bias, gamma, beta, *, stride=1, padding=0,
                       eps=1e-5, neg_slope=0.2):
    """BasicConv forward. x: (N, Cin, H, W) f32 NCHW; weight: (Cout, Cin, KH, KW). Returns NCHW."""
    del bias  # A per-channel constant before training-mode BatchNorm cancels exactly (no-op).
    if stride != 1:
        # TODO(synk): support stride > 1 via strided row slices (pl.ds(start, L, stride=s)).
        raise NotImplementedError("fused-gather path implements stride=1 (the module default)")

    n, cin, h, w = x.shape
    cout, _, kh, kw = weight.shape

    hin = h + 2 * padding
    win = w + 2 * padding
    hout = hin - kh + 1
    wout = win - kw + 1
    wp = _round_up(win, 8)                  # pad W so flattened row groups stay sublane-aligned
    L = hout * wp                           # conv-output rows per image (flattened (r, c) domain)
    tail = _round_up(max(kw - 1, 1), 8)     # slack so the (kh-1, kw-1) tap never reads OOB
    fl = hin * wp + tail                    # flattened input rows per image
    cout_p = _round_up(cout, 128)           # lane-dense Cout for the MXU and unmasked stores

    # --- layout plumbing (NO im2col): NCHW -> padded NHWC -> (N, Hin*Wp, Cin) f32 ---
    x_nhwc = jnp.transpose(x, (0, 2, 3, 1)).astype(jnp.float32)
    x_nhwc = jnp.pad(x_nhwc, ((0, 0), (padding, padding),
                              (padding, padding + (wp - win)), (0, 0)))
    x_flat = jnp.pad(x_nhwc.reshape(n, hin * wp, cin), ((0, 0), (0, tail), (0, 0)))

    # Weights as (tap, Cin, Coutp), tap = i*kw + j, lane-dense on Cout.
    w_mat = jnp.transpose(weight, (2, 3, 1, 0)).reshape(kh * kw, cin, cout).astype(jnp.float32)
    w_p = jnp.zeros((kh * kw, cin, cout_p), jnp.float32).at[:, :, :cout].set(w_mat)

    cparams = pltpu.CompilerParams(dimension_semantics=("parallel",),
                                   vmem_limit_bytes=32 * 1024 * 1024)

    # --- pass 1: fused gather + conv matmuls + per-image partial statistics ---
    y_conv, psum, psq = pl.pallas_call(
        functools.partial(_conv_stats_kernel, kh=kh, kw=kw, wp=wp, hout=hout, wout=wout),
        out_shape=(
            jax.ShapeDtypeStruct((n * L, cout_p), jnp.bfloat16),
            jax.ShapeDtypeStruct((n, 8, cout_p), jnp.float32),
            jax.ShapeDtypeStruct((n, 8, cout_p), jnp.float32),
        ),
        grid=(n,),
        in_specs=[
            pl.BlockSpec((1, fl, cin), lambda b: (b, 0, 0)),
            pl.BlockSpec((kh * kw, cin, cout_p), lambda b: (0, 0, 0)),
        ],
        out_specs=(
            pl.BlockSpec((L, cout_p), lambda b: (b, 0)),
            pl.BlockSpec((1, 8, cout_p), lambda b: (b, 0, 0)),
            pl.BlockSpec((1, 8, cout_p), lambda b: (b, 0, 0)),
        ),
        compiler_params=cparams,
    )(x_flat, w_p)

    # --- fold training-mode BN into a per-channel affine (tiny Cout-sized epilogue) ---
    m = n * hout * wout                              # TRUE element count (junk columns masked)
    ch_sum = jnp.sum(psum[:, 0, :], axis=0)          # reduce per-image partials
    ch_sq = jnp.sum(psq[:, 0, :], axis=0)
    mean = ch_sum / m
    var = jnp.maximum(ch_sq / m - mean * mean, 0.0)  # biased var (torch training-mode BN)
    rstd = jax.lax.rsqrt(var + eps)
    gamma_p = jnp.zeros((cout_p,), jnp.float32).at[:cout].set(gamma.astype(jnp.float32))
    beta_p = jnp.zeros((cout_p,), jnp.float32).at[:cout].set(beta.astype(jnp.float32))
    scale = (gamma_p * rstd).reshape(1, cout_p)
    shift = (beta_p - mean * gamma_p * rstd).reshape(1, cout_p)

    # --- pass 2: normalize + LeakyReLU; whole-image tiles, "parallel" (megacore on v7x) ---
    out_flat = pl.pallas_call(
        functools.partial(_bn_lrelu_kernel, neg_slope=neg_slope),
        out_shape=jax.ShapeDtypeStruct((n * L, cout_p), jnp.float32),
        grid=(n,),
        in_specs=[
            pl.BlockSpec((L, cout_p), lambda i: (i, 0)),
            pl.BlockSpec((1, cout_p), lambda i: (0, 0)),
            pl.BlockSpec((1, cout_p), lambda i: (0, 0)),
        ],
        out_specs=pl.BlockSpec((L, cout_p), lambda i: (i, 0)),
        compiler_params=cparams,
    )(y_conv, scale, shift)

    # Strip layout padding; the module contract is NCHW, so a final XLA transpose is required.
    # TODO(synk): keep NHWC (or flat (M, Cout)) end-to-end if the downstream consumer allows it.
    out = out_flat.reshape(n, hout, wp, cout_p)[:, :, :wout, :cout]
    return jnp.transpose(out, (0, 3, 1, 2))


if __name__ == "__main__":
    key = jax.random.PRNGKey(0)
    k_x, k_w, k_b = jax.random.split(key, 3)

    N, Cin, H, W = 2, 4, 16, 16
    Cout, KH, KW = 8, 3, 3

    x = jax.random.normal(k_x, (N, Cin, H, W), dtype=jnp.float32)
    weight = jax.random.normal(k_w, (Cout, Cin, KH, KW), dtype=jnp.float32) * 0.1
    bias = jax.random.normal(k_b, (Cout,), dtype=jnp.float32) * 0.01
    gamma = jnp.ones((Cout,), dtype=jnp.float32)   # nn.BatchNorm2d default affine init
    beta = jnp.zeros((Cout,), dtype=jnp.float32)

    out = basic_conv_forward(x, weight, bias, gamma, beta, stride=1, padding=0)
    out = jax.block_until_ready(out)
    assert out.shape == (N, Cout, H - KH + 1, W - KW + 1)

    # Pure-JAX f32 reference (Conv2d -> training-mode BN -> LeakyReLU) sanity check.
    y_ref = jax.lax.conv_general_dilated(
        x, weight, window_strides=(1, 1), padding="VALID",
        dimension_numbers=("NCHW", "OIHW", "NCHW")) + bias.reshape(1, -1, 1, 1)
    mu = y_ref.mean(axis=(0, 2, 3), keepdims=True)
    var = ((y_ref - mu) ** 2).mean(axis=(0, 2, 3), keepdims=True)
    z = (y_ref - mu) * jax.lax.rsqrt(var + 1e-5) * gamma.reshape(1, -1, 1, 1) \
        + beta.reshape(1, -1, 1, 1)
    ref = jnp.where(z > 0, z, 0.2 * z)
    assert jnp.allclose(out, ref, atol=5e-2, rtol=5e-2), \
        float(jnp.max(jnp.abs(out - ref)))

    print("KERNEL_OK")
</pallas_src>

<mosaic_0001>
module attributes {stable_mosaic.version = 11 : i64} {
  func.func @_conv_stats_kernel(%arg0: i32, %arg1: memref<1x264x4xf32, #tpu.memory_space<vmem>>, %arg2: memref<9x4x128xf32, #tpu.memory_space<vmem>>, %arg3: memref<224x128xbf16, #tpu.memory_space<vmem>>, %arg4: memref<1x8x128xf32, #tpu.memory_space<vmem>>, %arg5: memref<1x8x128xf32, #tpu.memory_space<vmem>>) attributes {dimension_semantics = [#tpu.dimension_semantics<parallel>], iteration_bounds = array<i64: 2>, scalar_prefetch = 0 : i64, scratch_operands = 0 : i64, tpu.core_type = #tpu.core_type<tc>, window_params = [{transform_indices = @transform_0, window_bounds = array<i64: 1, 264, 4>}, {pipeline_mode = #tpu.pipeline_mode<synchronous>, transform_indices = @transform_1, window_bounds = array<i64: 9, 4, 128>}, {transform_indices = @transform_2, window_bounds = array<i64: 224, 128>}, {transform_indices = @transform_3, window_bounds = array<i64: 1, 8, 128>}, {transform_indices = @transform_4, window_bounds = array<i64: 1, 8, 128>}]} {
    %c0 = arith.constant 0 : index
    %c0_0 = arith.constant 0 : index
    %c0_1 = arith.constant 0 : index
    %0 = vector.load %arg1[%c0, %c0_0, %c0_1] : memref<1x264x4xf32, #tpu.memory_space<vmem>>, vector<1x264x4xf32>
    %1 = vector.shape_cast %0 : vector<1x264x4xf32> to vector<264x4xf32>
    %cst = arith.constant 0.000000e+00 : f32
    %2 = vector.broadcast %cst : f32 to vector<224x128xf32>
    %3 = vector.extract_strided_slice %1 {offsets = [0, 0], sizes = [224, 4], strides = [1, 1]} : vector<264x4xf32> to vector<224x4xf32>
    %c0_2 = arith.constant 0 : index
    %c0_3 = arith.constant 0 : index
    %c0_4 = arith.constant 0 : index
    %4 = vector.load %arg2[%c0_2, %c0_3, %c0_4] : memref<9x4x128xf32, #tpu.memory_space<vmem>>, vector<1x4x128xf32>
    %5 = vector.shape_cast %4 : vector<1x4x128xf32> to vector<4x128xf32>
    %cst_5 = arith.constant dense<0.000000e+00> : vector<224x128xf32>
    %6 = tpu.matmul %3, %5, %cst_5 {dimension_numbers = #tpu.dot_dimension_numbers<[1], [0], [0], [1], [0, 0, 1, 1], [], []>} : vector<224x4xf32>, vector<4x128xf32>, vector<224x128xf32> -> vector<224x128xf32>
    %7 = arith.addf %2, %6 : vector<224x128xf32>
    %8 = vector.extract_strided_slice %1 {offsets = [1, 0], sizes = [224, 4], strides = [1, 1]} : vector<264x4xf32> to vector<224x4xf32>
    %c1 = arith.constant 1 : index
    %c0_6 = arith.constant 0 : index
    %c0_7 = arith.constant 0 : index
    %9 = vector.load %arg2[%c1, %c0_6, %c0_7] : memref<9x4x128xf32, #tpu.memory_space<vmem>>, vector<1x4x128xf32>
    %10 = vector.shape_cast %9 : vector<1x4x128xf32> to vector<4x128xf32>
    %cst_8 = arith.constant dense<0.000000e+00> : vector<224x128xf32>
    %11 = tpu.matmul %8, %10, %cst_8 {dimension_numbers = #tpu.dot_dimension_numbers<[1], [0], [0], [1], [0, 0, 1, 1], [], []>} : vector<224x4xf32>, vector<4x128xf32>, vector<224x128xf32> -> vector<224x128xf32>
    %12 = arith.addf %7, %11 : vector<224x128xf32>
    %13 = vector.extract_strided_slice %1 {offsets = [2, 0], sizes = [224, 4], strides = [1, 1]} : vector<264x4xf32> to vector<224x4xf32>
    %c2 = arith.constant 2 : index
    %c0_9 = arith.constant 0 : index
    %c0_10 = arith.constant 0 : index
    %14 = vector.load %arg2[%c2, %c0_9, %c0_10] : memref<9x4x128xf32, #tpu.memory_space<vmem>>, vector<1x4x128xf32>
    %15 = vector.shape_cast %14 : vector<1x4x128xf32> to vector<4x128xf32>
    %cst_11 = arith.constant dense<0.000000e+00> : vector<224x128xf32>
    %16 = tpu.matmul %13, %15, %cst_11 {dimension_numbers = #tpu.dot_dimension_numbers<[1], [0], [0], [1], [0, 0, 1, 1], [], []>} : vector<224x4xf32>, vector<4x128xf32>, vector<224x128xf32> -> vector<224x128xf32>
    %17 = arith.addf %12, %16 : vector<224x128xf32>
    %18 = vector.extract_strided_slice %1 {offsets = [16, 0], sizes = [224, 4], strides = [1, 1]} : vector<264x4xf32> to vector<224x4xf32>
    %c3 = arith.constant 3 : index
    %c0_12 = arith.constant 0 : index
    %c0_13 = arith.constant 0 : index
    %19 = vector.load %arg2[%c3, %c0_12, %c0_13] : memref<9x4x128xf32, #tpu.memory_space<vmem>>, vector<1x4x128xf32>
    %20 = vector.shape_cast %19 : vector<1x4x128xf32> to vector<4x128xf32>
    %cst_14 = arith.constant dense<0.000000e+00> : vector<224x128xf32>
    %21 = tpu.matmul %18, %20, %cst_14 {dimension_numbers = #tpu.dot_dimension_numbers<[1], [0], [0], [1], [0, 0, 1, 1], [], []>} : vector<224x4xf32>, vector<4x128xf32>, vector<224x128xf32> -> vector<224x128xf32>
    %22 = arith.addf %17, %21 : vector<224x128xf32>
    %23 = vector.extract_strided_slice %1 {offsets = [17, 0], sizes = [224, 4], strides = [1, 1]} : vector<264x4xf32> to vector<224x4xf32>
    %c4 = arith.constant 4 : index
    %c0_15 = arith.constant 0 : index
    %c0_16 = arith.constant 0 : index
    %24 = vector.load %arg2[%c4, %c0_15, %c0_16] : memref<9x4x128xf32, #tpu.memory_space<vmem>>, vector<1x4x128xf32>
    %25 = vector.shape_cast %24 : vector<1x4x128xf32> to vector<4x128xf32>
    %cst_17 = arith.constant dense<0.000000e+00> : vector<224x128xf32>
    %26 = tpu.matmul %23, %25, %cst_17 {dimension_numbers = #tpu.dot_dimension_numbers<[1], [0], [0], [1], [0, 0, 1, 1], [], []>} : vector<224x4xf32>, vector<4x128xf32>, vector<224x128xf32> -> vector<224x128xf32>
    %27 = arith.addf %22, %26 : vector<224x128xf32>
    %28 = vector.extract_strided_slice %1 {offsets = [18, 0], sizes = [224, 4], strides = [1, 1]} : vector<264x4xf32> to vector<224x4xf32>
    %c5 = arith.constant 5 : index
    %c0_18 = arith.constant 0 : index
    %c0_19 = arith.constant 0 : index
    %29 = vector.load %arg2[%c5, %c0_18, %c0_19] : memref<9x4x128xf32, #tpu.memory_space<vmem>>, vector<1x4x128xf32>
    %30 = vector.shape_cast %29 : vector<1x4x128xf32> to vector<4x128xf32>
    %cst_20 = arith.constant dense<0.000000e+00> : vector<224x128xf32>
    %31 = tpu.matmul %28, %30, %cst_20 {dimension_numbers = #tpu.dot_dimension_numbers<[1], [0], [0], [1], [0, 0, 1, 1], [], []>} : vector<224x4xf32>, vector<4x128xf32>, vector<224x128xf32> -> vector<224x128xf32>
    %32 = arith.addf %27, %31 : vector<224x128xf32>
    %33 = vector.extract_strided_slice %1 {offsets = [32, 0], sizes = [224, 4], strides = [1, 1]} : vector<264x4xf32> to vector<224x4xf32>
    %c6 = arith.constant 6 : index
    %c0_21 = arith.constant 0 : index
    %c0_22 = arith.constant 0 : index
    %34 = vector.load %arg2[%c6, %c0_21, %c0_22] : memref<9x4x128xf32, #tpu.memory_space<vmem>>, vector<1x4x128xf32>
    %35 = vector.shape_cast %34 : vector<1x4x128xf32> to vector<4x128xf32>
    %cst_23 = arith.constant dense<0.000000e+00> : vector<224x128xf32>
    %36 = tpu.matmul %33, %35, %cst_23 {dimension_numbers = #tpu.dot_dimension_numbers<[1], [0], [0], [1], [0, 0, 1, 1], [], []>} : vector<224x4xf32>, vector<4x128xf32>, vector<224x128xf32> -> vector<224x128xf32>
    %37 = arith.addf %32, %36 : vector<224x128xf32>
    %38 = vector.extract_strided_slice %1 {offsets = [33, 0], sizes = [224, 4], strides = [1, 1]} : vector<264x4xf32> to vector<224x4xf32>
    %c7 = arith.constant 7 : index
    %c0_24 = arith.constant 0 : index
    %c0_25 = arith.constant 0 : index
    %39 = vector.load %arg2[%c7, %c0_24, %c0_25] : memref<9x4x128xf32, #tpu.memory_space<vmem>>, vector<1x4x128xf32>
    %40 = vector.shape_cast %39 : vector<1x4x128xf32> to vector<4x128xf32>
    %cst_26 = arith.constant dense<0.000000e+00> : vector<224x128xf32>
    %41 = tpu.matmul %38, %40, %cst_26 {dimension_numbers = #tpu.dot_dimension_numbers<[1], [0], [0], [1], [0, 0, 1, 1], [], []>} : vector<224x4xf32>, vector<4x128xf32>, vector<224x128xf32> -> vector<224x128xf32>
    %42 = arith.addf %37, %41 : vector<224x128xf32>
    %43 = vector.extract_strided_slice %1 {offsets = [34, 0], sizes = [224, 4], strides = [1, 1]} : vector<264x4xf32> to vector<224x4xf32>
    %c8 = arith.constant 8 : index
    %c0_27 = arith.constant 0 : index
    %c0_28 = arith.constant 0 : index
    %44 = vector.load %arg2[%c8, %c0_27, %c0_28] : memref<9x4x128xf32, #tpu.memory_space<vmem>>, vector<1x4x128xf32>
    %45 = vector.shape_cast %44 : vector<1x4x128xf32> to vector<4x128xf32>
    %cst_29 = arith.constant dense<0.000000e+00> : vector<224x128xf32>
    %46 = tpu.matmul %43, %45, %cst_29 {dimension_numbers = #tpu.dot_dimension_numbers<[1], [0], [0], [1], [0, 0, 1, 1], [], []>} : vector<224x4xf32>, vector<4x128xf32>, vector<224x128xf32> -> vector<224x128xf32>
    %47 = arith.addf %42, %46 : vector<224x128xf32>
    %48 = arith.truncf %47 : vector<224x128xf32> to vector<224x128xbf16>
    %c0_30 = arith.constant 0 : index
    %c0_31 = arith.constant 0 : index
    %49 = vector.load %arg3[%c0_30, %c0_31] : memref<224x128xbf16, #tpu.memory_space<vmem>>, vector<224x128xbf16>
    tpu.vector_store %arg3[%c0_30, %c0_31], %48 {strides = array<i32>} : memref<224x128xbf16, #tpu.memory_space<vmem>>, vector<224x128xbf16>,
    %50 = tpu.iota {dimensions = array<i32: 0>} : vector<224x1xi32>
    %c16_i32 = arith.constant 16 : i32
    %c0_i32 = arith.constant 0 : i32
    %51 = arith.cmpi eq, %c16_i32, %c0_i32 : i32
    %c1_i32 = arith.constant 1 : i32
    %52 = arith.select %51, %c1_i32, %c16_i32 : i32
    %53 = vector.broadcast %52 : i32 to vector<224x1xi32>
    %54 = arith.remsi %50, %53 : vector<224x1xi32>
    %c0_i32_32 = arith.constant 0 : i32
    %55 = vector.broadcast %c0_i32_32 : i32 to vector<224x1xi32>
    %56 = arith.cmpi ne, %54, %55 : vector<224x1xi32>
    %c0_i32_33 = arith.constant 0 : i32
    %57 = vector.broadcast %c0_i32_33 : i32 to vector<224x1xi32>
    %58 = arith.cmpi slt, %54, %57 : vector<224x1xi32>
    %c0_i32_34 = arith.constant 0 : i32
    %59 = arith.cmpi slt, %52, %c0_i32_34 : i32
    %60 = vector.broadcast %59 : i1 to vector<224x1xi1>
    %61 = vector.broadcast %60 : vector<224x1xi1> to vector<224x1xi1>
    %62 = arith.xori %58, %61 : vector<224x1xi1>
    %63 = arith.andi %62, %56 : vector<224x1xi1>
    %64 = vector.broadcast %52 : i32 to vector<224x1xi32>
    %65 = arith.addi %54, %64 : vector<224x1xi32>
    %66 = arith.select %63, %65, %54 : vector<224x1xi1>, vector<224x1xi32>
    %c14_i32 = arith.constant 14 : i32
    %67 = vector.broadcast %c14_i32 : i32 to vector<224x1xi32>
    %68 = arith.cmpi slt, %66, %67 : vector<224x1xi32>
    %cst_35 = arith.constant 0.000000e+00 : f32
    %69 = vector.shape_cast %68 : vector<224x1xi1> to vector<224x1xi1>
    %70 = vector.broadcast %69 : vector<224x1xi1> to vector<224x128xi1>
    %71 = vector.broadcast %cst_35 : f32 to vector<224x128xf32>
    %72 = arith.select %70, %47, %71 : vector<224x128xi1>, vector<224x128xf32>
    %cst_36 = arith.constant dense<0.000000e+00> : vector<128xf32>
    %73 = vector.multi_reduction <add>, %72, %cst_36 [0] : vector<224x128xf32> to vector<128xf32>
    %74 = vector.shape_cast %73 : vector<128xf32> to vector<1x128xf32>
    %75 = arith.mulf %72, %72 : vector<224x128xf32>
    %cst_37 = arith.constant dense<0.000000e+00> : vector<128xf32>
    %76 = vector.multi_reduction <add>, %75, %cst_37 [0] : vector<224x128xf32> to vector<128xf32>
    %77 = vector.shape_cast %76 : vector<128xf32> to vector<1x128xf32>
    %78 = vector.shape_cast %74 : vector<1x128xf32> to vector<1x1x128xf32>
    %79 = vector.shape_cast %78 : vector<1x1x128xf32> to vector<1x1x128xf32>
    %80 = vector.broadcast %79 : vector<1x1x128xf32> to vector<1x8x128xf32>
    %c0_38 = arith.constant 0 : index
    %c0_39 = arith.constant 0 : index
    %c0_40 = arith.constant 0 : index
    %81 = vector.load %arg4[%c0_38, %c0_39, %c0_40] : memref<1x8x128xf32, #tpu.memory_space<vmem>>, vector<1x8x128xf32>
    tpu.vector_store %arg4[%c0_38, %c0_39, %c0_40], %80 {strides = array<i32>} : memref<1x8x128xf32, #tpu.memory_space<vmem>>, vector<1x8x128xf32>,
    %82 = vector.shape_cast %77 : vector<1x128xf32> to vector<1x1x128xf32>
    %83 = vector.shape_cast %82 : vector<1x1x128xf32> to vector<1x1x128xf32>
    %84 = vector.broadcast %83 : vector<1x1x128xf32> to vector<1x8x128xf32>
    %c0_41 = arith.constant 0 : index
    %c0_42 = arith.constant 0 : index
    %c0_43 = arith.constant 0 : index
    %85 = vector.load %arg5[%c0_41, %c0_42, %c0_43] : memref<1x8x128xf32, #tpu.memory_space<vmem>>, vector<1x8x128xf32>
    tpu.vector_store %arg5[%c0_41, %c0_42, %c0_43], %84 {strides = array<i32>} : memref<1x8x128xf32, #tpu.memory_space<vmem>>, vector<1x8x128xf32>,
    return
  }
  func.func @transform_0(%arg0: i32) -> (i32, i32, i32) {
    %c0_i32 = arith.constant 0 : i32
    %c0_i32_0 = arith.constant 0 : i32
    %c0_i32_1 = arith.constant 0 : i32
    return %arg0, %c0_i32, %c0_i32_0 : i32, i32, i32
  }
  func.func @transform_1(%arg0: i32) -> (i32, i32, i32) {
    %c0_i32 = arith.constant 0 : i32
    %c0_i32_0 = arith.constant 0 : i32
    %c0_i32_1 = arith.constant 0 : i32
    %c0_i32_2 = arith.constant 0 : i32
    return %c0_i32, %c0_i32_0, %c0_i32_1 : i32, i32, i32
  }
  func.func @transform_2(%arg0: i32) -> (i32, i32) {
    %c0_i32 = arith.constant 0 : i32
    %c0_i32_0 = arith.constant 0 : i32
    return %arg0, %c0_i32 : i32, i32
  }
  func.func @transform_3(%arg0: i32) -> (i32, i32, i32) {
    %c0_i32 = arith.constant 0 : i32
    %c0_i32_0 = arith.constant 0 : i32
    %c0_i32_1 = arith.constant 0 : i32
    return %arg0, %c0_i32, %c0_i32_0 : i32, i32, i32
  }
  func.func @transform_4(%arg0: i32) -> (i32, i32, i32) {
    %c0_i32 = arith.constant 0 : i32
    %c0_i32_0 = arith.constant 0 : i32
    %c0_i32_1 = arith.constant 0 : i32
    return %arg0, %c0_i32, %c0_i32_0 : i32, i32, i32
  }
}

</mosaic_0001>

<llo_original>
// kernel: tpu_custom_call.1
$region0: #{tpu_custom_call.1}
  #allocation0 [shape = 'u32[]', space=smem, size = 0x4, offset = 0x4, fixed_abs, tag = 'smem constant byte address 0x4 - core index']
  #allocation1 [shape = 'u32[144,128]{1,0:T(1,128)}', space=vmem, size = 0x12000, scoped, tag = 'internal scratch']
  %s0 = inlined_call_operand.vmem [shape: f32[2,264,4], index: 0, kind: input, shape index: {}]
  %s1 = inlined_call_operand.vmem [shape: f32[9,4,128], index: 1, kind: input, shape index: {}]
  %s2 = inlined_call_operand.hbm [shape: bf16[448,128], index: 2, kind: output, shape index: {0}]
  %s3 = inlined_call_operand.hbm [shape: f32[2,8,128], index: 3, kind: output, shape index: {1}]
  %s4 = inlined_call_operand.hbm [shape: f32[2,8,128], index: 4, kind: output, shape index: {2}]
  %5 = xla_tuple %s2, %s3, %s4
  %s6 = sld [smem:[#allocation0]]
  $region57: #{tpu_custom_call.1} parent=0
    _
  %s8 = ssub.s32 1, %s6
  %s9 = scalar_select 0, %s8, %s6
  $region1: #{tpu_custom_call.1} parent=0
    #allocation2 [shape = 'u8[114688]{0}', space=vmem, size = 0x1c000, scoped, tag = 'output window, operand 0']
    #allocation3 [shape = 's32[2]{0}', space=sflag, size = 0x8, scoped, tag = 'scoped memory for tpu_custom_call.1']
    #allocation4 [shape = 'u8[8192]{0}', space=vmem, size = 0x2000, scoped, tag = 'output window, operand 1']
    #allocation5 [shape = 's32[2]{0}', space=sflag, size = 0x8, scoped, tag = 'scoped memory for tpu_custom_call.1']
    #allocation6 [shape = 'u8[8192]{0}', space=vmem, size = 0x2000, scoped, tag = 'output window, operand 2']
    %10 = vsyncpa [#allocation3], 0
    %s11 = scalar_lea.sflag [#allocation3], 1
    %12 = vsyncpa %s11, 0
    %13 = vsyncpa [#allocation5], 0
    %s14 = scalar_lea.sflag [#allocation5], 1
    %15 = vsyncpa %s14, 0
    loop: start=0, step=1, limit=4
    $region2: #{tpu_custom_call.1} parent=1 // loop_pre_header
      _
    $region3: #{tpu_custom_call.1} parent=1 // loop_header
      %s17 = sphi 0, %s21
      %p18 = scmp.ge.s32.totalorder %s17, 4
      %s27 = sphi 0, %s29
      %s30 = sphi 0, %s27
      %s31 = sphi 0, %s30
      %s47 = sphi 0, %s31
      %s51 = sphi 0, %s51
      %s53 = sphi 0, %s51
      %s54 = sphi 0, %s53
      %s68 = sphi 0, %s54
      %s74 = sphi 0, %s76
      %s77 = sphi 0, %s74
      %s78 = sphi 0, %s77
      %s94 = sphi 0, %s78
      %s100 = sphi 0, %s102
      %s103 = sphi 0, %s100
      %s104 = sphi 0, %s103
      %s120 = sphi 0, %s104
      %s126 = sphi 0, %s128
      %s129 = sphi 0, %s126
      %s130 = sphi 0, %s129
      %s146 = sphi 0, %s130
    $region4: #{tpu_custom_call.1} parent=1 // loop_header_branch
      %20 = sbr.rel (%p18) target = $region8
    $region5: #{tpu_custom_call.1} parent=1 // loop_body
      %s22 = ssub.s32 %s17, 1
      %s23 = ssub.s32 %s17, 2
      %s24 = sadd.s32 %s17, 1
      %s25 = ssub.s32 %s17, %s24
      %p26 = scmp.eq.s32.totalorder %s25, 0
      %s28 = sadd.s32 %s27, 1
      %s29 = scalar_select %p26, %s27, %s28
      %p32 = pneg %p26
      %p33 = scmp.eq.s32.totalorder %s17, 1
      %p34 = por %p32, %p33
      %p35 = scmp.ne.s32.totalorder %s27, %s30
      %p36 = scmp.eq.s32.totalorder %s17, 0
      %p37 = por %p35, %p36
      %p38 = scmp.ne.s32.totalorder %s27, %s30
      %p39 = scmp.eq.s32.totalorder %s22, 1
      %p40 = por %p38, %p39
      %p41 = scmp.ne.s32.totalorder %s30, %s31
      %p42 = scmp.eq.s32.totalorder %s22, 0
      %p43 = por %p41, %p42
      %p44 = scmp.ne.s32.totalorder %s30, %s31
      %p45 = scmp.eq.s32.totalorder %s23, 1
      %p46 = por %p44, %p45
      %p48 = scmp.ne.s32.totalorder %s31, %s47
      %p49 = scmp.eq.s32.totalorder %s23, 0
      %p50 = por %p48, %p49
      %s52 = sadd.s32 %s51, 1
      %p55 = scmp.eq.s32.totalorder %s17, 1
      %p56 = scmp.ne.s32.totalorder %s51, %s53
      %p57 = scmp.eq.s32.totalorder %s17, 0
      %p58 = por %p56, %p57
      %p59 = scmp.ne.s32.totalorder %s51, %s53
      %p60 = scmp.eq.s32.totalorder %s22, 1
      %p61 = por %p59, %p60
      %p62 = scmp.ne.s32.totalorder %s53, %s54
      %p63 = scmp.eq.s32.totalorder %s22, 0
      %p64 = por %p62, %p63
      %p65 = scmp.ne.s32.totalorder %s53, %s54
      %p66 = scmp.eq.s32.totalorder %s23, 1
      %p67 = por %p65, %p66
      %p69 = scmp.ne.s32.totalorder %s54, %s68
      %p70 = scmp.eq.s32.totalorder %s23, 0
      %p71 = por %p69, %p70
      %s72 = ssub.s32 %s17, %s24
      %p73 = scmp.eq.s32.totalorder %s72, 0
      %s75 = sadd.s32 %s74, 1
      %s76 = scalar_select %p73, %s74, %s75
      %p79 = pneg %p73
      %p80 = scmp.eq.s32.totalorder %s17, 1
      %p81 = por %p79, %p80
      %p82 = scmp.ne.s32.totalorder %s74, %s77
      %p83 = scmp.eq.s32.totalorder %s17, 0
      %p84 = por %p82, %p83
      %p85 = scmp.ne.s32.totalorder %s74, %s77
      %p86 = scmp.eq.s32.totalorder %s22, 1
      %p87 = por %p85, %p86
      %p88 = scmp.ne.s32.totalorder %s77, %s78
      %p89 = scmp.eq.s32.totalorder %s22, 0
      %p90 = por %p88, %p89
      %p91 = scmp.ne.s32.totalorder %s77, %s78
      %p92 = scmp.eq.s32.totalorder %s23, 1
      %p93 = por %p91, %p92
      %p95 = scmp.ne.s32.totalorder %s78, %s94
      %p96 = scmp.eq.s32.totalorder %s23, 0
      %p97 = por %p95, %p96
      %s98 = ssub.s32 %s17, %s24
      %p99 = scmp.eq.s32.totalorder %s98, 0
      %s101 = sadd.s32 %s100, 1
      %s102 = scalar_select %p99, %s100, %s101
      %p105 = pneg %p99
      %p106 = scmp.eq.s32.totalorder %s17, 1
      %p107 = por %p105, %p106
      %p108 = scmp.ne.s32.totalorder %s100, %s103
      %p109 = scmp.eq.s32.totalorder %s17, 0
      %p110 = por %p108, %p109
      %p111 = scmp.ne.s32.totalorder %s100, %s103
      %p112 = scmp.eq.s32.totalorder %s22, 1
      %p113 = por %p111, %p112
      %p114 = scmp.ne.s32.totalorder %s103, %s104
      %p115 = scmp.eq.s32.totalorder %s22, 0
      %p116 = por %p114, %p115
      %p117 = scmp.ne.s32.totalorder %s103, %s104
      %p118 = scmp.eq.s32.totalorder %s23, 1
      %p119 = por %p117, %p118
      %p121 = scmp.ne.s32.totalorder %s104, %s120
      %p122 = scmp.eq.s32.totalorder %s23, 0
      %p123 = por %p121, %p122
      %s124 = ssub.s32 %s17, %s24
      %p125 = scmp.eq.s32.totalorder %s124, 0
      %s127 = sadd.s32 %s126, 1
      %s128 = scalar_select %p125, %s126, %s127
      %p131 = pneg %p125
      %p132 = scmp.eq.s32.totalorder %s17, 1
      %p133 = por %p131, %p132
      %p134 = scmp.ne.s32.totalorder %s126, %s129
      %p135 = scmp.eq.s32.totalorder %s17, 0
      %p136 = por %p134, %p135
      %p137 = scmp.ne.s32.totalorder %s126, %s129
      %p138 = scmp.eq.s32.totalorder %s22, 1
      %p139 = por %p137, %p138
      %p140 = scmp.ne.s32.totalorder %s129, %s130
      %p141 = scmp.eq.s32.totalorder %s22, 0
      %p142 = por %p140, %p141
      %p143 = scmp.ne.s32.totalorder %s129, %s130
      %p144 = scmp.eq.s32.totalorder %s23, 1
      %p145 = por %p143, %p144
      %p147 = scmp.ne.s32.totalorder %s130, %s146
      %p148 = scmp.eq.s32.totalorder %s23, 0
      %p149 = por %p147, %p148
      %p150 = scmp.le.s32.totalorder 1, %s17
      %p151 = scmp.lt.s32.totalorder %s17, 3
      %p152 = pnand %p150, %p151
      %p153 = pneg %p152
      // Predicated region
      $region9: #{tpu_custom_call.1} parent=5 // pred_check
        _
      $region10: #{tpu_custom_call.1} parent=5 // pred_check_branch
        %155 = sbr.rel (%p152) target = $region12
      $region11: #{tpu_custom_call.1} parent=5 // pred_region
        %s156 = ssub.s32 %s17, 1
        // Predicated region
        $region13: #{tpu_custom_call.1} parent=11 // pred_check
          %p157 = pneg %p64
        $region14: #{tpu_custom_call.1} parent=11 // pred_check_branch
          %159 = sbr.rel (%p157) target = $region16
        $region15: #{tpu_custom_call.1} parent=11 // pred_region
          _
        $region16: #{tpu_custom_call.1} parent=11 // pred_fallthru
          _
      $region12: #{tpu_custom_call.1} parent=5 // pred_fallthru
        _
      %p160 = scmp.lt.s32.totalorder %s17, 2
      // Predicated region
      $region17: #{tpu_custom_call.1} parent=5 // pred_check
        %p161 = pneg %p160
      $region18: #{tpu_custom_call.1} parent=5 // pred_check_branch
        %163 = sbr.rel (%p161) target = $region20
      $region19: #{tpu_custom_call.1} parent=5 // pred_region
        // Predicated region
        $region21: #{tpu_custom_call.1} parent=19 // pred_check
          %p164 = pneg %p37
        $region22: #{tpu_custom_call.1} parent=19 // pred_check_branch
          %166 = sbr.rel (%p164) target = $region24
        $region23: #{tpu_custom_call.1} parent=19 // pred_region
          %p167 = scmp.lt.s32.totalorder %s17, 1
          %s168 = scalar_select %p167, %s17, 1
          %s169 = smul.addr %s168, 33
          %s170 = smul.addr %s169, 8
          %s171 = scalar_lea.vmem %s0, %s170
        $region24: #{tpu_custom_call.1} parent=19 // pred_fallthru
          _
      $region20: #{tpu_custom_call.1} parent=5 // pred_fallthru
        _
      %p172 = scmp.le.s32.totalorder 1, %s17
      %p173 = scmp.lt.s32.totalorder %s17, 3
      %p174 = pnand %p172, %p173
      %p175 = pneg %p174
      // Predicated region
      $region25: #{tpu_custom_call.1} parent=5 // pred_check
        _
      $region26: #{tpu_custom_call.1} parent=5 // pred_check_branch
        %177 = sbr.rel (%p174) target = $region28
      $region27: #{tpu_custom_call.1} parent=5 // pred_region
        %s178 = ssub.s32 %s17, 1
        %p179 = scmp.lt.s32.totalorder %s22, 1
        %s180 = scalar_select %p179, %s22, 1
        %s181 = smul.addr %s180, 33
        %s182 = smul.addr %s181, 8
        %s183 = scalar_lea.vmem %s0, %s182
        %p184 = pneg %p43
        %p185 = pneg %p40
        %p186 = pneg %p64
        %p187 = pneg %p61
        %p188 = pneg %p90
        %p189 = pneg %p87
        %s190 = sand.u32 %s77, 1
        %s191 = scalar_lea.sflag [#allocation3], %s190
        %s192 = sand.u32 %s77, 1
        %s193 = smul.addr %s192, 112
        %s194 = scalar_lea.vmem [#allocation2], %s193
        %p195 = pneg %p116
        %p196 = pneg %p113
        %s197 = sand.u32 %s22, 1
        %s198 = scalar_lea.sflag [#allocation5], %s197
        %s199 = sand.u32 %s103, 1
        %s200 = smul.addr %s199, 8
        %s201 = scalar_lea.vmem [#allocation4], %s200
        %p202 = pneg %p142
        %p203 = pneg %p139
        %s204 = sand.u32 %s22, 1
        %s205 = scalar_lea.sflag [#allocation5], %s204
        %s206 = sand.u32 %s129, 1
        %s207 = smul.addr %s206, 8
        %s208 = scalar_lea.vmem [#allocation6], %s207
        %p209 = scmp.lt.s32.totalorder %s22, 1
        %s210 = scalar_select %p209, %s22, 1
        %s211 = smul.addr %s210, 33
        %s212 = smul.addr %s211, 8
        %s213 = scalar_lea.vmem %s0, %s212
        %s214 = smul.u32 28, %s22
        %v215 = vld [vmem:[%s213] sm:$0xff]
        %v216 = vld [vmem:[%s213 + $0x8] sm:$0xff]
        %v217 = vld [vmem:[%s213 + $0x10] sm:$0xff]
        %v218 = vld [vmem:[%s213 + $0x18] sm:$0xff]
        %v219 = vld [vmem:[%s213 + $0x20] sm:$0xff]
        %v220 = vld [vmem:[%s213 + $0x28] sm:$0xff]
        %v221 = vld [vmem:[%s213 + $0x30] sm:$0xff]
        %v222 = vld [vmem:[%s213 + $0x38] sm:$0xff]
        %v223 = vld [vmem:[%s213 + $0x40] sm:$0xff]
        %v224 = vld [vmem:[%s213 + $0x48] sm:$0xff]
        %v225 = vld [vmem:[%s213 + $0x50] sm:$0xff]
        %v226 = vld [vmem:[%s213 + $0x58] sm:$0xff]
        %v227 = vld [vmem:[%s213 + $0x60] sm:$0xff]
        %v228 = vld [vmem:[%s213 + $0x68] sm:$0xff]
        %v229 = vld [vmem:[%s213 + $0x70] sm:$0xff]
        %v230 = vld [vmem:[%s213 + $0x78] sm:$0xff]
        %v231 = vld [vmem:[%s213 + $0x80] sm:$0xff]
        %v232 = vld [vmem:[%s213 + $0x88] sm:$0xff]
        %v233 = vld [vmem:[%s213 + $0x90] sm:$0xff]
        %v234 = vld [vmem:[%s213 + $0x98] sm:$0xff]
        %v235 = vld [vmem:[%s213 + $0xa0] sm:$0xff]
        %v236 = vld [vmem:[%s213 + $0xa8] sm:$0xff]
        %v237 = vld [vmem:[%s213 + $0xb0] sm:$0xff]
        %v238 = vld [vmem:[%s213 + $0xb8] sm:$0xff]
        %v239 = vld [vmem:[%s213 + $0xc0] sm:$0xff]
        %v240 = vld [vmem:[%s213 + $0xc8] sm:$0xff]
        %v241 = vld [vmem:[%s213 + $0xd0] sm:$0xff]
        %v242 = vld [vmem:[%s213 + $0xd8] sm:$0xff]
        %v243 = vld [vmem:[%s213 + $0xe0] sm:$0xff]
        %v244 = vld [vmem:[%s213 + $0xe8] sm:$0xff]
        %v245 = vld [vmem:[%s213 + $0xf0] sm:$0xff]
        %v246 = vld [vmem:[%s213 + $0xf8] sm:$0xff]
        %v247 = vld [vmem:[%s213 + $0x100] sm:$0xff]
        %v248 = vld [vmem:[%s1] sm:$0xf]
        %s249 = scalar_lea.vmem %s1, 4
        %v250 = vld [vmem:[%s249] sm:$0xf]
        %vm280 = vcmask 1046528
        %v281 = vrot.slane %v215, 1
        %v282 = vrot.slane %v216, 1
        %v283 = vsel %vm280, %v281, %v282
        %v284 = vrot.slane %v217, 1
        %v285 = vsel %vm280, %v282, %v284
        %v286 = vrot.slane %v218, 1
        %v287 = vsel %vm280, %v284, %v286
        %v288 = vrot.slane %v219, 1
        %v289 = vsel %vm280, %v286, %v288
        %v290 = vrot.slane %v220, 1
        %v291 = vsel %vm280, %v288, %v290
        %v292 = vrot.slane %v221, 1
        %v293 = vsel %vm280, %v290, %v292
        %v294 = vrot.slane %v222, 1
        %v295 = vsel %vm280, %v292, %v294
        %v296 = vrot.slane %v223, 1
        %v297 = vsel %vm280, %v294, %v296
        %v298 = vrot.slane %v224, 1
        %v299 = vsel %vm280, %v296, %v298
        %v300 = vrot.slane %v225, 1
        %v301 = vsel %vm280, %v298, %v300
        %v302 = vrot.slane %v226, 1
        %v303 = vsel %vm280, %v300, %v302
        %v304 = vrot.slane %v227, 1
        %v305 = vsel %vm280, %v302, %v304
        %v306 = vrot.slane %v228, 1
        %v307 = vsel %vm280, %v304, %v306
        %v308 = vrot.slane %v229, 1
        %v309 = vsel %vm280, %v306, %v308
        %v310 = vrot.slane %v230, 1
        %v311 = vsel %vm280, %v308, %v310
        %v312 = vrot.slane %v231, 1
        %v313 = vsel %vm280, %v310, %v312
        %v314 = vrot.slane %v232, 1
        %v315 = vsel %vm280, %v312, %v314
        %v316 = vrot.slane %v233, 1
        %v317 = vsel %vm280, %v314, %v316
        %v318 = vrot.slane %v234, 1
        %v319 = vsel %vm280, %v316, %v318
        %v320 = vrot.slane %v235, 1
        %v321 = vsel %vm280, %v318, %v320
        %v322 = vrot.slane %v236, 1
        %v323 = vsel %vm280, %v320, %v322
        %v324 = vrot.slane %v237, 1
        %v325 = vsel %vm280, %v322, %v324
        %v326 = vrot.slane %v238, 1
        %v327 = vsel %vm280, %v324, %v326
        %v328 = vrot.slane %v239, 1
        %v329 = vsel %vm280, %v326, %v328
        %v330 = vrot.slane %v240, 1
        %v331 = vsel %vm280, %v328, %v330
        %v332 = vrot.slane %v241, 1
        %v333 = vsel %vm280, %v330, %v332
        %v334 = vrot.slane %v242, 1
        %v335 = vsel %vm280, %v332, %v334
        %v336 = vrot.slane %v243, 1
        %v337 = vsel %vm280, %v334, %v336
        %vm338 = vcmask 31744
        %v339 = vsel %vm338, %v283, 0
        %v341 = vsel %vm338, %v285, 0
        %v343 = vsel %vm338, %v287, 0
        %v345 = vsel %vm338, %v289, 0
        %v347 = vsel %vm338, %v291, 0
        %v349 = vsel %vm338, %v293, 0
        %v351 = vsel %vm338, %v295, 0
        %v353 = vsel %vm338, %v297, 0
        %v355 = vsel %vm338, %v299, 0
        %v357 = vsel %vm338, %v301, 0
        %v359 = vsel %vm338, %v303, 0
        %v361 = vsel %vm338, %v305, 0
        %v363 = vsel %vm338, %v307, 0
        %v365 = vsel %vm338, %v309, 0
        %v367 = vsel %vm338, %v311, 0
        %v369 = vsel %vm338, %v313, 0
        %v371 = vsel %vm338, %v315, 0
        %v373 = vsel %vm338, %v317, 0
        %v375 = vsel %vm338, %v319, 0
        %v377 = vsel %vm338, %v321, 0
        %v379 = vsel %vm338, %v323, 0
        %v381 = vsel %vm338, %v325, 0
        %v383 = vsel %vm338, %v327, 0
        %v385 = vsel %vm338, %v329, 0
        %v387 = vsel %vm338, %v331, 0
        %v389 = vsel %vm338, %v333, 0
        %v391 = vsel %vm338, %v335, 0
        %v393 = vsel %vm338, %v337, 0
        %vm395 = vcmask 1043456
        %v397 = vsel %vm395, %v250, 0
        %399 = vmatprep.subr.mxu0 0.0
        %400 = vmatpush1.msra.mxu0 %v397
        %401 = vmatprep.subr.mxu0 0.0
        %402 = vmatpush1.msra.mxu0 0.0
        %403 = vmatprep.subr.mxu0 0.0
        %404 = vmatpush1.msra.mxu0 0.0
        %405 = vmatprep.subr.mxu0 0.0
        %406 = vmatpush1.msra.mxu0 0.0
        %407 = vmatprep.subr.mxu0 0.0
        %408 = vmatpush1.msra.mxu0 0.0
        %409 = vmatprep.subr.mxu0 0.0
        %410 = vmatpush1.msra.mxu0 0.0
        %411 = vmatprep.subr.mxu0 0.0
        %412 = vmatpush1.msra.mxu0 0.0
        %413 = vmatprep.subr.mxu0 0.0
        %414 = vmatpush1.msra.mxu0 0.0
        %415 = vmatprep.subr.mxu0 0.0
        %416 = vmatpush1.msra.mxu0 0.0
        %417 = vmatprep.subr.mxu0 0.0
        %418 = vmatpush1.msra.mxu0 0.0
        %419 = vmatprep.subr.mxu0 0.0
        %420 = vmatpush1.msra.mxu0 0.0
        %421 = vmatprep.subr.mxu0 0.0
        %422 = vmatpush1.msra.mxu0 0.0
        %423 = vmatprep.subr.mxu0 0.0
        %424 = vmatpush1.msra.mxu0 0.0
        %425 = vmatprep.subr.mxu0 0.0
        %426 = vmatpush1.msra.mxu0 0.0
        %427 = vmatprep.subr.mxu0 0.0
        %428 = vmatpush1.msra.mxu0 0.0
        %429 = vmatprep.subr.mxu0 0.0
        %430 = vmatpush1.msra.mxu0 0.0
        %431 = vmatprep.subr.mxu0 0.0
        %432 = vmatpush1.msra.mxu0 0.0
        %433 = vmatprep.subr.mxu0 0.0
        %434 = vmatpush1.msra.mxu0 0.0
        %435 = vmatprep.subr.mxu0 0.0
        %436 = vmatpush1.msra.mxu0 0.0
        %437 = vmatprep.subr.mxu0 0.0
        %438 = vmatpush1.msra.mxu0 0.0
        %439 = vmatprep.subr.mxu0 0.0
        %440 = vmatpush1.msra.mxu0 0.0
        %441 = vmatprep.subr.mxu0 0.0
        %442 = vmatpush1.msra.mxu0 0.0
        %443 = vmatprep.subr.mxu0 0.0
        %444 = vmatpush1.msra.mxu0 0.0
        %445 = vmatprep.subr.mxu0 0.0
        %446 = vmatpush1.msra.mxu0 0.0
        %447 = vmatprep.subr.mxu0 0.0
        %448 = vmatpush1.msra.mxu0 0.0
        %449 = vmatprep.subr.mxu0 0.0
        %450 = vmatpush1.msra.mxu0 0.0
        %451 = vmatprep.subr.mxu0 0.0
        %452 = vmatpush1.msra.mxu0 0.0
        %453 = vmatprep.subr.mxu0 0.0
        %454 = vmatpush1.msra.mxu0 0.0
        %455 = vmatprep.subr.mxu0 0.0
        %456 = vmatpush1.msra.mxu0 0.0
        %457 = vmatprep.subr.mxu0 0.0
        %458 = vmatpush1.msra.mxu0 0.0
        %459 = vmatprep.subr.mxu0 0.0
        %460 = vmatpush1.msra.mxu0 0.0
        %461 = vmatprep.subr.mxu0 0.0
        %462 = vmatpush1.msra.mxu0 0.0
        %463 = vmatprep.mubr.f32.mxu0 0.0
        %464 = vmatmul.mubr.f32.gmra.mrb[0].mxu0 %v339
        %v465 = vpop.f32.mrb[0].mxu0
        %v466 = vadd.f32 0.0, %v465
        %v467 = vpop.f32.mrb[0].mxu0
        %468 = vmatprep.mubr.f32.mxu0 0.0
        %469 = vmatmul.mubr.f32.gmra.mrb[0].mxu0 %v341
        %v470 = vpop.f32.mrb[0].mxu0
        %v471 = vadd.f32 0.0, %v470
        %v472 = vpop.f32.mrb[0].mxu0
        %473 = vmatprep.mubr.f32.mxu0 0.0
        %474 = vmatmul.mubr.f32.gmra.mrb[0].mxu0 %v343
        %v475 = vpop.f32.mrb[0].mxu0
        %v476 = vadd.f32 0.0, %v475
        %v477 = vpop.f32.mrb[0].mxu0
        %478 = vmatprep.mubr.f32.mxu0 0.0
        %479 = vmatmul.mubr.f32.gmra.mrb[0].mxu0 %v345
        %v480 = vpop.f32.mrb[0].mxu0
        %v481 = vadd.f32 0.0, %v480
        %v482 = vpop.f32.mrb[0].mxu0
        %483 = vmatprep.mubr.f32.mxu0 0.0
        %484 = vmatmul.mubr.f32.gmra.mrb[0].mxu0 %v347
        %v485 = vpop.f32.mrb[0].mxu0
        %v486 = vadd.f32 0.0, %v485
        %v487 = vpop.f32.mrb[0].mxu0
        %488 = vmatprep.mubr.f32.mxu0 0.0
        %489 = vmatmul.mubr.f32.gmra.mrb[0].mxu0 %v349
        %v490 = vpop.f32.mrb[0].mxu0
        %v491 = vadd.f32 0.0, %v490
        %v492 = vpop.f32.mrb[0].mxu0
        %493 = vmatprep.mubr.f32.mxu0 0.0
        %494 = vmatmul.mubr.f32.gmra.mrb[0].mxu0 %v351
        %v495 = vpop.f32.mrb[0].mxu0
        %v496 = vadd.f32 0.0, %v495
        %v497 = vpop.f32.mrb[0].mxu0
        %498 = vmatprep.mubr.f32.mxu0 0.0
        %499 = vmatmul.mubr.f32.gmra.mrb[0].mxu0 %v353
        %v500 = vpop.f32.mrb[0].mxu0
        %v501 = vadd.f32 0.0, %v500
        %v502 = vpop.f32.mrb[0].mxu0
        %503 = vmatprep.mubr.f32.mxu0 0.0
        %504 = vmatmul.mubr.f32.gmra.mrb[0].mxu0 %v355
        %v505 = vpop.f32.mrb[0].mxu0
        %v506 = vadd.f32 0.0, %v505
        %v507 = vpop.f32.mrb[0].mxu0
        %508 = vmatprep.mubr.f32.mxu0 0.0
        %509 = vmatmul.mubr.f32.gmra.mrb[0].mxu0 %v357
        %v510 = vpop.f32.mrb[0].mxu0
        %v511 = vadd.f32 0.0, %v510
        %v512 = vpop.f32.mrb[0].mxu0
        %513 = vmatprep.mubr.f32.mxu0 0.0
        %514 = vmatmul.mubr.f32.gmra.mrb[0].mxu0 %v359
        %v515 = vpop.f32.mrb[0].mxu0
        %v516 = vadd.f32 0.0, %v515
        %v517 = vpop.f32.mrb[0].mxu0
        %518 = vmatprep.mubr.f32.mxu0 0.0
        %519 = vmatmul.mubr.f32.gmra.mrb[0].mxu0 %v361
        %v520 = vpop.f32.mrb[0].mxu0
        %v521 = vadd.f32 0.0, %v520
        %v522 = vpop.f32.mrb[0].mxu0
        %523 = vmatprep.mubr.f32.mxu0 0.0
        %524 = vmatmul.mubr.f32.gmra.mrb[0].mxu0 %v363
        %v525 = vpop.f32.mrb[0].mxu0
        %v526 = vadd.f32 0.0, %v525
        %v527 = vpop.f32.mrb[0].mxu0
        %528 = vmatprep.mubr.f32.mxu0 0.0
        %529 = vmatmul.mubr.f32.gmra.mrb[0].mxu0 %v365
        %v530 = vpop.f32.mrb[0].mxu0
        %v531 = vadd.f32 0.0, %v530
        %v532 = vpop.f32.mrb[0].mxu0
        %533 = vmatprep.mubr.f32.mxu0 0.0
        %534 = vmatmul.mubr.f32.gmra.mrb[0].mxu0 %v367
        %v535 = vpop.f32.mrb[0].mxu0
        %v536 = vadd.f32 0.0, %v535
        %v537 = vpop.f32.mrb[0].mxu0
        %538 = vmatprep.mubr.f32.mxu0 0.0
        %539 = vmatmul.mubr.f32.gmra.mrb[0].mxu0 %v369
        %v540 = vpop.f32.mrb[0].mxu0
        %v541 = vadd.f32 0.0, %v540
        %v542 = vpop.f32.mrb[0].mxu0
        %543 = vmatprep.mubr.f32.mxu0 0.0
        %544 = vmatmul.mubr.f32.gmra.mrb[0].mxu0 %v371
        %v545 = vpop.f32.mrb[0].mxu0
        %v546 = vadd.f32 0.0, %v545
        %v547 = vpop.f32.mrb[0].mxu0
        %548 = vmatprep.mubr.f32.mxu0 0.0
        %549 = vmatmul.mubr.f32.gmra.mrb[0].mxu0 %v373
        %v550 = vpop.f32.mrb[0].mxu0
        %v551 = vadd.f32 0.0, %v550
        %v552 = vpop.f32.mrb[0].mxu0
        %553 = vmatprep.mubr.f32.mxu0 0.0
        %554 = vmatmul.mubr.f32.gmra.mrb[0].mxu0 %v375
        %v555 = vpop.f32.mrb[0].mxu0
        %v556 = vadd.f32 0.0, %v555
        %v557 = vpop.f32.mrb[0].mxu0
        %558 = vmatprep.mubr.f32.mxu0 0.0
        %559 = vmatmul.mubr.f32.gmra.mrb[0].mxu0 %v377
        %v560 = vpop.f32.mrb[0].mxu0
        %v561 = vadd.f32 0.0, %v560
        %v562 = vpop.f32.mrb[0].mxu0
        %563 = vmatprep.mubr.f32.mxu0 0.0
        %564 = vmatmul.mubr.f32.gmra.mrb[0].mxu0 %v379
        %v565 = vpop.f32.mrb[0].mxu0
        %v566 = vadd.f32 0.0, %v565
        %v567 = vpop.f32.mrb[0].mxu0
        %568 = vmatprep.mubr.f32.mxu0 0.0
        %569 = vmatmul.mubr.f32.gmra.mrb[0].mxu0 %v381
        %v570 = vpop.f32.mrb[0].mxu0
        %v571 = vadd.f32 0.0, %v570
        %v572 = vpop.f32.mrb[0].mxu0
        %573 = vmatprep.mubr.f32.mxu0 0.0
        %574 = vmatmul.mubr.f32.gmra.mrb[0].mxu0 %v383
        %v575 = vpop.f32.mrb[0].mxu0
        %v576 = vadd.f32 0.0, %v575
        %v577 = vpop.f32.mrb[0].mxu0
        %578 = vmatprep.mubr.f32.mxu0 0.0
        %579 = vmatmul.mubr.f32.gmra.mrb[0].mxu0 %v385
        %v580 = vpop.f32.mrb[0].mxu0
        %v581 = vadd.f32 0.0, %v580
        %v582 = vpop.f32.mrb[0].mxu0
        %583 = vmatprep.mubr.f32.mxu0 0.0
        %584 = vmatmul.mubr.f32.gmra.mrb[0].mxu0 %v387
        %v585 = vpop.f32.mrb[0].mxu0
        %v586 = vadd.f32 0.0, %v585
        %v587 = vpop.f32.mrb[0].mxu0
        %588 = vmatprep.mubr.f32.mxu0 0.0
        %589 = vmatmul.mubr.f32.gmra.mrb[0].mxu0 %v389
        %v590 = vpop.f32.mrb[0].mxu0
        %v591 = vadd.f32 0.0, %v590
        %v592 = vpop.f32.mrb[0].mxu0
        %593 = vmatprep.mubr.f32.mxu0 0.0
        %594 = vmatmul.mubr.f32.gmra.mrb[0].mxu0 %v391
        %v595 = vpop.f32.mrb[0].mxu0
        %v596 = vadd.f32 0.0, %v595
        %v597 = vpop.f32.mrb[0].mxu0
        %598 = vmatprep.mubr.f32.mxu0 0.0
        %599 = vmatmul.mubr.f32.gmra.mrb[0].mxu0 %v393
        %v600 = vpop.f32.mrb[0].mxu0
        %v601 = vadd.f32 0.0, %v600
        %v602 = vpop.f32.mrb[0].mxu0
        %603 = vdwg.mxu0
        %v604 = vsel %vm338, %v215, 0
        %v606 = vsel %vm338, %v216, 0
        %v608 = vsel %vm338, %v217, 0
        %v610 = vsel %vm338, %v218, 0
        %v612 = vsel %vm338, %v219, 0
        %v614 = vsel %vm338, %v220, 0
        %v616 = vsel %vm338, %v221, 0
        %v618 = vsel %vm338, %v222, 0
        %v620 = vsel %vm338, %v223, 0
        %v622 = vsel %vm338, %v224, 0
        %v624 = vsel %vm338, %v225, 0
        %v626 = vsel %vm338, %v226, 0
        %v628 = vsel %vm338, %v227, 0
        %v630 = vsel %vm338, %v228, 0
        %v632 = vsel %vm338, %v229, 0
        %v634 = vsel %vm338, %v230, 0
        %v636 = vsel %vm338, %v231, 0
        %v638 = vsel %vm338, %v232, 0
        %v640 = vsel %vm338, %v233, 0
        %v642 = vsel %vm338, %v234, 0
        %v644 = vsel %vm338, %v235, 0
        %v646 = vsel %vm338, %v236, 0
        %v648 = vsel %vm338, %v237, 0
        %v650 = vsel %vm338, %v238, 0
        %v652 = vsel %vm338, %v239, 0
        %v654 = vsel %vm338, %v240, 0
        %v656 = vsel %vm338, %v241, 0
        %v658 = vsel %vm338, %v242, 0
        %v661 = vsel %vm395, %v248, 0
        %663 = vmatprep.subr.mxu0 0.0
        %664 = vmatpush1.msra.mxu0 %v661
        %665 = vmatprep.subr.mxu0 0.0
        %666 = vmatpush1.msra.mxu0 0.0
        %667 = vmatprep.subr.mxu0 0.0
        %668 = vmatpush1.msra.mxu0 0.0
        %669 = vmatprep.subr.mxu0 0.0
        %670 = vmatpush1.msra.mxu0 0.0
        %671 = vmatprep.subr.mxu0 0.0
        %672 = vmatpush1.msra.mxu0 0.0
        %673 = vmatprep.subr.mxu0 0.0
        %674 = vmatpush1.msra.mxu0 0.0
        %675 = vmatprep.subr.mxu0 0.0
        %676 = vmatpush1.msra.mxu0 0.0
        %677 = vmatprep.subr.mxu0 0.0
        %678 = vmatpush1.msra.mxu0 0.0
        %679 = vmatprep.subr.mxu0 0.0
        %680 = vmatpush1.msra.mxu0 0.0
        %681 = vmatprep.subr.mxu0 0.0
        %682 = vmatpush1.msra.mxu0 0.0
        %683 = vmatprep.subr.mxu0 0.0
        %684 = vmatpush1.msra.mxu0 0.0
        %685 = vmatprep.subr.mxu0 0.0
        %686 = vmatpush1.msra.mxu0 0.0
        %687 = vmatprep.subr.mxu0 0.0
        %688 = vmatpush1.msra.mxu0 0.0
        %689 = vmatprep.subr.mxu0 0.0
        %690 = vmatpush1.msra.mxu0 0.0
        %691 = vmatprep.subr.mxu0 0.0
        %692 = vmatpush1.msra.mxu0 0.0
        %693 = vmatprep.subr.mxu0 0.0
        %694 = vmatpush1.msra.mxu0 0.0
        %695 = vmatprep.subr.mxu0 0.0
        %696 = vmatpush1.msra.mxu0 0.0
        %697 = vmatprep.subr.mxu0 0.0
        %698 = vmatpush1.msra.mxu0 0.0
        %699 = vmatprep.subr.mxu0 0.0
        %700 = vmatpush1.msra.mxu0 0.0
        %701 = vmatprep.subr.mxu0 0.0
        %702 = vmatpush1.msra.mxu0 0.0
        %703 = vmatprep.subr.mxu0 0.0
        %704 = vmatpush1.msra.mxu0 0.0
        %705 = vmatprep.subr.mxu0 0.0
        %706 = vmatpush1.msra.mxu0 0.0
        %707 = vmatprep.subr.mxu0 0.0
        %708 = vmatpush1.msra.mxu0 0.0
        %709 = vmatprep.subr.mxu0 0.0
        %710 = vmatpush1.msra.mxu0 0.0
        %711 = vmatprep.subr.mxu0 0.0
        %712 = vmatpush1.msra.mxu0 0.0
        %713 = vmatprep.subr.mxu0 0.0
        %714 = vmatpush1.msra.mxu0 0.0
        %715 = vmatprep.subr.mxu0 0.0
        %716 = vmatpush1.msra.mxu0 0.0
        %717 = vmatprep.subr.mxu0 0.0
        %718 = vmatpush1.msra.mxu0 0.0
        %719 = vmatprep.subr.mxu0 0.0
        %720 = vmatpush1.msra.mxu0 0.0
        %721 = vmatprep.subr.mxu0 0.0
        %722 = vmatpush1.msra.mxu0 0.0
        %723 = vmatprep.subr.mxu0 0.0
        %724 = vmatpush1.msra.mxu0 0.0
        %725 = vmatprep.subr.mxu0 0.0
        %726 = vmatpush1.msra.mxu0 0.0
        %727 = vmatprep.mubr.f32.mxu0 0.0
        %728 = vmatmul.mubr.f32.gmra.mrb[0].mxu0 %v604
        %v729 = vpop.f32.mrb[0].mxu0
        %v730 = vadd.f32 %v466, %v729
        %v731 = vpop.f32.mrb[0].mxu0
        %732 = vmatprep.mubr.f32.mxu0 0.0
        %733 = vmatmul.mubr.f32.gmra.mrb[0].mxu0 %v606
        %v734 = vpop.f32.mrb[0].mxu0
        %v735 = vadd.f32 %v471, %v734
        %v736 = vpop.f32.mrb[0].mxu0
        %737 = vmatprep.mubr.f32.mxu0 0.0
        %738 = vmatmul.mubr.f32.gmra.mrb[0].mxu0 %v608
        %v739 = vpop.f32.mrb[0].mxu0
        %v740 = vadd.f32 %v476, %v739
        %v741 = vpop.f32.mrb[0].mxu0
        %742 = vmatprep.mubr.f32.mxu0 0.0
        %743 = vmatmul.mubr.f32.gmra.mrb[0].mxu0 %v610
        %v744 = vpop.f32.mrb[0].mxu0
        %v745 = vadd.f32 %v481, %v744
        %v746 = vpop.f32.mrb[0].mxu0
        %747 = vmatprep.mubr.f32.mxu0 0.0
        %748 = vmatmul.mubr.f32.gmra.mrb[0].mxu0 %v612
        %v749 = vpop.f32.mrb[0].mxu0
        %v750 = vadd.f32 %v486, %v749
        %v751 = vpop.f32.mrb[0].mxu0
        %752 = vmatprep.mubr.f32.mxu0 0.0
        %753 = vmatmul.mubr.f32.gmra.mrb[0].mxu0 %v614
        %v754 = vpop.f32.mrb[0].mxu0
        %v755 = vadd.f32 %v491, %v754
        %v756 = vpop.f32.mrb[0].mxu0
        %757 = vmatprep.mubr.f32.mxu0 0.0
        %758 = vmatmul.mubr.f32.gmra.mrb[0].mxu0 %v616
        %v759 = vpop.f32.mrb[0].mxu0
        %v760 = vadd.f32 %v496, %v759
        %v761 = vpop.f32.mrb[0].mxu0
        %762 = vmatprep.mubr.f32.mxu0 0.0
        %763 = vmatmul.mubr.f32.gmra.mrb[0].mxu0 %v618
        %v764 = vpop.f32.mrb[0].mxu0
        %v765 = vadd.f32 %v501, %v764
        %v766 = vpop.f32.mrb[0].mxu0
        %767 = vmatprep.mubr.f32.mxu0 0.0
        %768 = vmatmul.mubr.f32.gmra.mrb[0].mxu0 %v620
        %v769 = vpop.f32.mrb[0].mxu0
        %v770 = vadd.f32 %v506, %v769
        %v771 = vpop.f32.mrb[0].mxu0
        %772 = vmatprep.mubr.f32.mxu0 0.0
        %773 = vmatmul.mubr.f32.gmra.mrb[0].mxu0 %v622
        %v774 = vpop.f32.mrb[0].mxu0
        %v775 = vadd.f32 %v511, %v774
        %v776 = vpop.f32.mrb[0].mxu0
        %777 = vmatprep.mubr.f32.mxu0 0.0
        %778 = vmatmul.mubr.f32.gmra.mrb[0].mxu0 %v624
        %v779 = vpop.f32.mrb[0].mxu0
        %v780 = vadd.f32 %v516, %v779
        %v781 = vpop.f32.mrb[0].mxu0
        %782 = vmatprep.mubr.f32.mxu0 0.0
        %783 = vmatmul.mubr.f32.gmra.mrb[0].mxu0 %v626
        %v784 = vpop.f32.mrb[0].mxu0
        %v785 = vadd.f32 %v521, %v784
        %v786 = vpop.f32.mrb[0].mxu0
        %787 = vmatprep.mubr.f32.mxu0 0.0
        %788 = vmatmul.mubr.f32.gmra.mrb[0].mxu0 %v628
        %v789 = vpop.f32.mrb[0].mxu0
        %v790 = vadd.f32 %v526, %v789
        %v791 = vpop.f32.mrb[0].mxu0
        %792 = vmatprep.mubr.f32.mxu0 0.0
        %793 = vmatmul.mubr.f32.gmra.mrb[0].mxu0 %v630
        %v794 = vpop.f32.mrb[0].mxu0
        %v795 = vadd.f32 %v531, %v794
        %v796 = vpop.f32.mrb[0].mxu0
        %797 = vmatprep.mubr.f32.mxu0 0.0
        %798 = vmatmul.mubr.f32.gmra.mrb[0].mxu0 %v632
        %v799 = vpop.f32.mrb[0].mxu0
        %v800 = vadd.f32 %v536, %v799
        %v801 = vpop.f32.mrb[0].mxu0
        %802 = vmatprep.mubr.f32.mxu0 0.0
        %803 = vmatmul.mubr.f32.gmra.mrb[0].mxu0 %v634
        %v804 = vpop.f32.mrb[0].mxu0
        %v805 = vadd.f32 %v541, %v804
        %v806 = vpop.f32.mrb[0].mxu0
        %807 = vmatprep.mubr.f32.mxu0 0.0
        %808 = vmatmul.mubr.f32.gmra.mrb[0].mxu0 %v636
        %v809 = vpop.f32.mrb[0].mxu0
        %v810 = vadd.f32 %v546, %v809
        %v811 = vpop.f32.mrb[0].mxu0
        %812 = vmatprep.mubr.f32.mxu0 0.0
        %813 = vmatmul.mubr.f32.gmra.mrb[0].mxu0 %v638
        %v814 = vpop.f32.mrb[0].mxu0
        %v815 = vadd.f32 %v551, %v814
        %v816 = vpop.f32.mrb[0].mxu0
        %817 = vmatprep.mubr.f32.mxu0 0.0
        %818 = vmatmul.mubr.f32.gmra.mrb[0].mxu0 %v640
        %v819 = vpop.f32.mrb[0].mxu0
        %v820 = vadd.f32 %v556, %v819
        %v821 = vpop.f32.mrb[0].mxu0
        %822 = vmatprep.mubr.f32.mxu0 0.0
        %823 = vmatmul.mubr.f32.gmra.mrb[0].mxu0 %v642
        %v824 = vpop.f32.mrb[0].mxu0
        %v825 = vadd.f32 %v561, %v824
        %v826 = vpop.f32.mrb[0].mxu0
        %827 = vmatprep.mubr.f32.mxu0 0.0
        %828 = vmatmul.mubr.f32.gmra.mrb[0].mxu0 %v644
        %v829 = vpop.f32.mrb[0].mxu0
        %v830 = vadd.f32 %v566, %v829
        %v831 = vpop.f32.mrb[0].mxu0
        %832 = vmatprep.mubr.f32.mxu0 0.0
        %833 = vmatmul.mubr.f32.gmra.mrb[0].mxu0 %v646
        %v834 = vpop.f32.mrb[0].mxu0
        %v835 = vadd.f32 %v571, %v834
        %v836 = vpop.f32.mrb[0].mxu0
        %837 = vmatprep.mubr.f32.mxu0 0.0
        %838 = vmatmul.mubr.f32.gmra.mrb[0].mxu0 %v648
        %v839 = vpop.f32.mrb[0].mxu0
        %v840 = vadd.f32 %v576, %v839
        %v841 = vpop.f32.mrb[0].mxu0
        %842 = vmatprep.mubr.f32.mxu0 0.0
        %843 = vmatmul.mubr.f32.gmra.mrb[0].mxu0 %v650
        %v844 = vpop.f32.mrb[0].mxu0
        %v845 = vadd.f32 %v581, %v844
        %v846 = vpop.f32.mrb[0].mxu0
        %847 = vmatprep.mubr.f32.mxu0 0.0
        %848 = vmatmul.mubr.f32.gmra.mrb[0].mxu0 %v652
        %v849 = vpop.f32.mrb[0].mxu0
        %v850 = vadd.f32 %v586, %v849
        %v851 = vpop.f32.mrb[0].mxu0
        %852 = vmatprep.mubr.f32.mxu0 0.0
        %853 = vmatmul.mubr.f32.gmra.mrb[0].mxu0 %v654
        %v854 = vpop.f32.mrb[0].mxu0
        %v855 = vadd.f32 %v591, %v854
        %v856 = vpop.f32.mrb[0].mxu0
        %857 = vmatprep.mubr.f32.mxu0 0.0
        %858 = vmatmul.mubr.f32.gmra.mrb[0].mxu0 %v656
        %v859 = vpop.f32.mrb[0].mxu0
        %v860 = vadd.f32 %v596, %v859
        %v861 = vpop.f32.mrb[0].mxu0
        %862 = vmatprep.mubr.f32.mxu0 0.0
        %863 = vmatmul.mubr.f32.gmra.mrb[0].mxu0 %v658
        %v864 = vpop.f32.mrb[0].mxu0
        %v865 = vadd.f32 %v601, %v864
        %v866 = vpop.f32.mrb[0].mxu0
        %867 = vdwg.mxu0
        %s868 = scalar_lea.vmem %s1, 8
        %v869 = vld [vmem:[%s868] sm:$0xf]
        %vm870 = vcmask 1045504
        %v871 = vrot.slane %v215, 2
        %v872 = vrot.slane %v216, 2
        %v873 = vsel %vm870, %v871, %v872
        %v874 = vrot.slane %v217, 2
        %v875 = vsel %vm870, %v872, %v874
        %v876 = vrot.slane %v218, 2
        %v877 = vsel %vm870, %v874, %v876
        %v878 = vrot.slane %v219, 2
        %v879 = vsel %vm870, %v876, %v878
        %v880 = vrot.slane %v220, 2
        %v881 = vsel %vm870, %v878, %v880
        %v882 = vrot.slane %v221, 2
        %v883 = vsel %vm870, %v880, %v882
        %v884 = vrot.slane %v222, 2
        %v885 = vsel %vm870, %v882, %v884
        %v886 = vrot.slane %v223, 2
        %v887 = vsel %vm870, %v884, %v886
        %v888 = vrot.slane %v224, 2
        %v889 = vsel %vm870, %v886, %v888
        %v890 = vrot.slane %v225, 2
        %v891 = vsel %vm870, %v888, %v890
        %v892 = vrot.slane %v226, 2
        %v893 = vsel %vm870, %v890, %v892
        %v894 = vrot.slane %v227, 2
        %v895 = vsel %vm870, %v892, %v894
        %v896 = vrot.slane %v228, 2
        %v897 = vsel %vm870, %v894, %v896
        %v898 = vrot.slane %v229, 2
        %v899 = vsel %vm870, %v896, %v898
        %v900 = vrot.slane %v230, 2
        %v901 = vsel %vm870, %v898, %v900
        %v902 = vrot.slane %v231, 2
        %v903 = vsel %vm870, %v900, %v902
        %v904 = vrot.slane %v232, 2
        %v905 = vsel %vm870, %v902, %v904
        %v906 = vrot.slane %v233, 2
        %v907 = vsel %vm870, %v904, %v906
        %v908 = vrot.slane %v234, 2
        %v909 = vsel %vm870, %v906, %v908
        %v910 = vrot.slane %v235, 2
        %v911 = vsel %vm870, %v908, %v910
        %v912 = vrot.slane %v236, 2
        %v913 = vsel %vm870, %v910, %v912
        %v914 = vrot.slane %v237, 2
        %v915 = vsel %vm870, %v912, %v914
        %v916 = vrot.slane %v238, 2
        %v917 = vsel %vm870, %v914, %v916
        %v918 = vrot.slane %v239, 2
        %v919 = vsel %vm870, %v916, %v918
        %v920 = vrot.slane %v240, 2
        %v921 = vsel %vm870, %v918, %v920
        %v922 = vrot.slane %v241, 2
        %v923 = vsel %vm870, %v920, %v922
        %v924 = vrot.slane %v242, 2
        %v925 = vsel %vm870, %v922, %v924
        %v926 = vrot.slane %v243, 2
        %v927 = vsel %vm870, %v924, %v926
        %v928 = vsel %vm338, %v873, 0
        %v930 = vsel %vm338, %v875, 0
        %v932 = vsel %vm338, %v877, 0
        %v934 = vsel %vm338, %v879, 0
        %v936 = vsel %vm338, %v881, 0
        %v938 = vsel %vm338, %v883, 0
        %v940 = vsel %vm338, %v885, 0
        %v942 = vsel %vm338, %v887, 0
        %v944 = vsel %vm338, %v889, 0
        %v946 = vsel %vm338, %v891, 0
        %v948 = vsel %vm338, %v893, 0
        %v950 = vsel %vm338, %v895, 0
        %v952 = vsel %vm338, %v897, 0
        %v954 = vsel %vm338, %v899, 0
        %v956 = vsel %vm338, %v901, 0
        %v958 = vsel %vm338, %v903, 0
        %v960 = vsel %vm338, %v905, 0
        %v962 = vsel %vm338, %v907, 0
        %v964 = vsel %vm338, %v909, 0
        %v966 = vsel %vm338, %v911, 0
        %v968 = vsel %vm338, %v913, 0
        %v970 = vsel %vm338, %v915, 0
        %v972 = vsel %vm338, %v917, 0
        %v974 = vsel %vm338, %v919, 0
        %v976 = vsel %vm338, %v921, 0
        %v978 = vsel %vm338, %v923, 0
        %v980 = vsel %vm338, %v925, 0
        %v982 = vsel %vm338, %v927, 0
        %v985 = vsel %vm395, %v869, 0
        %987 = vmatprep.subr.mxu0 0.0
        %988 = vmatpush1.msra.mxu0 %v985
        %989 = vmatprep.subr.mxu0 0.0
        %990 = vmatpush1.msra.mxu0 0.0
        %991 = vmatprep.subr.mxu0 0.0
        %992 = vmatpush1.msra.mxu0 0.0
        %993 = vmatprep.subr.mxu0 0.0
        %994 = vmatpush1.msra.mxu0 0.0
        %995 = vmatprep.subr.mxu0 0.0
        %996 = vmatpush1.msra.mxu0 0.0
        %997 = vmatprep.subr.mxu0 0.0
        %998 = vmatpush1.msra.mxu0 0.0
        %999 = vmatprep.subr.mxu0 0.0
        %1000 = vmatpush1.msra.mxu0 0.0
        %1001 = vmatprep.subr.mxu0 0.0
        %1002 = vmatpush1.msra.mxu0 0.0
        %1003 = vmatprep.subr.mxu0 0.0
        %1004 = vmatpush1.msra.mxu0 0.0
        %1005 = vmatprep.subr.mxu0 0.0
        %1006 = vmatpush1.msra.mxu0 0.0
        %1007 = vmatprep.subr.mxu0 0.0
        %1008 = vmatpush1.msra.mxu0 0.0
        %1009 = vmatprep.subr.mxu0 0.0
        %1010 = vmatpush1.msra.mxu0 0.0
        %1011 = vmatprep.subr.mxu0 0.0
        %1012 = vmatpush1.msra.mxu0 0.0
        %1013 = vmatprep.subr.mxu0 0.0
        %1014 = vmatpush1.msra.mxu0 0.0
        %1015 = vmatprep.subr.mxu0 0.0
        %1016 = vmatpush1.msra.mxu0 0.0
        %1017 = vmatprep.subr.mxu0 0.0
        %1018 = vmatpush1.msra.mxu0 0.0
        %1019 = vmatprep.subr.mxu0 0.0
        %1020 = vmatpush1.msra.mxu0 0.0
        %1021 = vmatprep.subr.mxu0 0.0
        %1022 = vmatpush1.msra.mxu0 0.0
        %1023 = vmatprep.subr.mxu0 0.0
        %1024 = vmatpush1.msra.mxu0 0.0
        %1025 = vmatprep.subr.mxu0 0.0
        %1026 = vmatpush1.msra.mxu0 0.0
        %1027 = vmatprep.subr.mxu0 0.0
        %1028 = vmatpush1.msra.mxu0 0.0
        %1029 = vmatprep.subr.mxu0 0.0
        %1030 = vmatpush1.msra.mxu0 0.0
        %1031 = vmatprep.subr.mxu0 0.0
        %1032 = vmatpush1.msra.mxu0 0.0
        %1033 = vmatprep.subr.mxu0 0.0
        %1034 = vmatpush1.msra.mxu0 0.0
        %1035 = vmatprep.subr.mxu0 0.0
        %1036 = vmatpush1.msra.mxu0 0.0
        %1037 = vmatprep.subr.mxu0 0.0
        %1038 = vmatpush1.msra.mxu0 0.0
        %1039 = vmatprep.subr.mxu0 0.0
        %1040 = vmatpush1.msra.mxu0 0.0
        %1041 = vmatprep.subr.mxu0 0.0
        %1042 = vmatpush1.msra.mxu0 0.0
        %1043 = vmatprep.subr.mxu0 0.0
        %1044 = vmatpush1.msra.mxu0 0.0
        %1045 = vmatprep.subr.mxu0 0.0
        %1046 = vmatpush1.msra.mxu0 0.0
        %1047 = vmatprep.subr.mxu0 0.0
        %1048 = vmatpush1.msra.mxu0 0.0
        %1049 = vmatprep.subr.mxu0 0.0
        %1050 = vmatpush1.msra.mxu0 0.0
        %1051 = vmatprep.mubr.f32.mxu0 0.0
        %1052 = vmatmul.mubr.f32.gmra.mrb[0].mxu0 %v928
        %v1053 = vpop.f32.mrb[0].mxu0
        %v1054 = vadd.f32 0.0, %v1053
        %v1055 = vpop.f32.mrb[0].mxu0
        %1056 = vmatprep.mubr.f32.mxu0 0.0
        %1057 = vmatmul.mubr.f32.gmra.mrb[0].mxu0 %v930
        %v1058 = vpop.f32.mrb[0].mxu0
        %v1059 = vadd.f32 0.0, %v1058
        %v1060 = vpop.f32.mrb[0].mxu0
        %1061 = vmatprep.mubr.f32.mxu0 0.0
        %1062 = vmatmul.mubr.f32.gmra.mrb[0].mxu0 %v932
        %v1063 = vpop.f32.mrb[0].mxu0
        %v1064 = vadd.f32 0.0, %v1063
        %v1065 = vpop.f32.mrb[0].mxu0
        %1066 = vmatprep.mubr.f32.mxu0 0.0
        %1067 = vmatmul.mubr.f32.gmra.mrb[0].mxu0 %v934
        %v1068 = vpop.f32.mrb[0].mxu0
        %v1069 = vadd.f32 0.0, %v1068
        %v1070 = vpop.f32.mrb[0].mxu0
        %1071 = vmatprep.mubr.f32.mxu0 0.0
        %1072 = vmatmul.mubr.f32.gmra.mrb[0].mxu0 %v936
        %v1073 = vpop.f32.mrb[0].mxu0
        %v1074 = vadd.f32 0.0, %v1073
        %v1075 = vpop.f32.mrb[0].mxu0
        %1076 = vmatprep.mubr.f32.mxu0 0.0
        %1077 = vmatmul.mubr.f32.gmra.mrb[0].mxu0 %v938
        %v1078 = vpop.f32.mrb[0].mxu0
        %v1079 = vadd.f32 0.0, %v1078
        %v1080 = vpop.f32.mrb[0].mxu0
        %1081 = vmatprep.mubr.f32.mxu0 0.0
        %1082 = vmatmul.mubr.f32.gmra.mrb[0].mxu0 %v940
        %v1083 = vpop.f32.mrb[0].mxu0
        %v1084 = vadd.f32 0.0, %v1083
        %v1085 = vpop.f32.mrb[0].mxu0
        %1086 = vmatprep.mubr.f32.mxu0 0.0
        %1087 = vmatmul.mubr.f32.gmra.mrb[0].mxu0 %v942
        %v1088 = vpop.f32.mrb[0].mxu0
        %v1089 = vadd.f32 0.0, %v1088
        %v1090 = vpop.f32.mrb[0].mxu0
        %1091 = vmatprep.mubr.f32.mxu0 0.0
        %1092 = vmatmul.mubr.f32.gmra.mrb[0].mxu0 %v944
        %v1093 = vpop.f32.mrb[0].mxu0
        %v1094 = vadd.f32 0.0, %v1093
        %v1095 = vpop.f32.mrb[0].mxu0
        %1096 = vmatprep.mubr.f32.mxu0 0.0
        %1097 = vmatmul.mubr.f32.gmra.mrb[0].mxu0 %v946
        %v1098 = vpop.f32.mrb[0].mxu0
        %v1099 = vadd.f32 0.0, %v1098
        %v1100 = vpop.f32.mrb[0].mxu0
        %1101 = vmatprep.mubr.f32.mxu0 0.0
        %1102 = vmatmul.mubr.f32.gmra.mrb[0].mxu0 %v948
        %v1103 = vpop.f32.mrb[0].mxu0
        %v1104 = vadd.f32 0.0, %v1103
        %v1105 = vpop.f32.mrb[0].mxu0
        %1106 = vmatprep.mubr.f32.mxu0 0.0
        %1107 = vmatmul.mubr.f32.gmra.mrb[0].mxu0 %v950
        %v1108 = vpop.f32.mrb[0].mxu0
        %v1109 = vadd.f32 0.0, %v1108
        %v1110 = vpop.f32.mrb[0].mxu0
        %1111 = vmatprep.mubr.f32.mxu0 0.0
        %1112 = vmatmul.mubr.f32.gmra.mrb[0].mxu0 %v952
        %v1113 = vpop.f32.mrb[0].mxu0
        %v1114 = vadd.f32 0.0, %v1113
        %v1115 = vpop.f32.mrb[0].mxu0
        %1116 = vmatprep.mubr.f32.mxu0 0.0
        %1117 = vmatmul.mubr.f32.gmra.mrb[0].mxu0 %v954
        %v1118 = vpop.f32.mrb[0].mxu0
        %v1119 = vadd.f32 0.0, %v1118
        %v1120 = vpop.f32.mrb[0].mxu0
        %1121 = vmatprep.mubr.f32.mxu0 0.0
        %1122 = vmatmul.mubr.f32.gmra.mrb[0].mxu0 %v956
        %v1123 = vpop.f32.mrb[0].mxu0
        %v1124 = vadd.f32 0.0, %v1123
        %v1125 = vpop.f32.mrb[0].mxu0
        %1126 = vmatprep.mubr.f32.mxu0 0.0
        %1127 = vmatmul.mubr.f32.gmra.mrb[0].mxu0 %v958
        %v1128 = vpop.f32.mrb[0].mxu0
        %v1129 = vadd.f32 0.0, %v1128
        %v1130 = vpop.f32.mrb[0].mxu0
        %1131 = vmatprep.mubr.f32.mxu0 0.0
        %1132 = vmatmul.mubr.f32.gmra.mrb[0].mxu0 %v960
        %v1133 = vpop.f32.mrb[0].mxu0
        %v1134 = vadd.f32 0.0, %v1133
        %v1135 = vpop.f32.mrb[0].mxu0
        %1136 = vmatprep.mubr.f32.mxu0 0.0
        %1137 = vmatmul.mubr.f32.gmra.mrb[0].mxu0 %v962
        %v1138 = vpop.f32.mrb[0].mxu0
        %v1139 = vadd.f32 0.0, %v1138
        %v1140 = vpop.f32.mrb[0].mxu0
        %1141 = vmatprep.mubr.f32.mxu0 0.0
        %1142 = vmatmul.mubr.f32.gmra.mrb[0].mxu0 %v964
        %v1143 = vpop.f32.mrb[0].mxu0
        %v1144 = vadd.f32 0.0, %v1143
        %v1145 = vpop.f32.mrb[0].mxu0
        %1146 = vmatprep.mubr.f32.mxu0 0.0
        %1147 = vmatmul.mubr.f32.gmra.mrb[0].mxu0 %v966
        %v1148 = vpop.f32.mrb[0].mxu0
        %v1149 = vadd.f32 0.0, %v1148
        %v1150 = vpop.f32.mrb[0].mxu0
        %1151 = vmatprep.mubr.f32.mxu0 0.0
        %1152 = vmatmul.mubr.f32.gmra.mrb[0].mxu0 %v968
        %v1153 = vpop.f32.mrb[0].mxu0
        %v1154 = vadd.f32 0.0, %v1153
        %v1155 = vpop.f32.mrb[0].mxu0
        %1156 = vmatprep.mubr.f32.mxu0 0.0
        %1157 = vmatmul.mubr.f32.gmra.mrb[0].mxu0 %v970
        %v1158 = vpop.f32.mrb[0].mxu0
        %v1159 = vadd.f32 0.0, %v1158
        %v1160 = vpop.f32.mrb[0].mxu0
        %1161 = vmatprep.mubr.f32.mxu0 0.0
        %1162 = vmatmul.mubr.f32.gmra.mrb[0].mxu0 %v972
        %v1163 = vpop.f32.mrb[0].mxu0
        %v1164 = vadd.f32 0.0, %v1163
        %v1165 = vpop.f32.mrb[0].mxu0
        %1166 = vmatprep.mubr.f32.mxu0 0.0
        %1167 = vmatmul.mubr.f32.gmra.mrb[0].mxu0 %v974
        %v1168 = vpop.f32.mrb[0].mxu0
        %v1169 = vadd.f32 0.0, %v1168
        %v1170 = vpop.f32.mrb[0].mxu0
        %1171 = vmatprep.mubr.f32.mxu0 0.0
        %1172 = vmatmul.mubr.f32.gmra.mrb[0].mxu0 %v976
        %v1173 = vpop.f32.mrb[0].mxu0
        %v1174 = vadd.f32 0.0, %v1173
        %v1175 = vpop.f32.mrb[0].mxu0
        %1176 = vmatprep.mubr.f32.mxu0 0.0
        %1177 = vmatmul.mubr.f32.gmra.mrb[0].mxu0 %v978
        %v1178 = vpop.f32.mrb[0].mxu0
        %v1179 = vadd.f32 0.0, %v1178
        %v1180 = vpop.f32.mrb[0].mxu0
        %1181 = vmatprep.mubr.f32.mxu0 0.0
        %1182 = vmatmul.mubr.f32.gmra.mrb[0].mxu0 %v980
        %v1183 = vpop.f32.mrb[0].mxu0
        %v1184 = vadd.f32 0.0, %v1183
        %v1185 = vpop.f32.mrb[0].mxu0
        %1186 = vmatprep.mubr.f32.mxu0 0.0
        %1187 = vmatmul.mubr.f32.gmra.mrb[0].mxu0 %v982
        %v1188 = vpop.f32.mrb[0].mxu0
        %v1189 = vadd.f32 0.0, %v1188
        %v1190 = vpop.f32.mrb[0].mxu0
        %1191 = vdwg.mxu0
        %v1192 = vadd.f32 %v730, %v1054
        %v1193 = vadd.f32 %v735, %v1059
        %v1194 = vadd.f32 %v740, %v1064
        %v1195 = vadd.f32 %v745, %v1069
        %v1196 = vadd.f32 %v750, %v1074
        %v1197 = vadd.f32 %v755, %v1079
        %v1198 = vadd.f32 %v760, %v1084
        %v1199 = vadd.f32 %v765, %v1089
        %v1200 = vadd.f32 %v770, %v1094
        %v1201 = vadd.f32 %v775, %v1099
        %v1202 = vadd.f32 %v780, %v1104
        %v1203 = vadd.f32 %v785, %v1109
        %v1204 = vadd.f32 %v790, %v1114
        %v1205 = vadd.f32 %v795, %v1119
        %v1206 = vadd.f32 %v800, %v1124
        %v1207 = vadd.f32 %v805, %v1129
        %v1208 = vadd.f32 %v810, %v1134
        %v1209 = vadd.f32 %v815, %v1139
        %v1210 = vadd.f32 %v820, %v1144
        %v1211 = vadd.f32 %v825, %v1149
        %v1212 = vadd.f32 %v830, %v1154
        %v1213 = vadd.f32 %v835, %v1159
        %v1214 = vadd.f32 %v840, %v1164
        %v1215 = vadd.f32 %v845, %v1169
        %v1216 = vadd.f32 %v850, %v1174
        %v1217 = vadd.f32 %v855, %v1179
        %v1218 = vadd.f32 %v860, %v1184
        %v1219 = vadd.f32 %v865, %v1189
        %s1220 = scalar_lea.vmem %s1, 12
        %v1221 = vld [vmem:[%s1220] sm:$0xf]
        %v1222 = vsel %vm338, %v243, 0
        %v1225 = vsel %vm338, %v244, 0
        %v1228 = vsel %vm395, %v1221, 0
        %1230 = vmatprep.subr.mxu0 0.0
        %1231 = vmatpush1.msra.mxu0 %v1228
        %1232 = vmatprep.subr.mxu0 0.0
        %1233 = vmatpush1.msra.mxu0 0.0
        %1234 = vmatprep.subr.mxu0 0.0
        %1235 = vmatpush1.msra.mxu0 0.0
        %1236 = vmatprep.subr.mxu0 0.0
        %1237 = vmatpush1.msra.mxu0 0.0
        %1238 = vmatprep.subr.mxu0 0.0
        %1239 = vmatpush1.msra.mxu0 0.0
        %1240 = vmatprep.subr.mxu0 0.0
        %1241 = vmatpush1.msra.mxu0 0.0
        %1242 = vmatprep.subr.mxu0 0.0
        %1243 = vmatpush1.msra.mxu0 0.0
        %1244 = vmatprep.subr.mxu0 0.0
        %1245 = vmatpush1.msra.mxu0 0.0
        %1246 = vmatprep.subr.mxu0 0.0
        %1247 = vmatpush1.msra.mxu0 0.0
        %1248 = vmatprep.subr.mxu0 0.0
        %1249 = vmatpush1.msra.mxu0 0.0
        %1250 = vmatprep.subr.mxu0 0.0
        %1251 = vmatpush1.msra.mxu0 0.0
        %1252 = vmatprep.subr.mxu0 0.0
        %1253 = vmatpush1.msra.mxu0 0.0
        %1254 = vmatprep.subr.mxu0 0.0
        %1255 = vmatpush1.msra.mxu0 0.0
        %1256 = vmatprep.subr.mxu0 0.0
        %1257 = vmatpush1.msra.mxu0 0.0
        %1258 = vmatprep.subr.mxu0 0.0
        %1259 = vmatpush1.msra.mxu0 0.0
        %1260 = vmatprep.subr.mxu0 0.0
        %1261 = vmatpush1.msra.mxu0 0.0
        %1262 = vmatprep.subr.mxu0 0.0
        %1263 = vmatpush1.msra.mxu0 0.0
        %1264 = vmatprep.subr.mxu0 0.0
        %1265 = vmatpush1.msra.mxu0 0.0
        %1266 = vmatprep.subr.mxu0 0.0
        %1267 = vmatpush1.msra.mxu0 0.0
        %1268 = vmatprep.subr.mxu0 0.0
        %1269 = vmatpush1.msra.mxu0 0.0
        %1270 = vmatprep.subr.mxu0 0.0
        %1271 = vmatpush1.msra.mxu0 0.0
        %1272 = vmatprep.subr.mxu0 0.0
        %1273 = vmatpush1.msra.mxu0 0.0
        %1274 = vmatprep.subr.mxu0 0.0
        %1275 = vmatpush1.msra.mxu0 0.0
        %1276 = vmatprep.subr.mxu0 0.0
        %1277 = vmatpush1.msra.mxu0 0.0
        %1278 = vmatprep.subr.mxu0 0.0
        %1279 = vmatpush1.msra.mxu0 0.0
        %1280 = vmatprep.subr.mxu0 0.0
        %1281 = vmatpush1.msra.mxu0 0.0
        %1282 = vmatprep.subr.mxu0 0.0
        %1283 = vmatpush1.msra.mxu0 0.0
        %1284 = vmatprep.subr.mxu0 0.0
        %1285 = vmatpush1.msra.mxu0 0.0
        %1286 = vmatprep.subr.mxu0 0.0
        %1287 = vmatpush1.msra.mxu0 0.0
        %1288 = vmatprep.subr.mxu0 0.0
        %1289 = vmatpush1.msra.mxu0 0.0
        %1290 = vmatprep.subr.mxu0 0.0
        %1291 = vmatpush1.msra.mxu0 0.0
        %1292 = vmatprep.subr.mxu0 0.0
        %1293 = vmatpush1.msra.mxu0 0.0
        %1294 = vmatprep.mubr.f32.mxu0 0.0
        %1295 = vmatmul.mubr.f32.gmra.mrb[0].mxu0 %v608
        %v1296 = vpop.f32.mrb[0].mxu0
        %v1297 = vadd.f32 0.0, %v1296
        %v1298 = vpop.f32.mrb[0].mxu0
        %1299 = vmatprep.mubr.f32.mxu0 0.0
        %1300 = vmatmul.mubr.f32.gmra.mrb[0].mxu0 %v610
        %v1301 = vpop.f32.mrb[0].mxu0
        %v1302 = vadd.f32 0.0, %v1301
        %v1303 = vpop.f32.mrb[0].mxu0
        %1304 = vmatprep.mubr.f32.mxu0 0.0
        %1305 = vmatmul.mubr.f32.gmra.mrb[0].mxu0 %v612
        %v1306 = vpop.f32.mrb[0].mxu0
        %v1307 = vadd.f32 0.0, %v1306
        %v1308 = vpop.f32.mrb[0].mxu0
        %1309 = vmatprep.mubr.f32.mxu0 0.0
        %1310 = vmatmul.mubr.f32.gmra.mrb[0].mxu0 %v614
        %v1311 = vpop.f32.mrb[0].mxu0
        %v1312 = vadd.f32 0.0, %v1311
        %v1313 = vpop.f32.mrb[0].mxu0
        %1314 = vmatprep.mubr.f32.mxu0 0.0
        %1315 = vmatmul.mubr.f32.gmra.mrb[0].mxu0 %v616
        %v1316 = vpop.f32.mrb[0].mxu0
        %v1317 = vadd.f32 0.0, %v1316
        %v1318 = vpop.f32.mrb[0].mxu0
        %1319 = vmatprep.mubr.f32.mxu0 0.0
        %1320 = vmatmul.mubr.f32.gmra.mrb[0].mxu0 %v618
        %v1321 = vpop.f32.mrb[0].mxu0
        %v1322 = vadd.f32 0.0, %v1321
        %v1323 = vpop.f32.mrb[0].mxu0
        %1324 = vmatprep.mubr.f32.mxu0 0.0
        %1325 = vmatmul.mubr.f32.gmra.mrb[0].mxu0 %v620
        %v1326 = vpop.f32.mrb[0].mxu0
        %v1327 = vadd.f32 0.0, %v1326
        %v1328 = vpop.f32.mrb[0].mxu0
        %1329 = vmatprep.mubr.f32.mxu0 0.0
        %1330 = vmatmul.mubr.f32.gmra.mrb[0].mxu0 %v622
        %v1331 = vpop.f32.mrb[0].mxu0
        %v1332 = vadd.f32 0.0, %v1331
        %v1333 = vpop.f32.mrb[0].mxu0
        %1334 = vmatprep.mubr.f32.mxu0 0.0
        %1335 = vmatmul.mubr.f32.gmra.mrb[0].mxu0 %v624
        %v1336 = vpop.f32.mrb[0].mxu0
        %v1337 = vadd.f32 0.0, %v1336
        %v1338 = vpop.f32.mrb[0].mxu0
        %1339 = vmatprep.mubr.f32.mxu0 0.0
        %1340 = vmatmul.mubr.f32.gmra.mrb[0].mxu0 %v626
        %v1341 = vpop.f32.mrb[0].mxu0
        %v1342 = vadd.f32 0.0, %v1341
        %v1343 = vpop.f32.mrb[0].mxu0
        %1344 = vmatprep.mubr.f32.mxu0 0.0
        %1345 = vmatmul.mubr.f32.gmra.mrb[0].mxu0 %v628
        %v1346 = vpop.f32.mrb[0].mxu0
        %v1347 = vadd.f32 0.0, %v1346
        %v1348 = vpop.f32.mrb[0].mxu0
        %1349 = vmatprep.mubr.f32.mxu0 0.0
        %1350 = vmatmul.mubr.f32.gmra.mrb[0].mxu0 %v630
        %v1351 = vpop.f32.mrb[0].mxu0
        %v1352 = vadd.f32 0.0, %v1351
        %v1353 = vpop.f32.mrb[0].mxu0
        %1354 = vmatprep.mubr.f32.mxu0 0.0
        %1355 = vmatmul.mubr.f32.gmra.mrb[0].mxu0 %v632
        %v1356 = vpop.f32.mrb[0].mxu0
        %v1357 = vadd.f32 0.0, %v1356
        %v1358 = vpop.f32.mrb[0].mxu0
        %1359 = vmatprep.mubr.f32.mxu0 0.0
        %1360 = vmatmul.mubr.f32.gmra.mrb[0].mxu0 %v634
        %v1361 = vpop.f32.mrb[0].mxu0
        %v1362 = vadd.f32 0.0, %v1361
        %v1363 = vpop.f32.mrb[0].mxu0
        %1364 = vmatprep.mubr.f32.mxu0 0.0
        %1365 = vmatmul.mubr.f32.gmra.mrb[0].mxu0 %v636
        %v1366 = vpop.f32.mrb[0].mxu0
        %v1367 = vadd.f32 0.0, %v1366
        %v1368 = vpop.f32.mrb[0].mxu0
        %1369 = vmatprep.mubr.f32.mxu0 0.0
        %1370 = vmatmul.mubr.f32.gmra.mrb[0].mxu0 %v638
        %v1371 = vpop.f32.mrb[0].mxu0
        %v1372 = vadd.f32 0.0, %v1371
        %v1373 = vpop.f32.mrb[0].mxu0
        %1374 = vmatprep.mubr.f32.mxu0 0.0
        %1375 = vmatmul.mubr.f32.gmra.mrb[0].mxu0 %v640
        %v1376 = vpop.f32.mrb[0].mxu0
        %v1377 = vadd.f32 0.0, %v1376
        %v1378 = vpop.f32.mrb[0].mxu0
        %1379 = vmatprep.mubr.f32.mxu0 0.0
        %1380 = vmatmul.mubr.f32.gmra.mrb[0].mxu0 %v642
        %v1381 = vpop.f32.mrb[0].mxu0
        %v1382 = vadd.f32 0.0, %v1381
        %v1383 = vpop.f32.mrb[0].mxu0
        %1384 = vmatprep.mubr.f32.mxu0 0.0
        %1385 = vmatmul.mubr.f32.gmra.mrb[0].mxu0 %v644
        %v1386 = vpop.f32.mrb[0].mxu0
        %v1387 = vadd.f32 0.0, %v1386
        %v1388 = vpop.f32.mrb[0].mxu0
        %1389 = vmatprep.mubr.f32.mxu0 0.0
        %1390 = vmatmul.mubr.f32.gmra.mrb[0].mxu0 %v646
        %v1391 = vpop.f32.mrb[0].mxu0
        %v1392 = vadd.f32 0.0, %v1391
        %v1393 = vpop.f32.mrb[0].mxu0
        %1394 = vmatprep.mubr.f32.mxu0 0.0
        %1395 = vmatmul.mubr.f32.gmra.mrb[0].mxu0 %v648
        %v1396 = vpop.f32.mrb[0].mxu0
        %v1397 = vadd.f32 0.0, %v1396
        %v1398 = vpop.f32.mrb[0].mxu0
        %1399 = vmatprep.mubr.f32.mxu0 0.0
        %1400 = vmatmul.mubr.f32.gmra.mrb[0].mxu0 %v650
        %v1401 = vpop.f32.mrb[0].mxu0
        %v1402 = vadd.f32 0.0, %v1401
        %v1403 = vpop.f32.mrb[0].mxu0
        %1404 = vmatprep.mubr.f32.mxu0 0.0
        %1405 = vmatmul.mubr.f32.gmra.mrb[0].mxu0 %v652
        %v1406 = vpop.f32.mrb[0].mxu0
        %v1407 = vadd.f32 0.0, %v1406
        %v1408 = vpop.f32.mrb[0].mxu0
        %1409 = vmatprep.mubr.f32.mxu0 0.0
        %1410 = vmatmul.mubr.f32.gmra.mrb[0].mxu0 %v654
        %v1411 = vpop.f32.mrb[0].mxu0
        %v1412 = vadd.f32 0.0, %v1411
        %v1413 = vpop.f32.mrb[0].mxu0
        %1414 = vmatprep.mubr.f32.mxu0 0.0
        %1415 = vmatmul.mubr.f32.gmra.mrb[0].mxu0 %v656
        %v1416 = vpop.f32.mrb[0].mxu0
        %v1417 = vadd.f32 0.0, %v1416
        %v1418 = vpop.f32.mrb[0].mxu0
        %1419 = vmatprep.mubr.f32.mxu0 0.0
        %1420 = vmatmul.mubr.f32.gmra.mrb[0].mxu0 %v658
        %v1421 = vpop.f32.mrb[0].mxu0
        %v1422 = vadd.f32 0.0, %v1421
        %v1423 = vpop.f32.mrb[0].mxu0
        %1424 = vmatprep.mubr.f32.mxu0 0.0
        %1425 = vmatmul.mubr.f32.gmra.mrb[0].mxu0 %v1222
        %v1426 = vpop.f32.mrb[0].mxu0
        %v1427 = vadd.f32 0.0, %v1426
        %v1428 = vpop.f32.mrb[0].mxu0
        %1429 = vmatprep.mubr.f32.mxu0 0.0
        %1430 = vmatmul.mubr.f32.gmra.mrb[0].mxu0 %v1225
        %v1431 = vpop.f32.mrb[0].mxu0
        %v1432 = vadd.f32 0.0, %v1431
        %v1433 = vpop.f32.mrb[0].mxu0
        %1434 = vdwg.mxu0
        %v1435 = vadd.f32 %v1192, %v1297
        %v1436 = vadd.f32 %v1193, %v1302
        %v1437 = vadd.f32 %v1194, %v1307
        %v1438 = vadd.f32 %v1195, %v1312
        %v1439 = vadd.f32 %v1196, %v1317
        %v1440 = vadd.f32 %v1197, %v1322
        %v1441 = vadd.f32 %v1198, %v1327
        %v1442 = vadd.f32 %v1199, %v1332
        %v1443 = vadd.f32 %v1200, %v1337
        %v1444 = vadd.f32 %v1201, %v1342
        %v1445 = vadd.f32 %v1202, %v1347
        %v1446 = vadd.f32 %v1203, %v1352
        %v1447 = vadd.f32 %v1204, %v1357
        %v1448 = vadd.f32 %v1205, %v1362
        %v1449 = vadd.f32 %v1206, %v1367
        %v1450 = vadd.f32 %v1207, %v1372
        %v1451 = vadd.f32 %v1208, %v1377
        %v1452 = vadd.f32 %v1209, %v1382
        %v1453 = vadd.f32 %v1210, %v1387
        %v1454 = vadd.f32 %v1211, %v1392
        %v1455 = vadd.f32 %v1212, %v1397
        %v1456 = vadd.f32 %v1213, %v1402
        %v1457 = vadd.f32 %v1214, %v1407
        %v1458 = vadd.f32 %v1215, %v1412
        %v1459 = vadd.f32 %v1216, %v1417
        %v1460 = vadd.f32 %v1217, %v1422
        %v1461 = vadd.f32 %v1218, %v1427
        %v1462 = vadd.f32 %v1219, %v1432
        %s1463 = scalar_lea.vmem %s1, 16
        %v1464 = vld [vmem:[%s1463] sm:$0xf]
        %v1466 = vrot.slane %v244, 1
        %v1467 = vsel %vm280, %v336, %v1466
        %v1468 = vrot.slane %v245, 1
        %v1469 = vsel %vm280, %v1466, %v1468
        %v1470 = vsel %vm338, %v1467, 0
        %v1472 = vsel %vm338, %v1469, 0
        %v1475 = vsel %vm395, %v1464, 0
        %1477 = vmatprep.subr.mxu0 0.0
        %1478 = vmatpush1.msra.mxu0 %v1475
        %1479 = vmatprep.subr.mxu0 0.0
        %1480 = vmatpush1.msra.mxu0 0.0
        %1481 = vmatprep.subr.mxu0 0.0
        %1482 = vmatpush1.msra.mxu0 0.0
        %1483 = vmatprep.subr.mxu0 0.0
        %1484 = vmatpush1.msra.mxu0 0.0
        %1485 = vmatprep.subr.mxu0 0.0
        %1486 = vmatpush1.msra.mxu0 0.0
        %1487 = vmatprep.subr.mxu0 0.0
        %1488 = vmatpush1.msra.mxu0 0.0
        %1489 = vmatprep.subr.mxu0 0.0
        %1490 = vmatpush1.msra.mxu0 0.0
        %1491 = vmatprep.subr.mxu0 0.0
        %1492 = vmatpush1.msra.mxu0 0.0
        %1493 = vmatprep.subr.mxu0 0.0
        %1494 = vmatpush1.msra.mxu0 0.0
        %1495 = vmatprep.subr.mxu0 0.0
        %1496 = vmatpush1.msra.mxu0 0.0
        %1497 = vmatprep.subr.mxu0 0.0
        %1498 = vmatpush1.msra.mxu0 0.0
        %1499 = vmatprep.subr.mxu0 0.0
        %1500 = vmatpush1.msra.mxu0 0.0
        %1501 = vmatprep.subr.mxu0 0.0
        %1502 = vmatpush1.msra.mxu0 0.0
        %1503 = vmatprep.subr.mxu0 0.0
        %1504 = vmatpush1.msra.mxu0 0.0
        %1505 = vmatprep.subr.mxu0 0.0
        %1506 = vmatpush1.msra.mxu0 0.0
        %1507 = vmatprep.subr.mxu0 0.0
        %1508 = vmatpush1.msra.mxu0 0.0
        %1509 = vmatprep.subr.mxu0 0.0
        %1510 = vmatpush1.msra.mxu0 0.0
        %1511 = vmatprep.subr.mxu0 0.0
        %1512 = vmatpush1.msra.mxu0 0.0
        %1513 = vmatprep.subr.mxu0 0.0
        %1514 = vmatpush1.msra.mxu0 0.0
        %1515 = vmatprep.subr.mxu0 0.0
        %1516 = vmatpush1.msra.mxu0 0.0
        %1517 = vmatprep.subr.mxu0 0.0
        %1518 = vmatpush1.msra.mxu0 0.0
        %1519 = vmatprep.subr.mxu0 0.0
        %1520 = vmatpush1.msra.mxu0 0.0
        %1521 = vmatprep.subr.mxu0 0.0
        %1522 = vmatpush1.msra.mxu0 0.0
        %1523 = vmatprep.subr.mxu0 0.0
        %1524 = vmatpush1.msra.mxu0 0.0
        %1525 = vmatprep.subr.mxu0 0.0
        %1526 = vmatpush1.msra.mxu0 0.0
        %1527 = vmatprep.subr.mxu0 0.0
        %1528 = vmatpush1.msra.mxu0 0.0
        %1529 = vmatprep.subr.mxu0 0.0
        %1530 = vmatpush1.msra.mxu0 0.0
        %1531 = vmatprep.subr.mxu0 0.0
        %1532 = vmatpush1.msra.mxu0 0.0
        %1533 = vmatprep.subr.mxu0 0.0
        %1534 = vmatpush1.msra.mxu0 0.0
        %1535 = vmatprep.subr.mxu0 0.0
        %1536 = vmatpush1.msra.mxu0 0.0
        %1537 = vmatprep.subr.mxu0 0.0
        %1538 = vmatpush1.msra.mxu0 0.0
        %1539 = vmatprep.subr.mxu0 0.0
        %1540 = vmatpush1.msra.mxu0 0.0
        %1541 = vmatprep.mubr.f32.mxu0 0.0
        %1542 = vmatmul.mubr.f32.gmra.mrb[0].mxu0 %v343
        %v1543 = vpop.f32.mrb[0].mxu0
        %v1544 = vadd.f32 0.0, %v1543
        %v1545 = vpop.f32.mrb[0].mxu0
        %1546 = vmatprep.mubr.f32.mxu0 0.0
        %1547 = vmatmul.mubr.f32.gmra.mrb[0].mxu0 %v345
        %v1548 = vpop.f32.mrb[0].mxu0
        %v1549 = vadd.f32 0.0, %v1548
        %v1550 = vpop.f32.mrb[0].mxu0
        %1551 = vmatprep.mubr.f32.mxu0 0.0
        %1552 = vmatmul.mubr.f32.gmra.mrb[0].mxu0 %v347
        %v1553 = vpop.f32.mrb[0].mxu0
        %v1554 = vadd.f32 0.0, %v1553
        %v1555 = vpop.f32.mrb[0].mxu0
        %1556 = vmatprep.mubr.f32.mxu0 0.0
        %1557 = vmatmul.mubr.f32.gmra.mrb[0].mxu0 %v349
        %v1558 = vpop.f32.mrb[0].mxu0
        %v1559 = vadd.f32 0.0, %v1558
        %v1560 = vpop.f32.mrb[0].mxu0
        %1561 = vmatprep.mubr.f32.mxu0 0.0
        %1562 = vmatmul.mubr.f32.gmra.mrb[0].mxu0 %v351
        %v1563 = vpop.f32.mrb[0].mxu0
        %v1564 = vadd.f32 0.0, %v1563
        %v1565 = vpop.f32.mrb[0].mxu0
        %1566 = vmatprep.mubr.f32.mxu0 0.0
        %1567 = vmatmul.mubr.f32.gmra.mrb[0].mxu0 %v353
        %v1568 = vpop.f32.mrb[0].mxu0
        %v1569 = vadd.f32 0.0, %v1568
        %v1570 = vpop.f32.mrb[0].mxu0
        %1571 = vmatprep.mubr.f32.mxu0 0.0
        %1572 = vmatmul.mubr.f32.gmra.mrb[0].mxu0 %v355
        %v1573 = vpop.f32.mrb[0].mxu0
        %v1574 = vadd.f32 0.0, %v1573
        %v1575 = vpop.f32.mrb[0].mxu0
        %1576 = vmatprep.mubr.f32.mxu0 0.0
        %1577 = vmatmul.mubr.f32.gmra.mrb[0].mxu0 %v357
        %v1578 = vpop.f32.mrb[0].mxu0
        %v1579 = vadd.f32 0.0, %v1578
        %v1580 = vpop.f32.mrb[0].mxu0
        %1581 = vmatprep.mubr.f32.mxu0 0.0
        %1582 = vmatmul.mubr.f32.gmra.mrb[0].mxu0 %v359
        %v1583 = vpop.f32.mrb[0].mxu0
        %v1584 = vadd.f32 0.0, %v1583
        %v1585 = vpop.f32.mrb[0].mxu0
        %1586 = vmatprep.mubr.f32.mxu0 0.0
        %1587 = vmatmul.mubr.f32.gmra.mrb[0].mxu0 %v361
        %v1588 = vpop.f32.mrb[0].mxu0
        %v1589 = vadd.f32 0.0, %v1588
        %v1590 = vpop.f32.mrb[0].mxu0
        %1591 = vmatprep.mubr.f32.mxu0 0.0
        %1592 = vmatmul.mubr.f32.gmra.mrb[0].mxu0 %v363
        %v1593 = vpop.f32.mrb[0].mxu0
        %v1594 = vadd.f32 0.0, %v1593
        %v1595 = vpop.f32.mrb[0].mxu0
        %1596 = vmatprep.mubr.f32.mxu0 0.0
        %1597 = vmatmul.mubr.f32.gmra.mrb[0].mxu0 %v365
        %v1598 = vpop.f32.mrb[0].mxu0
        %v1599 = vadd.f32 0.0, %v1598
        %v1600 = vpop.f32.mrb[0].mxu0
        %1601 = vmatprep.mubr.f32.mxu0 0.0
        %1602 = vmatmul.mubr.f32.gmra.mrb[0].mxu0 %v367
        %v1603 = vpop.f32.mrb[0].mxu0
        %v1604 = vadd.f32 0.0, %v1603
        %v1605 = vpop.f32.mrb[0].mxu0
        %1606 = vmatprep.mubr.f32.mxu0 0.0
        %1607 = vmatmul.mubr.f32.gmra.mrb[0].mxu0 %v369
        %v1608 = vpop.f32.mrb[0].mxu0
        %v1609 = vadd.f32 0.0, %v1608
        %v1610 = vpop.f32.mrb[0].mxu0
        %1611 = vmatprep.mubr.f32.mxu0 0.0
        %1612 = vmatmul.mubr.f32.gmra.mrb[0].mxu0 %v371
        %v1613 = vpop.f32.mrb[0].mxu0
        %v1614 = vadd.f32 0.0, %v1613
        %v1615 = vpop.f32.mrb[0].mxu0
        %1616 = vmatprep.mubr.f32.mxu0 0.0
        %1617 = vmatmul.mubr.f32.gmra.mrb[0].mxu0 %v373
        %v1618 = vpop.f32.mrb[0].mxu0
        %v1619 = vadd.f32 0.0, %v1618
        %v1620 = vpop.f32.mrb[0].mxu0
        %1621 = vmatprep.mubr.f32.mxu0 0.0
        %1622 = vmatmul.mubr.f32.gmra.mrb[0].mxu0 %v375
        %v1623 = vpop.f32.mrb[0].mxu0
        %v1624 = vadd.f32 0.0, %v1623
        %v1625 = vpop.f32.mrb[0].mxu0
        %1626 = vmatprep.mubr.f32.mxu0 0.0
        %1627 = vmatmul.mubr.f32.gmra.mrb[0].mxu0 %v377
        %v1628 = vpop.f32.mrb[0].mxu0
        %v1629 = vadd.f32 0.0, %v1628
        %v1630 = vpop.f32.mrb[0].mxu0
        %1631 = vmatprep.mubr.f32.mxu0 0.0
        %1632 = vmatmul.mubr.f32.gmra.mrb[0].mxu0 %v379
        %v1633 = vpop.f32.mrb[0].mxu0
        %v1634 = vadd.f32 0.0, %v1633
        %v1635 = vpop.f32.mrb[0].mxu0
        %1636 = vmatprep.mubr.f32.mxu0 0.0
        %1637 = vmatmul.mubr.f32.gmra.mrb[0].mxu0 %v381
        %v1638 = vpop.f32.mrb[0].mxu0
        %v1639 = vadd.f32 0.0, %v1638
        %v1640 = vpop.f32.mrb[0].mxu0
        %1641 = vmatprep.mubr.f32.mxu0 0.0
        %1642 = vmatmul.mubr.f32.gmra.mrb[0].mxu0 %v383
        %v1643 = vpop.f32.mrb[0].mxu0
        %v1644 = vadd.f32 0.0, %v1643
        %v1645 = vpop.f32.mrb[0].mxu0
        %1646 = vmatprep.mubr.f32.mxu0 0.0
        %1647 = vmatmul.mubr.f32.gmra.mrb[0].mxu0 %v385
        %v1648 = vpop.f32.mrb[0].mxu0
        %v1649 = vadd.f32 0.0, %v1648
        %v1650 = vpop.f32.mrb[0].mxu0
        %1651 = vmatprep.mubr.f32.mxu0 0.0
        %1652 = vmatmul.mubr.f32.gmra.mrb[0].mxu0 %v387
        %v1653 = vpop.f32.mrb[0].mxu0
        %v1654 = vadd.f32 0.0, %v1653
        %v1655 = vpop.f32.mrb[0].mxu0
        %1656 = vmatprep.mubr.f32.mxu0 0.0
        %1657 = vmatmul.mubr.f32.gmra.mrb[0].mxu0 %v389
        %v1658 = vpop.f32.mrb[0].mxu0
        %v1659 = vadd.f32 0.0, %v1658
        %v1660 = vpop.f32.mrb[0].mxu0
        %1661 = vmatprep.mubr.f32.mxu0 0.0
        %1662 = vmatmul.mubr.f32.gmra.mrb[0].mxu0 %v391
        %v1663 = vpop.f32.mrb[0].mxu0
        %v1664 = vadd.f32 0.0, %v1663
        %v1665 = vpop.f32.mrb[0].mxu0
        %1666 = vmatprep.mubr.f32.mxu0 0.0
        %1667 = vmatmul.mubr.f32.gmra.mrb[0].mxu0 %v393
        %v1668 = vpop.f32.mrb[0].mxu0
        %v1669 = vadd.f32 0.0, %v1668
        %v1670 = vpop.f32.mrb[0].mxu0
        %1671 = vmatprep.mubr.f32.mxu0 0.0
        %1672 = vmatmul.mubr.f32.gmra.mrb[0].mxu0 %v1470
        %v1673 = vpop.f32.mrb[0].mxu0
        %v1674 = vadd.f32 0.0, %v1673
        %v1675 = vpop.f32.mrb[0].mxu0
        %1676 = vmatprep.mubr.f32.mxu0 0.0
        %1677 = vmatmul.mubr.f32.gmra.mrb[0].mxu0 %v1472
        %v1678 = vpop.f32.mrb[0].mxu0
        %v1679 = vadd.f32 0.0, %v1678
        %v1680 = vpop.f32.mrb[0].mxu0
        %1681 = vdwg.mxu0
        %v1682 = vadd.f32 %v1435, %v1544
        %v1683 = vadd.f32 %v1436, %v1549
        %v1684 = vadd.f32 %v1437, %v1554
        %v1685 = vadd.f32 %v1438, %v1559
        %v1686 = vadd.f32 %v1439, %v1564
        %v1687 = vadd.f32 %v1440, %v1569
        %v1688 = vadd.f32 %v1441, %v1574
        %v1689 = vadd.f32 %v1442, %v1579
        %v1690 = vadd.f32 %v1443, %v1584
        %v1691 = vadd.f32 %v1444, %v1589
        %v1692 = vadd.f32 %v1445, %v1594
        %v1693 = vadd.f32 %v1446, %v1599
        %v1694 = vadd.f32 %v1447, %v1604
        %v1695 = vadd.f32 %v1448, %v1609
        %v1696 = vadd.f32 %v1449, %v1614
        %v1697 = vadd.f32 %v1450, %v1619
        %v1698 = vadd.f32 %v1451, %v1624
        %v1699 = vadd.f32 %v1452, %v1629
        %v1700 = vadd.f32 %v1453, %v1634
        %v1701 = vadd.f32 %v1454, %v1639
        %v1702 = vadd.f32 %v1455, %v1644
        %v1703 = vadd.f32 %v1456, %v1649
        %v1704 = vadd.f32 %v1457, %v1654
        %v1705 = vadd.f32 %v1458, %v1659
        %v1706 = vadd.f32 %v1459, %v1664
        %v1707 = vadd.f32 %v1460, %v1669
        %v1708 = vadd.f32 %v1461, %v1674
        %v1709 = vadd.f32 %v1462, %v1679
        %s1710 = scalar_lea.vmem %s1, 20
        %v1711 = vld [vmem:[%s1710] sm:$0xf]
        %v1712 = vrot.slane %v244, 2
        %v1713 = vsel %vm870, %v926, %v1712
        %v1714 = vrot.slane %v245, 2
        %v1715 = vsel %vm870, %v1712, %v1714
        %v1716 = vsel %vm338, %v1713, 0
        %v1718 = vsel %vm338, %v1715, 0
        %v1721 = vsel %vm395, %v1711, 0
        %1723 = vmatprep.subr.mxu0 0.0
        %1724 = vmatpush1.msra.mxu0 %v1721
        %1725 = vmatprep.subr.mxu0 0.0
        %1726 = vmatpush1.msra.mxu0 0.0
        %1727 = vmatprep.subr.mxu0 0.0
        %1728 = vmatpush1.msra.mxu0 0.0
        %1729 = vmatprep.subr.mxu0 0.0
        %1730 = vmatpush1.msra.mxu0 0.0
        %1731 = vmatprep.subr.mxu0 0.0
        %1732 = vmatpush1.msra.mxu0 0.0
        %1733 = vmatprep.subr.mxu0 0.0
        %1734 = vmatpush1.msra.mxu0 0.0
        %1735 = vmatprep.subr.mxu0 0.0
        %1736 = vmatpush1.msra.mxu0 0.0
        %1737 = vmatprep.subr.mxu0 0.0
        %1738 = vmatpush1.msra.mxu0 0.0
        %1739 = vmatprep.subr.mxu0 0.0
        %1740 = vmatpush1.msra.mxu0 0.0
        %1741 = vmatprep.subr.mxu0 0.0
        %1742 = vmatpush1.msra.mxu0 0.0
        %1743 = vmatprep.subr.mxu0 0.0
        %1744 = vmatpush1.msra.mxu0 0.0
        %1745 = vmatprep.subr.mxu0 0.0
        %1746 = vmatpush1.msra.mxu0 0.0
        %1747 = vmatprep.subr.mxu0 0.0
        %1748 = vmatpush1.msra.mxu0 0.0
        %1749 = vmatprep.subr.mxu0 0.0
        %1750 = vmatpush1.msra.mxu0 0.0
        %1751 = vmatprep.subr.mxu0 0.0
        %1752 = vmatpush1.msra.mxu0 0.0
        %1753 = vmatprep.subr.mxu0 0.0
        %1754 = vmatpush1.msra.mxu0 0.0
        %1755 = vmatprep.subr.mxu0 0.0
        %1756 = vmatpush1.msra.mxu0 0.0
        %1757 = vmatprep.subr.mxu0 0.0
        %1758 = vmatpush1.msra.mxu0 0.0
        %1759 = vmatprep.subr.mxu0 0.0
        %1760 = vmatpush1.msra.mxu0 0.0
        %1761 = vmatprep.subr.mxu0 0.0
        %1762 = vmatpush1.msra.mxu0 0.0
        %1763 = vmatprep.subr.mxu0 0.0
        %1764 = vmatpush1.msra.mxu0 0.0
        %1765 = vmatprep.subr.mxu0 0.0
        %1766 = vmatpush1.msra.mxu0 0.0
        %1767 = vmatprep.subr.mxu0 0.0
        %1768 = vmatpush1.msra.mxu0 0.0
        %1769 = vmatprep.subr.mxu0 0.0
        %1770 = vmatpush1.msra.mxu0 0.0
        %1771 = vmatprep.subr.mxu0 0.0
        %1772 = vmatpush1.msra.mxu0 0.0
        %1773 = vmatprep.subr.mxu0 0.0
        %1774 = vmatpush1.msra.mxu0 0.0
        %1775 = vmatprep.subr.mxu0 0.0
        %1776 = vmatpush1.msra.mxu0 0.0
        %1777 = vmatprep.subr.mxu0 0.0
        %1778 = vmatpush1.msra.mxu0 0.0
        %1779 = vmatprep.subr.mxu0 0.0
        %1780 = vmatpush1.msra.mxu0 0.0
        %1781 = vmatprep.subr.mxu0 0.0
        %1782 = vmatpush1.msra.mxu0 0.0
        %1783 = vmatprep.subr.mxu0 0.0
        %1784 = vmatpush1.msra.mxu0 0.0
        %1785 = vmatprep.subr.mxu0 0.0
        %1786 = vmatpush1.msra.mxu0 0.0
        %1787 = vmatprep.mubr.f32.mxu0 0.0
        %1788 = vmatmul.mubr.f32.gmra.mrb[0].mxu0 %v932
        %v1789 = vpop.f32.mrb[0].mxu0
        %v1790 = vadd.f32 0.0, %v1789
        %v1791 = vpop.f32.mrb[0].mxu0
        %1792 = vmatprep.mubr.f32.mxu0 0.0
        %1793 = vmatmul.mubr.f32.gmra.mrb[0].mxu0 %v934
        %v1794 = vpop.f32.mrb[0].mxu0
        %v1795 = vadd.f32 0.0, %v1794
        %v1796 = vpop.f32.mrb[0].mxu0
        %1797 = vmatprep.mubr.f32.mxu0 0.0
        %1798 = vmatmul.mubr.f32.gmra.mrb[0].mxu0 %v936
        %v1799 = vpop.f32.mrb[0].mxu0
        %v1800 = vadd.f32 0.0, %v1799
        %v1801 = vpop.f32.mrb[0].mxu0
        %1802 = vmatprep.mubr.f32.mxu0 0.0
        %1803 = vmatmul.mubr.f32.gmra.mrb[0].mxu0 %v938
        %v1804 = vpop.f32.mrb[0].mxu0
        %v1805 = vadd.f32 0.0, %v1804
        %v1806 = vpop.f32.mrb[0].mxu0
        %1807 = vmatprep.mubr.f32.mxu0 0.0
        %1808 = vmatmul.mubr.f32.gmra.mrb[0].mxu0 %v940
        %v1809 = vpop.f32.mrb[0].mxu0
        %v1810 = vadd.f32 0.0, %v1809
        %v1811 = vpop.f32.mrb[0].mxu0
        %1812 = vmatprep.mubr.f32.mxu0 0.0
        %1813 = vmatmul.mubr.f32.gmra.mrb[0].mxu0 %v942
        %v1814 = vpop.f32.mrb[0].mxu0
        %v1815 = vadd.f32 0.0, %v1814
        %v1816 = vpop.f32.mrb[0].mxu0
        %1817 = vmatprep.mubr.f32.mxu0 0.0
        %1818 = vmatmul.mubr.f32.gmra.mrb[0].mxu0 %v944
        %v1819 = vpop.f32.mrb[0].mxu0
        %v1820 = vadd.f32 0.0, %v1819
        %v1821 = vpop.f32.mrb[0].mxu0
        %1822 = vmatprep.mubr.f32.mxu0 0.0
        %1823 = vmatmul.mubr.f32.gmra.mrb[0].mxu0 %v946
        %v1824 = vpop.f32.mrb[0].mxu0
        %v1825 = vadd.f32 0.0, %v1824
        %v1826 = vpop.f32.mrb[0].mxu0
        %1827 = vmatprep.mubr.f32.mxu0 0.0
        %1828 = vmatmul.mubr.f32.gmra.mrb[0].mxu0 %v948
        %v1829 = vpop.f32.mrb[0].mxu0
        %v1830 = vadd.f32 0.0, %v1829
        %v1831 = vpop.f32.mrb[0].mxu0
        %1832 = vmatprep.mubr.f32.mxu0 0.0
        %1833 = vmatmul.mubr.f32.gmra.mrb[0].mxu0 %v950
        %v1834 = vpop.f32.mrb[0].mxu0
        %v1835 = vadd.f32 0.0, %v1834
        %v1836 = vpop.f32.mrb[0].mxu0
        %1837 = vmatprep.mubr.f32.mxu0 0.0
        %1838 = vmatmul.mubr.f32.gmra.mrb[0].mxu0 %v952
        %v1839 = vpop.f32.mrb[0].mxu0
        %v1840 = vadd.f32 0.0, %v1839
        %v1841 = vpop.f32.mrb[0].mxu0
        %1842 = vmatprep.mubr.f32.mxu0 0.0
        %1843 = vmatmul.mubr.f32.gmra.mrb[0].mxu0 %v954
        %v1844 = vpop.f32.mrb[0].mxu0
        %v1845 = vadd.f32 0.0, %v1844
        %v1846 = vpop.f32.mrb[0].mxu0
        %1847 = vmatprep.mubr.f32.mxu0 0.0
        %1848 = vmatmul.mubr.f32.gmra.mrb[0].mxu0 %v956
        %v1849 = vpop.f32.mrb[0].mxu0
        %v1850 = vadd.f32 0.0, %v1849
        %v1851 = vpop.f32.mrb[0].mxu0
        %1852 = vmatprep.mubr.f32.mxu0 0.0
        %1853 = vmatmul.mubr.f32.gmra.mrb[0].mxu0 %v958
        %v1854 = vpop.f32.mrb[0].mxu0
        %v1855 = vadd.f32 0.0, %v1854
        %v1856 = vpop.f32.mrb[0].mxu0
        %1857 = vmatprep.mubr.f32.mxu0 0.0
        %1858 = vmatmul.mubr.f32.gmra.mrb[0].mxu0 %v960
        %v1859 = vpop.f32.mrb[0].mxu0
        %v1860 = vadd.f32 0.0, %v1859
        %v1861 = vpop.f32.mrb[0].mxu0
        %1862 = vmatprep.mubr.f32.mxu0 0.0
        %1863 = vmatmul.mubr.f32.gmra.mrb[0].mxu0 %v962
        %v1864 = vpop.f32.mrb[0].mxu0
        %v1865 = vadd.f32 0.0, %v1864
        %v1866 = vpop.f32.mrb[0].mxu0
        %1867 = vmatprep.mubr.f32.mxu0 0.0
        %1868 = vmatmul.mubr.f32.gmra.mrb[0].mxu0 %v964
        %v1869 = vpop.f32.mrb[0].mxu0
        %v1870 = vadd.f32 0.0, %v1869
        %v1871 = vpop.f32.mrb[0].mxu0
        %1872 = vmatprep.mubr.f32.mxu0 0.0
        %1873 = vmatmul.mubr.f32.gmra.mrb[0].mxu0 %v966
        %v1874 = vpop.f32.mrb[0].mxu0
        %v1875 = vadd.f32 0.0, %v1874
        %v1876 = vpop.f32.mrb[0].mxu0
        %1877 = vmatprep.mubr.f32.mxu0 0.0
        %1878 = vmatmul.mubr.f32.gmra.mrb[0].mxu0 %v968
        %v1879 = vpop.f32.mrb[0].mxu0
        %v1880 = vadd.f32 0.0, %v1879
        %v1881 = vpop.f32.mrb[0].mxu0
        %1882 = vmatprep.mubr.f32.mxu0 0.0
        %1883 = vmatmul.mubr.f32.gmra.mrb[0].mxu0 %v970
        %v1884 = vpop.f32.mrb[0].mxu0
        %v1885 = vadd.f32 0.0, %v1884
        %v1886 = vpop.f32.mrb[0].mxu0
        %1887 = vmatprep.mubr.f32.mxu0 0.0
        %1888 = vmatmul.mubr.f32.gmra.mrb[0].mxu0 %v972
        %v1889 = vpop.f32.mrb[0].mxu0
        %v1890 = vadd.f32 0.0, %v1889
        %v1891 = vpop.f32.mrb[0].mxu0
        %1892 = vmatprep.mubr.f32.mxu0 0.0
        %1893 = vmatmul.mubr.f32.gmra.mrb[0].mxu0 %v974
        %v1894 = vpop.f32.mrb[0].mxu0
        %v1895 = vadd.f32 0.0, %v1894
        %v1896 = vpop.f32.mrb[0].mxu0
        %1897 = vmatprep.mubr.f32.mxu0 0.0
        %1898 = vmatmul.mubr.f32.gmra.mrb[0].mxu0 %v976
        %v1899 = vpop.f32.mrb[0].mxu0
        %v1900 = vadd.f32 0.0, %v1899
        %v1901 = vpop.f32.mrb[0].mxu0
        %1902 = vmatprep.mubr.f32.mxu0 0.0
        %1903 = vmatmul.mubr.f32.gmra.mrb[0].mxu0 %v978
        %v1904 = vpop.f32.mrb[0].mxu0
        %v1905 = vadd.f32 0.0, %v1904
        %v1906 = vpop.f32.mrb[0].mxu0
        %1907 = vmatprep.mubr.f32.mxu0 0.0
        %1908 = vmatmul.mubr.f32.gmra.mrb[0].mxu0 %v980
        %v1909 = vpop.f32.mrb[0].mxu0
        %v1910 = vadd.f32 0.0, %v1909
        %v1911 = vpop.f32.mrb[0].mxu0
        %1912 = vmatprep.mubr.f32.mxu0 0.0
        %1913 = vmatmul.mubr.f32.gmra.mrb[0].mxu0 %v982
        %v1914 = vpop.f32.mrb[0].mxu0
        %v1915 = vadd.f32 0.0, %v1914
        %v1916 = vpop.f32.mrb[0].mxu0
        %1917 = vmatprep.mubr.f32.mxu0 0.0
        %1918 = vmatmul.mubr.f32.gmra.mrb[0].mxu0 %v1716
        %v1919 = vpop.f32.mrb[0].mxu0
        %v1920 = vadd.f32 0.0, %v1919
        %v1921 = vpop.f32.mrb[0].mxu0
        %1922 = vmatprep.mubr.f32.mxu0 0.0
        %1923 = vmatmul.mubr.f32.gmra.mrb[0].mxu0 %v1718
        %v1924 = vpop.f32.mrb[0].mxu0
        %v1925 = vadd.f32 0.0, %v1924
        %v1926 = vpop.f32.mrb[0].mxu0
        %1927 = vdwg.mxu0
        %v1928 = vadd.f32 %v1682, %v1790
        %v1929 = vadd.f32 %v1683, %v1795
        %v1930 = vadd.f32 %v1684, %v1800
        %v1931 = vadd.f32 %v1685, %v1805
        %v1932 = vadd.f32 %v1686, %v1810
        %v1933 = vadd.f32 %v1687, %v1815
        %v1934 = vadd.f32 %v1688, %v1820
        %v1935 = vadd.f32 %v1689, %v1825
        %v1936 = vadd.f32 %v1690, %v1830
        %v1937 = vadd.f32 %v1691, %v1835
        %v1938 = vadd.f32 %v1692, %v1840
        %v1939 = vadd.f32 %v1693, %v1845
        %v1940 = vadd.f32 %v1694, %v1850
        %v1941 = vadd.f32 %v1695, %v1855
        %v1942 = vadd.f32 %v1696, %v1860
        %v1943 = vadd.f32 %v1697, %v1865
        %v1944 = vadd.f32 %v1698, %v1870
        %v1945 = vadd.f32 %v1699, %v1875
        %v1946 = vadd.f32 %v1700, %v1880
        %v1947 = vadd.f32 %v1701, %v1885
        %v1948 = vadd.f32 %v1702, %v1890
        %v1949 = vadd.f32 %v1703, %v1895
        %v1950 = vadd.f32 %v1704, %v1900
        %v1951 = vadd.f32 %v1705, %v1905
        %v1952 = vadd.f32 %v1706, %v1910
        %v1953 = vadd.f32 %v1707, %v1915
        %v1954 = vadd.f32 %v1708, %v1920
        %v1955 = vadd.f32 %v1709, %v1925
        %s1956 = scalar_lea.vmem %s1, 24
        %v1957 = vld [vmem:[%s1956] sm:$0xf]
        %v1958 = vsel %vm338, %v245, 0
        %v1961 = vsel %vm338, %v246, 0
        %v1964 = vsel %vm395, %v1957, 0
        %1966 = vmatprep.subr.mxu0 0.0
        %1967 = vmatpush1.msra.mxu0 %v1964
        %1968 = vmatprep.subr.mxu0 0.0
        %1969 = vmatpush1.msra.mxu0 0.0
        %1970 = vmatprep.subr.mxu0 0.0
        %1971 = vmatpush1.msra.mxu0 0.0
        %1972 = vmatprep.subr.mxu0 0.0
        %1973 = vmatpush1.msra.mxu0 0.0
        %1974 = vmatprep.subr.mxu0 0.0
        %1975 = vmatpush1.msra.mxu0 0.0
        %1976 = vmatprep.subr.mxu0 0.0
        %1977 = vmatpush1.msra.mxu0 0.0
        %1978 = vmatprep.subr.mxu0 0.0
        %1979 = vmatpush1.msra.mxu0 0.0
        %1980 = vmatprep.subr.mxu0 0.0
        %1981 = vmatpush1.msra.mxu0 0.0
        %1982 = vmatprep.subr.mxu0 0.0
        %1983 = vmatpush1.msra.mxu0 0.0
        %1984 = vmatprep.subr.mxu0 0.0
        %1985 = vmatpush1.msra.mxu0 0.0
        %1986 = vmatprep.subr.mxu0 0.0
        %1987 = vmatpush1.msra.mxu0 0.0
        %1988 = vmatprep.subr.mxu0 0.0
        %1989 = vmatpush1.msra.mxu0 0.0
        %1990 = vmatprep.subr.mxu0 0.0
        %1991 = vmatpush1.msra.mxu0 0.0
        %1992 = vmatprep.subr.mxu0 0.0
        %1993 = vmatpush1.msra.mxu0 0.0
        %1994 = vmatprep.subr.mxu0 0.0
        %1995 = vmatpush1.msra.mxu0 0.0
        %1996 = vmatprep.subr.mxu0 0.0
        %1997 = vmatpush1.msra.mxu0 0.0
        %1998 = vmatprep.subr.mxu0 0.0
        %1999 = vmatpush1.msra.mxu0 0.0
        %2000 = vmatprep.subr.mxu0 0.0
        %2001 = vmatpush1.msra.mxu0 0.0
        %2002 = vmatprep.subr.mxu0 0.0
        %2003 = vmatpush1.msra.mxu0 0.0
        %2004 = vmatprep.subr.mxu0 0.0
        %2005 = vmatpush1.msra.mxu0 0.0
        %2006 = vmatprep.subr.mxu0 0.0
        %2007 = vmatpush1.msra.mxu0 0.0
        %2008 = vmatprep.subr.mxu0 0.0
        %2009 = vmatpush1.msra.mxu0 0.0
        %2010 = vmatprep.subr.mxu0 0.0
        %2011 = vmatpush1.msra.mxu0 0.0
        %2012 = vmatprep.subr.mxu0 0.0
        %2013 = vmatpush1.msra.mxu0 0.0
        %2014 = vmatprep.subr.mxu0 0.0
        %2015 = vmatpush1.msra.mxu0 0.0
        %2016 = vmatprep.subr.mxu0 0.0
        %2017 = vmatpush1.msra.mxu0 0.0
        %2018 = vmatprep.subr.mxu0 0.0
        %2019 = vmatpush1.msra.mxu0 0.0
        %2020 = vmatprep.subr.mxu0 0.0
        %2021 = vmatpush1.msra.mxu0 0.0
        %2022 = vmatprep.subr.mxu0 0.0
        %2023 = vmatpush1.msra.mxu0 0.0
        %2024 = vmatprep.subr.mxu0 0.0
        %2025 = vmatpush1.msra.mxu0 0.0
        %2026 = vmatprep.subr.mxu0 0.0
        %2027 = vmatpush1.msra.mxu0 0.0
        %2028 = vmatprep.subr.mxu0 0.0
        %2029 = vmatpush1.msra.mxu0 0.0
        %2030 = vmatprep.mubr.f32.mxu0 0.0
        %2031 = vmatmul.mubr.f32.gmra.mrb[0].mxu0 %v612
        %v2032 = vpop.f32.mrb[0].mxu0
        %v2033 = vadd.f32 0.0, %v2032
        %v2034 = vpop.f32.mrb[0].mxu0
        %2035 = vmatprep.mubr.f32.mxu0 0.0
        %2036 = vmatmul.mubr.f32.gmra.mrb[0].mxu0 %v614
        %v2037 = vpop.f32.mrb[0].mxu0
        %v2038 = vadd.f32 0.0, %v2037
        %v2039 = vpop.f32.mrb[0].mxu0
        %2040 = vmatprep.mubr.f32.mxu0 0.0
        %2041 = vmatmul.mubr.f32.gmra.mrb[0].mxu0 %v616
        %v2042 = vpop.f32.mrb[0].mxu0
        %v2043 = vadd.f32 0.0, %v2042
        %v2044 = vpop.f32.mrb[0].mxu0
        %2045 = vmatprep.mubr.f32.mxu0 0.0
        %2046 = vmatmul.mubr.f32.gmra.mrb[0].mxu0 %v618
        %v2047 = vpop.f32.mrb[0].mxu0
        %v2048 = vadd.f32 0.0, %v2047
        %v2049 = vpop.f32.mrb[0].mxu0
        %2050 = vmatprep.mubr.f32.mxu0 0.0
        %2051 = vmatmul.mubr.f32.gmra.mrb[0].mxu0 %v620
        %v2052 = vpop.f32.mrb[0].mxu0
        %v2053 = vadd.f32 0.0, %v2052
        %v2054 = vpop.f32.mrb[0].mxu0
        %2055 = vmatprep.mubr.f32.mxu0 0.0
        %2056 = vmatmul.mubr.f32.gmra.mrb[0].mxu0 %v622
        %v2057 = vpop.f32.mrb[0].mxu0
        %v2058 = vadd.f32 0.0, %v2057
        %v2059 = vpop.f32.mrb[0].mxu0
        %2060 = vmatprep.mubr.f32.mxu0 0.0
        %2061 = vmatmul.mubr.f32.gmra.mrb[0].mxu0 %v624
        %v2062 = vpop.f32.mrb[0].mxu0
        %v2063 = vadd.f32 0.0, %v2062
        %v2064 = vpop.f32.mrb[0].mxu0
        %2065 = vmatprep.mubr.f32.mxu0 0.0
        %2066 = vmatmul.mubr.f32.gmra.mrb[0].mxu0 %v626
        %v2067 = vpop.f32.mrb[0].mxu0
        %v2068 = vadd.f32 0.0, %v2067
        %v2069 = vpop.f32.mrb[0].mxu0
        %2070 = vmatprep.mubr.f32.mxu0 0.0
        %2071 = vmatmul.mubr.f32.gmra.mrb[0].mxu0 %v628
        %v2072 = vpop.f32.mrb[0].mxu0
        %v2073 = vadd.f32 0.0, %v2072
        %v2074 = vpop.f32.mrb[0].mxu0
        %2075 = vmatprep.mubr.f32.mxu0 0.0
        %2076 = vmatmul.mubr.f32.gmra.mrb[0].mxu0 %v630
        %v2077 = vpop.f32.mrb[0].mxu0
        %v2078 = vadd.f32 0.0, %v2077
        %v2079 = vpop.f32.mrb[0].mxu0
        %2080 = vmatprep.mubr.f32.mxu0 0.0
        %2081 = vmatmul.mubr.f32.gmra.mrb[0].mxu0 %v632
        %v2082 = vpop.f32.mrb[0].mxu0
        %v2083 = vadd.f32 0.0, %v2082
        %v2084 = vpop.f32.mrb[0].mxu0
        %2085 = vmatprep.mubr.f32.mxu0 0.0
        %2086 = vmatmul.mubr.f32.gmra.mrb[0].mxu0 %v634
        %v2087 = vpop.f32.mrb[0].mxu0
        %v2088 = vadd.f32 0.0, %v2087
        %v2089 = vpop.f32.mrb[0].mxu0
        %2090 = vmatprep.mubr.f32.mxu0 0.0
        %2091 = vmatmul.mubr.f32.gmra.mrb[0].mxu0 %v636
        %v2092 = vpop.f32.mrb[0].mxu0
        %v2093 = vadd.f32 0.0, %v2092
        %v2094 = vpop.f32.mrb[0].mxu0
        %2095 = vmatprep.mubr.f32.mxu0 0.0
        %2096 = vmatmul.mubr.f32.gmra.mrb[0].mxu0 %v638
        %v2097 = vpop.f32.mrb[0].mxu0
        %v2098 = vadd.f32 0.0, %v2097
        %v2099 = vpop.f32.mrb[0].mxu0
        %2100 = vmatprep.mubr.f32.mxu0 0.0
        %2101 = vmatmul.mubr.f32.gmra.mrb[0].mxu0 %v640
        %v2102 = vpop.f32.mrb[0].mxu0
        %v2103 = vadd.f32 0.0, %v2102
        %v2104 = vpop.f32.mrb[0].mxu0
        %2105 = vmatprep.mubr.f32.mxu0 0.0
        %2106 = vmatmul.mubr.f32.gmra.mrb[0].mxu0 %v642
        %v2107 = vpop.f32.mrb[0].mxu0
        %v2108 = vadd.f32 0.0, %v2107
        %v2109 = vpop.f32.mrb[0].mxu0
        %2110 = vmatprep.mubr.f32.mxu0 0.0
        %2111 = vmatmul.mubr.f32.gmra.mrb[0].mxu0 %v644
        %v2112 = vpop.f32.mrb[0].mxu0
        %v2113 = vadd.f32 0.0, %v2112
        %v2114 = vpop.f32.mrb[0].mxu0
        %2115 = vmatprep.mubr.f32.mxu0 0.0
        %2116 = vmatmul.mubr.f32.gmra.mrb[0].mxu0 %v646
        %v2117 = vpop.f32.mrb[0].mxu0
        %v2118 = vadd.f32 0.0, %v2117
        %v2119 = vpop.f32.mrb[0].mxu0
        %2120 = vmatprep.mubr.f32.mxu0 0.0
        %2121 = vmatmul.mubr.f32.gmra.mrb[0].mxu0 %v648
        %v2122 = vpop.f32.mrb[0].mxu0
        %v2123 = vadd.f32 0.0, %v2122
        %v2124 = vpop.f32.mrb[0].mxu0
        %2125 = vmatprep.mubr.f32.mxu0 0.0
        %2126 = vmatmul.mubr.f32.gmra.mrb[0].mxu0 %v650
        %v2127 = vpop.f32.mrb[0].mxu0
        %v2128 = vadd.f32 0.0, %v2127
        %v2129 = vpop.f32.mrb[0].mxu0
        %2130 = vmatprep.mubr.f32.mxu0 0.0
        %2131 = vmatmul.mubr.f32.gmra.mrb[0].mxu0 %v652
        %v2132 = vpop.f32.mrb[0].mxu0
        %v2133 = vadd.f32 0.0, %v2132
        %v2134 = vpop.f32.mrb[0].mxu0
        %2135 = vmatprep.mubr.f32.mxu0 0.0
        %2136 = vmatmul.mubr.f32.gmra.mrb[0].mxu0 %v654
        %v2137 = vpop.f32.mrb[0].mxu0
        %v2138 = vadd.f32 0.0, %v2137
        %v2139 = vpop.f32.mrb[0].mxu0
        %2140 = vmatprep.mubr.f32.mxu0 0.0
        %2141 = vmatmul.mubr.f32.gmra.mrb[0].mxu0 %v656
        %v2142 = vpop.f32.mrb[0].mxu0
        %v2143 = vadd.f32 0.0, %v2142
        %v2144 = vpop.f32.mrb[0].mxu0
        %2145 = vmatprep.mubr.f32.mxu0 0.0
        %2146 = vmatmul.mubr.f32.gmra.mrb[0].mxu0 %v658
        %v2147 = vpop.f32.mrb[0].mxu0
        %v2148 = vadd.f32 0.0, %v2147
        %v2149 = vpop.f32.mrb[0].mxu0
        %2150 = vmatprep.mubr.f32.mxu0 0.0
        %2151 = vmatmul.mubr.f32.gmra.mrb[0].mxu0 %v1222
        %v2152 = vpop.f32.mrb[0].mxu0
        %v2153 = vadd.f32 0.0, %v2152
        %v2154 = vpop.f32.mrb[0].mxu0
        %2155 = vmatprep.mubr.f32.mxu0 0.0
        %2156 = vmatmul.mubr.f32.gmra.mrb[0].mxu0 %v1225
        %v2157 = vpop.f32.mrb[0].mxu0
        %v2158 = vadd.f32 0.0, %v2157
        %v2159 = vpop.f32.mrb[0].mxu0
        %2160 = vmatprep.mubr.f32.mxu0 0.0
        %2161 = vmatmul.mubr.f32.gmra.mrb[0].mxu0 %v1958
        %v2162 = vpop.f32.mrb[0].mxu0
        %v2163 = vadd.f32 0.0, %v2162
        %v2164 = vpop.f32.mrb[0].mxu0
        %2165 = vmatprep.mubr.f32.mxu0 0.0
        %2166 = vmatmul.mubr.f32.gmra.mrb[0].mxu0 %v1961
        %v2167 = vpop.f32.mrb[0].mxu0
        %v2168 = vadd.f32 0.0, %v2167
        %v2169 = vpop.f32.mrb[0].mxu0
        %2170 = vdwg.mxu0
        %v2171 = vadd.f32 %v1928, %v2033
        %v2172 = vadd.f32 %v1929, %v2038
        %v2173 = vadd.f32 %v1930, %v2043
        %v2174 = vadd.f32 %v1931, %v2048
        %v2175 = vadd.f32 %v1932, %v2053
        %v2176 = vadd.f32 %v1933, %v2058
        %v2177 = vadd.f32 %v1934, %v2063
        %v2178 = vadd.f32 %v1935, %v2068
        %v2179 = vadd.f32 %v1936, %v2073
        %v2180 = vadd.f32 %v1937, %v2078
        %v2181 = vadd.f32 %v1938, %v2083
        %v2182 = vadd.f32 %v1939, %v2088
        %v2183 = vadd.f32 %v1940, %v2093
        %v2184 = vadd.f32 %v1941, %v2098
        %v2185 = vadd.f32 %v1942, %v2103
        %v2186 = vadd.f32 %v1943, %v2108
        %v2187 = vadd.f32 %v1944, %v2113
        %v2188 = vadd.f32 %v1945, %v2118
        %v2189 = vadd.f32 %v1946, %v2123
        %v2190 = vadd.f32 %v1947, %v2128
        %v2191 = vadd.f32 %v1948, %v2133
        %v2192 = vadd.f32 %v1949, %v2138
        %v2193 = vadd.f32 %v1950, %v2143
        %v2194 = vadd.f32 %v1951, %v2148
        %v2195 = vadd.f32 %v1952, %v2153
        %v2196 = vadd.f32 %v1953, %v2158
        %v2197 = vadd.f32 %v1954, %v2163
        %v2198 = vadd.f32 %v1955, %v2168
        %s2199 = scalar_lea.vmem %s1, 28
        %v2200 = vld [vmem:[%s2199] sm:$0xf]
        %v2202 = vrot.slane %v246, 1
        %v2203 = vsel %vm280, %v1468, %v2202
        %v2204 = vrot.slane %v247, 1
        %v2205 = vsel %vm280, %v2202, %v2204
        %v2206 = vsel %vm338, %v2203, 0
        %v2208 = vsel %vm338, %v2205, 0
        %v2211 = vsel %vm395, %v2200, 0
        %2213 = vmatprep.subr.mxu0 0.0
        %2214 = vmatpush1.msra.mxu0 %v2211
        %2215 = vmatprep.subr.mxu0 0.0
        %2216 = vmatpush1.msra.mxu0 0.0
        %2217 = vmatprep.subr.mxu0 0.0
        %2218 = vmatpush1.msra.mxu0 0.0
        %2219 = vmatprep.subr.mxu0 0.0
        %2220 = vmatpush1.msra.mxu0 0.0
        %2221 = vmatprep.subr.mxu0 0.0
        %2222 = vmatpush1.msra.mxu0 0.0
        %2223 = vmatprep.subr.mxu0 0.0
        %2224 = vmatpush1.msra.mxu0 0.0
        %2225 = vmatprep.subr.mxu0 0.0
        %2226 = vmatpush1.msra.mxu0 0.0
        %2227 = vmatprep.subr.mxu0 0.0
        %2228 = vmatpush1.msra.mxu0 0.0
        %2229 = vmatprep.subr.mxu0 0.0
        %2230 = vmatpush1.msra.mxu0 0.0
        %2231 = vmatprep.subr.mxu0 0.0
        %2232 = vmatpush1.msra.mxu0 0.0
        %2233 = vmatprep.subr.mxu0 0.0
        %2234 = vmatpush1.msra.mxu0 0.0
        %2235 = vmatprep.subr.mxu0 0.0
        %2236 = vmatpush1.msra.mxu0 0.0
        %2237 = vmatprep.subr.mxu0 0.0
        %2238 = vmatpush1.msra.mxu0 0.0
        %2239 = vmatprep.subr.mxu0 0.0
        %2240 = vmatpush1.msra.mxu0 0.0
        %2241 = vmatprep.subr.mxu0 0.0
        %2242 = vmatpush1.msra.mxu0 0.0
        %2243 = vmatprep.subr.mxu0 0.0
        %2244 = vmatpush1.msra.mxu0 0.0
        %2245 = vmatprep.subr.mxu0 0.0
        %2246 = vmatpush1.msra.mxu0 0.0
        %2247 = vmatprep.subr.mxu0 0.0
        %2248 = vmatpush1.msra.mxu0 0.0
        %2249 = vmatprep.subr.mxu0 0.0
        %2250 = vmatpush1.msra.mxu0 0.0
        %2251 = vmatprep.subr.mxu0 0.0
        %2252 = vmatpush1.msra.mxu0 0.0
        %2253 = vmatprep.subr.mxu0 0.0
        %2254 = vmatpush1.msra.mxu0 0.0
        %2255 = vmatprep.subr.mxu0 0.0
        %2256 = vmatpush1.msra.mxu0 0.0
        %2257 = vmatprep.subr.mxu0 0.0
        %2258 = vmatpush1.msra.mxu0 0.0
        %2259 = vmatprep.subr.mxu0 0.0
        %2260 = vmatpush1.msra.mxu0 0.0
        %2261 = vmatprep.subr.mxu0 0.0
        %2262 = vmatpush1.msra.mxu0 0.0
        %2263 = vmatprep.subr.mxu0 0.0
        %2264 = vmatpush1.msra.mxu0 0.0
        %2265 = vmatprep.subr.mxu0 0.0
        %2266 = vmatpush1.msra.mxu0 0.0
        %2267 = vmatprep.subr.mxu0 0.0
        %2268 = vmatpush1.msra.mxu0 0.0
        %2269 = vmatprep.subr.mxu0 0.0
        %2270 = vmatpush1.msra.mxu0 0.0
        %2271 = vmatprep.subr.mxu0 0.0
        %2272 = vmatpush1.msra.mxu0 0.0
        %2273 = vmatprep.subr.mxu0 0.0
        %2274 = vmatpush1.msra.mxu0 0.0
        %2275 = vmatprep.subr.mxu0 0.0
        %2276 = vmatpush1.msra.mxu0 0.0
        %2277 = vmatprep.mubr.f32.mxu0 0.0
        %2278 = vmatmul.mubr.f32.gmra.mrb[0].mxu0 %v347
        %v2279 = vpop.f32.mrb[0].mxu0
        %v2280 = vadd.f32 0.0, %v2279
        %v2281 = vpop.f32.mrb[0].mxu0
        %2282 = vmatprep.mubr.f32.mxu0 0.0
        %2283 = vmatmul.mubr.f32.gmra.mrb[0].mxu0 %v349
        %v2284 = vpop.f32.mrb[0].mxu0
        %v2285 = vadd.f32 0.0, %v2284
        %v2286 = vpop.f32.mrb[0].mxu0
        %2287 = vmatprep.mubr.f32.mxu0 0.0
        %2288 = vmatmul.mubr.f32.gmra.mrb[0].mxu0 %v351
        %v2289 = vpop.f32.mrb[0].mxu0
        %v2290 = vadd.f32 0.0, %v2289
        %v2291 = vpop.f32.mrb[0].mxu0
        %2292 = vmatprep.mubr.f32.mxu0 0.0
        %2293 = vmatmul.mubr.f32.gmra.mrb[0].mxu0 %v353
        %v2294 = vpop.f32.mrb[0].mxu0
        %v2295 = vadd.f32 0.0, %v2294
        %v2296 = vpop.f32.mrb[0].mxu0
        %2297 = vmatprep.mubr.f32.mxu0 0.0
        %2298 = vmatmul.mubr.f32.gmra.mrb[0].mxu0 %v355
        %v2299 = vpop.f32.mrb[0].mxu0
        %v2300 = vadd.f32 0.0, %v2299
        %v2301 = vpop.f32.mrb[0].mxu0
        %2302 = vmatprep.mubr.f32.mxu0 0.0
        %2303 = vmatmul.mubr.f32.gmra.mrb[0].mxu0 %v357
        %v2304 = vpop.f32.mrb[0].mxu0
        %v2305 = vadd.f32 0.0, %v2304
        %v2306 = vpop.f32.mrb[0].mxu0
        %2307 = vmatprep.mubr.f32.mxu0 0.0
        %2308 = vmatmul.mubr.f32.gmra.mrb[0].mxu0 %v359
        %v2309 = vpop.f32.mrb[0].mxu0
        %v2310 = vadd.f32 0.0, %v2309
        %v2311 = vpop.f32.mrb[0].mxu0
        %2312 = vmatprep.mubr.f32.mxu0 0.0
        %2313 = vmatmul.mubr.f32.gmra.mrb[0].mxu0 %v361
        %v2314 = vpop.f32.mrb[0].mxu0
        %v2315 = vadd.f32 0.0, %v2314
        %v2316 = vpop.f32.mrb[0].mxu0
        %2317 = vmatprep.mubr.f32.mxu0 0.0
        %2318 = vmatmul.mubr.f32.gmra.mrb[0].mxu0 %v363
        %v2319 = vpop.f32.mrb[0].mxu0
        %v2320 = vadd.f32 0.0, %v2319
        %v2321 = vpop.f32.mrb[0].mxu0
        %2322 = vmatprep.mubr.f32.mxu0 0.0
        %2323 = vmatmul.mubr.f32.gmra.mrb[0].mxu0 %v365
        %v2324 = vpop.f32.mrb[0].mxu0
        %v2325 = vadd.f32 0.0, %v2324
        %v2326 = vpop.f32.mrb[0].mxu0
        %2327 = vmatprep.mubr.f32.mxu0 0.0
        %2328 = vmatmul.mubr.f32.gmra.mrb[0].mxu0 %v367
        %v2329 = vpop.f32.mrb[0].mxu0
        %v2330 = vadd.f32 0.0, %v2329
        %v2331 = vpop.f32.mrb[0].mxu0
        %2332 = vmatprep.mubr.f32.mxu0 0.0
        %2333 = vmatmul.mubr.f32.gmra.mrb[0].mxu0 %v369
        %v2334 = vpop.f32.mrb[0].mxu0
        %v2335 = vadd.f32 0.0, %v2334
        %v2336 = vpop.f32.mrb[0].mxu0
        %2337 = vmatprep.mubr.f32.mxu0 0.0
        %2338 = vmatmul.mubr.f32.gmra.mrb[0].mxu0 %v371
        %v2339 = vpop.f32.mrb[0].mxu0
        %v2340 = vadd.f32 0.0, %v2339
        %v2341 = vpop.f32.mrb[0].mxu0
        %2342 = vmatprep.mubr.f32.mxu0 0.0
        %2343 = vmatmul.mubr.f32.gmra.mrb[0].mxu0 %v373
        %v2344 = vpop.f32.mrb[0].mxu0
        %v2345 = vadd.f32 0.0, %v2344
        %v2346 = vpop.f32.mrb[0].mxu0
        %2347 = vmatprep.mubr.f32.mxu0 0.0
        %2348 = vmatmul.mubr.f32.gmra.mrb[0].mxu0 %v375
        %v2349 = vpop.f32.mrb[0].mxu0
        %v2350 = vadd.f32 0.0, %v2349
        %v2351 = vpop.f32.mrb[0].mxu0
        %2352 = vmatprep.mubr.f32.mxu0 0.0
        %2353 = vmatmul.mubr.f32.gmra.mrb[0].mxu0 %v377
        %v2354 = vpop.f32.mrb[0].mxu0
        %v2355 = vadd.f32 0.0, %v2354
        %v2356 = vpop.f32.mrb[0].mxu0
        %2357 = vmatprep.mubr.f32.mxu0 0.0
        %2358 = vmatmul.mubr.f32.gmra.mrb[0].mxu0 %v379
        %v2359 = vpop.f32.mrb[0].mxu0
        %v2360 = vadd.f32 0.0, %v2359
        %v2361 = vpop.f32.mrb[0].mxu0
        %2362 = vmatprep.mubr.f32.mxu0 0.0
        %2363 = vmatmul.mubr.f32.gmra.mrb[0].mxu0 %v381
        %v2364 = vpop.f32.mrb[0].mxu0
        %v2365 = vadd.f32 0.0, %v2364
        %v2366 = vpop.f32.mrb[0].mxu0
        %2367 = vmatprep.mubr.f32.mxu0 0.0
        %2368 = vmatmul.mubr.f32.gmra.mrb[0].mxu0 %v383
        %v2369 = vpop.f32.mrb[0].mxu0
        %v2370 = vadd.f32 0.0, %v2369
        %v2371 = vpop.f32.mrb[0].mxu0
        %2372 = vmatprep.mubr.f32.mxu0 0.0
        %2373 = vmatmul.mubr.f32.gmra.mrb[0].mxu0 %v385
        %v2374 = vpop.f32.mrb[0].mxu0
        %v2375 = vadd.f32 0.0, %v2374
        %v2376 = vpop.f32.mrb[0].mxu0
        %2377 = vmatprep.mubr.f32.mxu0 0.0
        %2378 = vmatmul.mubr.f32.gmra.mrb[0].mxu0 %v387
        %v2379 = vpop.f32.mrb[0].mxu0
        %v2380 = vadd.f32 0.0, %v2379
        %v2381 = vpop.f32.mrb[0].mxu0
        %2382 = vmatprep.mubr.f32.mxu0 0.0
        %2383 = vmatmul.mubr.f32.gmra.mrb[0].mxu0 %v389
        %v2384 = vpop.f32.mrb[0].mxu0
        %v2385 = vadd.f32 0.0, %v2384
        %v2386 = vpop.f32.mrb[0].mxu0
        %2387 = vmatprep.mubr.f32.mxu0 0.0
        %2388 = vmatmul.mubr.f32.gmra.mrb[0].mxu0 %v391
        %v2389 = vpop.f32.mrb[0].mxu0
        %v2390 = vadd.f32 0.0, %v2389
        %v2391 = vpop.f32.mrb[0].mxu0
        %2392 = vmatprep.mubr.f32.mxu0 0.0
        %2393 = vmatmul.mubr.f32.gmra.mrb[0].mxu0 %v393
        %v2394 = vpop.f32.mrb[0].mxu0
        %v2395 = vadd.f32 0.0, %v2394
        %v2396 = vpop.f32.mrb[0].mxu0
        %2397 = vmatprep.mubr.f32.mxu0 0.0
        %2398 = vmatmul.mubr.f32.gmra.mrb[0].mxu0 %v1470
        %v2399 = vpop.f32.mrb[0].mxu0
        %v2400 = vadd.f32 0.0, %v2399
        %v2401 = vpop.f32.mrb[0].mxu0
        %2402 = vmatprep.mubr.f32.mxu0 0.0
        %2403 = vmatmul.mubr.f32.gmra.mrb[0].mxu0 %v1472
        %v2404 = vpop.f32.mrb[0].mxu0
        %v2405 = vadd.f32 0.0, %v2404
        %v2406 = vpop.f32.mrb[0].mxu0
        %2407 = vmatprep.mubr.f32.mxu0 0.0
        %2408 = vmatmul.mubr.f32.gmra.mrb[0].mxu0 %v2206
        %v2409 = vpop.f32.mrb[0].mxu0
        %v2410 = vadd.f32 0.0, %v2409
        %v2411 = vpop.f32.mrb[0].mxu0
        %2412 = vmatprep.mubr.f32.mxu0 0.0
        %2413 = vmatmul.mubr.f32.gmra.mrb[0].mxu0 %v2208
        %v2414 = vpop.f32.mrb[0].mxu0
        %v2415 = vadd.f32 0.0, %v2414
        %v2416 = vpop.f32.mrb[0].mxu0
        %2417 = vdwg.mxu0
        %v2418 = vadd.f32 %v2171, %v2280
        %v2419 = vadd.f32 %v2172, %v2285
        %v2420 = vadd.f32 %v2173, %v2290
        %v2421 = vadd.f32 %v2174, %v2295
        %v2422 = vadd.f32 %v2175, %v2300
        %v2423 = vadd.f32 %v2176, %v2305
        %v2424 = vadd.f32 %v2177, %v2310
        %v2425 = vadd.f32 %v2178, %v2315
        %v2426 = vadd.f32 %v2179, %v2320
        %v2427 = vadd.f32 %v2180, %v2325
        %v2428 = vadd.f32 %v2181, %v2330
        %v2429 = vadd.f32 %v2182, %v2335
        %v2430 = vadd.f32 %v2183, %v2340
        %v2431 = vadd.f32 %v2184, %v2345
        %v2432 = vadd.f32 %v2185, %v2350
        %v2433 = vadd.f32 %v2186, %v2355
        %v2434 = vadd.f32 %v2187, %v2360
        %v2435 = vadd.f32 %v2188, %v2365
        %v2436 = vadd.f32 %v2189, %v2370
        %v2437 = vadd.f32 %v2190, %v2375
        %v2438 = vadd.f32 %v2191, %v2380
        %v2439 = vadd.f32 %v2192, %v2385
        %v2440 = vadd.f32 %v2193, %v2390
        %v2441 = vadd.f32 %v2194, %v2395
        %v2442 = vadd.f32 %v2195, %v2400
        %v2443 = vadd.f32 %v2196, %v2405
        %v2444 = vadd.f32 %v2197, %v2410
        %v2445 = vadd.f32 %v2198, %v2415
        %s2446 = scalar_lea.vmem %s1, 32
        %v2447 = vld [vmem:[%s2446] sm:$0xf]
        %v2448 = vrot.slane %v246, 2
        %v2449 = vsel %vm870, %v1714, %v2448
        %v2450 = vrot.slane %v247, 2
        %v2451 = vsel %vm870, %v2448, %v2450
        %v2452 = vsel %vm338, %v2449, 0
        %v2454 = vsel %vm338, %v2451, 0
        %v2457 = vsel %vm395, %v2447, 0
        %2459 = vmatprep.subr.mxu0 0.0
        %2460 = vmatpush1.msra.mxu0 %v2457
        %2461 = vmatprep.subr.mxu0 0.0
        %2462 = vmatpush1.msra.mxu0 0.0
        %2463 = vmatprep.subr.mxu0 0.0
        %2464 = vmatpush1.msra.mxu0 0.0
        %2465 = vmatprep.subr.mxu0 0.0
        %2466 = vmatpush1.msra.mxu0 0.0
        %2467 = vmatprep.subr.mxu0 0.0
        %2468 = vmatpush1.msra.mxu0 0.0
        %2469 = vmatprep.subr.mxu0 0.0
        %2470 = vmatpush1.msra.mxu0 0.0
        %2471 = vmatprep.subr.mxu0 0.0
        %2472 = vmatpush1.msra.mxu0 0.0
        %2473 = vmatprep.subr.mxu0 0.0
        %2474 = vmatpush1.msra.mxu0 0.0
        %2475 = vmatprep.subr.mxu0 0.0
        %2476 = vmatpush1.msra.mxu0 0.0
        %2477 = vmatprep.subr.mxu0 0.0
        %2478 = vmatpush1.msra.mxu0 0.0
        %2479 = vmatprep.subr.mxu0 0.0
        %2480 = vmatpush1.msra.mxu0 0.0
        %2481 = vmatprep.subr.mxu0 0.0
        %2482 = vmatpush1.msra.mxu0 0.0
        %2483 = vmatprep.subr.mxu0 0.0
        %2484 = vmatpush1.msra.mxu0 0.0
        %2485 = vmatprep.subr.mxu0 0.0
        %2486 = vmatpush1.msra.mxu0 0.0
        %2487 = vmatprep.subr.mxu0 0.0
        %2488 = vmatpush1.msra.mxu0 0.0
        %2489 = vmatprep.subr.mxu0 0.0
        %2490 = vmatpush1.msra.mxu0 0.0
        %2491 = vmatprep.subr.mxu0 0.0
        %2492 = vmatpush1.msra.mxu0 0.0
        %2493 = vmatprep.subr.mxu0 0.0
        %2494 = vmatpush1.msra.mxu0 0.0
        %2495 = vmatprep.subr.mxu0 0.0
        %2496 = vmatpush1.msra.mxu0 0.0
        %2497 = vmatprep.subr.mxu0 0.0
        %2498 = vmatpush1.msra.mxu0 0.0
        %2499 = vmatprep.subr.mxu0 0.0
        %2500 = vmatpush1.msra.mxu0 0.0
        %2501 = vmatprep.subr.mxu0 0.0
        %2502 = vmatpush1.msra.mxu0 0.0
        %2503 = vmatprep.subr.mxu0 0.0
        %2504 = vmatpush1.msra.mxu0 0.0
        %2505 = vmatprep.subr.mxu0 0.0
        %2506 = vmatpush1.msra.mxu0 0.0
        %2507 = vmatprep.subr.mxu0 0.0
        %2508 = vmatpush1.msra.mxu0 0.0
        %2509 = vmatprep.subr.mxu0 0.0
        %2510 = vmatpush1.msra.mxu0 0.0
        %2511 = vmatprep.subr.mxu0 0.0
        %2512 = vmatpush1.msra.mxu0 0.0
        %2513 = vmatprep.subr.mxu0 0.0
        %2514 = vmatpush1.msra.mxu0 0.0
        %2515 = vmatprep.subr.mxu0 0.0
        %2516 = vmatpush1.msra.mxu0 0.0
        %2517 = vmatprep.subr.mxu0 0.0
        %2518 = vmatpush1.msra.mxu0 0.0
        %2519 = vmatprep.subr.mxu0 0.0
        %2520 = vmatpush1.msra.mxu0 0.0
        %2521 = vmatprep.subr.mxu0 0.0
        %2522 = vmatpush1.msra.mxu0 0.0
        %2523 = vmatprep.mubr.f32.mxu0 0.0
        %2524 = vmatmul.mubr.f32.gmra.mrb[0].mxu0 %v936
        %v2525 = vpop.f32.mrb[0].mxu0
        %v2526 = vadd.f32 0.0, %v2525
        %v2527 = vpop.f32.mrb[0].mxu0
        %2528 = vmatprep.mubr.f32.mxu0 0.0
        %2529 = vmatmul.mubr.f32.gmra.mrb[0].mxu0 %v938
        %v2530 = vpop.f32.mrb[0].mxu0
        %v2531 = vadd.f32 0.0, %v2530
        %v2532 = vpop.f32.mrb[0].mxu0
        %2533 = vmatprep.mubr.f32.mxu0 0.0
        %2534 = vmatmul.mubr.f32.gmra.mrb[0].mxu0 %v940
        %v2535 = vpop.f32.mrb[0].mxu0
        %v2536 = vadd.f32 0.0, %v2535
        %v2537 = vpop.f32.mrb[0].mxu0
        %2538 = vmatprep.mubr.f32.mxu0 0.0
        %2539 = vmatmul.mubr.f32.gmra.mrb[0].mxu0 %v942
        %v2540 = vpop.f32.mrb[0].mxu0
        %v2541 = vadd.f32 0.0, %v2540
        %v2542 = vpop.f32.mrb[0].mxu0
        %2543 = vmatprep.mubr.f32.mxu0 0.0
        %2544 = vmatmul.mubr.f32.gmra.mrb[0].mxu0 %v944
        %v2545 = vpop.f32.mrb[0].mxu0
        %v2546 = vadd.f32 0.0, %v2545
        %v2547 = vpop.f32.mrb[0].mxu0
        %2548 = vmatprep.mubr.f32.mxu0 0.0
        %2549 = vmatmul.mubr.f32.gmra.mrb[0].mxu0 %v946
        %v2550 = vpop.f32.mrb[0].mxu0
        %v2551 = vadd.f32 0.0, %v2550
        %v2552 = vpop.f32.mrb[0].mxu0
        %2553 = vmatprep.mubr.f32.mxu0 0.0
        %2554 = vmatmul.mubr.f32.gmra.mrb[0].mxu0 %v948
        %v2555 = vpop.f32.mrb[0].mxu0
        %v2556 = vadd.f32 0.0, %v2555
        %v2557 = vpop.f32.mrb[0].mxu0
        %2558 = vmatprep.mubr.f32.mxu0 0.0
        %2559 = vmatmul.mubr.f32.gmra.mrb[0].mxu0 %v950
        %v2560 = vpop.f32.mrb[0].mxu0
        %v2561 = vadd.f32 0.0, %v2560
        %v2562 = vpop.f32.mrb[0].mxu0
        %2563 = vmatprep.mubr.f32.mxu0 0.0
        %2564 = vmatmul.mubr.f32.gmra.mrb[0].mxu0 %v952
        %v2565 = vpop.f32.mrb[0].mxu0
        %v2566 = vadd.f32 0.0, %v2565
        %v2567 = vpop.f32.mrb[0].mxu0
        %2568 = vmatprep.mubr.f32.mxu0 0.0
        %2569 = vmatmul.mubr.f32.gmra.mrb[0].mxu0 %v954
        %v2570 = vpop.f32.mrb[0].mxu0
        %v2571 = vadd.f32 0.0, %v2570
        %v2572 = vpop.f32.mrb[0].mxu0
        %2573 = vmatprep.mubr.f32.mxu0 0.0
        %2574 = vmatmul.mubr.f32.gmra.mrb[0].mxu0 %v956
        %v2575 = vpop.f32.mrb[0].mxu0
        %v2576 = vadd.f32 0.0, %v2575
        %v2577 = vpop.f32.mrb[0].mxu0
        %2578 = vmatprep.mubr.f32.mxu0 0.0
        %2579 = vmatmul.mubr.f32.gmra.mrb[0].mxu0 %v958
        %v2580 = vpop.f32.mrb[0].mxu0
        %v2581 = vadd.f32 0.0, %v2580
        %v2582 = vpop.f32.mrb[0].mxu0
        %2583 = vmatprep.mubr.f32.mxu0 0.0
        %2584 = vmatmul.mubr.f32.gmra.mrb[0].mxu0 %v960
        %v2585 = vpop.f32.mrb[0].mxu0
        %v2586 = vadd.f32 0.0, %v2585
        %v2587 = vpop.f32.mrb[0].mxu0
        %2588 = vmatprep.mubr.f32.mxu0 0.0
        %2589 = vmatmul.mubr.f32.gmra.mrb[0].mxu0 %v962
        %v2590 = vpop.f32.mrb[0].mxu0
        %v2591 = vadd.f32 0.0, %v2590
        %v2592 = vpop.f32.mrb[0].mxu0
        %2593 = vmatprep.mubr.f32.mxu0 0.0
        %2594 = vmatmul.mubr.f32.gmra.mrb[0].mxu0 %v964
        %v2595 = vpop.f32.mrb[0].mxu0
        %v2596 = vadd.f32 0.0, %v2595
        %v2597 = vpop.f32.mrb[0].mxu0
        %2598 = vmatprep.mubr.f32.mxu0 0.0
        %2599 = vmatmul.mubr.f32.gmra.mrb[0].mxu0 %v966
        %v2600 = vpop.f32.mrb[0].mxu0
        %v2601 = vadd.f32 0.0, %v2600
        %v2602 = vpop.f32.mrb[0].mxu0
        %2603 = vmatprep.mubr.f32.mxu0 0.0
        %2604 = vmatmul.mubr.f32.gmra.mrb[0].mxu0 %v968
        %v2605 = vpop.f32.mrb[0].mxu0
        %v2606 = vadd.f32 0.0, %v2605
        %v2607 = vpop.f32.mrb[0].mxu0
        %2608 = vmatprep.mubr.f32.mxu0 0.0
        %2609 = vmatmul.mubr.f32.gmra.mrb[0].mxu0 %v970
        %v2610 = vpop.f32.mrb[0].mxu0
        %v2611 = vadd.f32 0.0, %v2610
        %v2612 = vpop.f32.mrb[0].mxu0
        %2613 = vmatprep.mubr.f32.mxu0 0.0
        %2614 = vmatmul.mubr.f32.gmra.mrb[0].mxu0 %v972
        %v2615 = vpop.f32.mrb[0].mxu0
        %v2616 = vadd.f32 0.0, %v2615
        %v2617 = vpop.f32.mrb[0].mxu0
        %2618 = vmatprep.mubr.f32.mxu0 0.0
        %2619 = vmatmul.mubr.f32.gmra.mrb[0].mxu0 %v974
        %v2620 = vpop.f32.mrb[0].mxu0
        %v2621 = vadd.f32 0.0, %v2620
        %v2622 = vpop.f32.mrb[0].mxu0
        %2623 = vmatprep.mubr.f32.mxu0 0.0
        %2624 = vmatmul.mubr.f32.gmra.mrb[0].mxu0 %v976
        %v2625 = vpop.f32.mrb[0].mxu0
        %v2626 = vadd.f32 0.0, %v2625
        %v2627 = vpop.f32.mrb[0].mxu0
        %2628 = vmatprep.mubr.f32.mxu0 0.0
        %2629 = vmatmul.mubr.f32.gmra.mrb[0].mxu0 %v978
        %v2630 = vpop.f32.mrb[0].mxu0
        %v2631 = vadd.f32 0.0, %v2630
        %v2632 = vpop.f32.mrb[0].mxu0
        %2633 = vmatprep.mubr.f32.mxu0 0.0
        %2634 = vmatmul.mubr.f32.gmra.mrb[0].mxu0 %v980
        %v2635 = vpop.f32.mrb[0].mxu0
        %v2636 = vadd.f32 0.0, %v2635
        %v2637 = vpop.f32.mrb[0].mxu0
        %2638 = vmatprep.mubr.f32.mxu0 0.0
        %2639 = vmatmul.mubr.f32.gmra.mrb[0].mxu0 %v982
        %v2640 = vpop.f32.mrb[0].mxu0
        %v2641 = vadd.f32 0.0, %v2640
        %v2642 = vpop.f32.mrb[0].mxu0
        %2643 = vmatprep.mubr.f32.mxu0 0.0
        %2644 = vmatmul.mubr.f32.gmra.mrb[0].mxu0 %v1716
        %v2645 = vpop.f32.mrb[0].mxu0
        %v2646 = vadd.f32 0.0, %v2645
        %v2647 = vpop.f32.mrb[0].mxu0
        %2648 = vmatprep.mubr.f32.mxu0 0.0
        %2649 = vmatmul.mubr.f32.gmra.mrb[0].mxu0 %v1718
        %v2650 = vpop.f32.mrb[0].mxu0
        %v2651 = vadd.f32 0.0, %v2650
        %v2652 = vpop.f32.mrb[0].mxu0
        %2653 = vmatprep.mubr.f32.mxu0 0.0
        %2654 = vmatmul.mubr.f32.gmra.mrb[0].mxu0 %v2452
        %v2655 = vpop.f32.mrb[0].mxu0
        %v2656 = vadd.f32 0.0, %v2655
        %v2657 = vpop.f32.mrb[0].mxu0
        %2658 = vmatprep.mubr.f32.mxu0 0.0
        %2659 = vmatmul.mubr.f32.gmra.mrb[0].mxu0 %v2454
        %v2660 = vpop.f32.mrb[0].mxu0
        %v2661 = vadd.f32 0.0, %v2660
        %v2662 = vpop.f32.mrb[0].mxu0
        %2663 = vdwg.mxu0
        %v2664 = vadd.f32 %v2418, %v2526
        %v2665 = vadd.f32 %v2419, %v2531
        %v2666 = vadd.f32 %v2420, %v2536
        %v2667 = vadd.f32 %v2421, %v2541
        %v2668 = vadd.f32 %v2422, %v2546
        %v2669 = vadd.f32 %v2423, %v2551
        %v2670 = vadd.f32 %v2424, %v2556
        %v2671 = vadd.f32 %v2425, %v2561
        %v2672 = vadd.f32 %v2426, %v2566
        %v2673 = vadd.f32 %v2427, %v2571
        %v2674 = vadd.f32 %v2428, %v2576
        %v2675 = vadd.f32 %v2429, %v2581
        %v2676 = vadd.f32 %v2430, %v2586
        %v2677 = vadd.f32 %v2431, %v2591
        %v2678 = vadd.f32 %v2432, %v2596
        %v2679 = vadd.f32 %v2433, %v2601
        %v2680 = vadd.f32 %v2434, %v2606
        %v2681 = vadd.f32 %v2435, %v2611
        %v2682 = vadd.f32 %v2436, %v2616
        %v2683 = vadd.f32 %v2437, %v2621
        %v2684 = vadd.f32 %v2438, %v2626
        %v2685 = vadd.f32 %v2439, %v2631
        %v2686 = vadd.f32 %v2440, %v2636
        %v2687 = vadd.f32 %v2441, %v2641
        %v2688 = vadd.f32 %v2442, %v2646
        %v2689 = vadd.f32 %v2443, %v2651
        %v2690 = vadd.f32 %v2444, %v2656
        %v2691 = vadd.f32 %v2445, %v2661
        %v2692 = vpack.c.bf16 %v2665, %v2664
        %v2693 = vpack.c.bf16 %v2667, %v2666
        %v2694 = vpack.c.bf16 %v2669, %v2668
        %v2695 = vpack.c.bf16 %v2671, %v2670
        %v2696 = vpack.c.bf16 %v2673, %v2672
        %v2697 = vpack.c.bf16 %v2675, %v2674
        %v2698 = vpack.c.bf16 %v2677, %v2676
        %v2699 = vpack.c.bf16 %v2679, %v2678
        %v2700 = vpack.c.bf16 %v2681, %v2680
        %v2701 = vpack.c.bf16 %v2683, %v2682
        %v2702 = vpack.c.bf16 %v2685, %v2684
        %v2703 = vpack.c.bf16 %v2687, %v2686
        %v2704 = vpack.c.bf16 %v2689, %v2688
        %v2705 = vpack.c.bf16 %v2691, %v2690
        %v2720 = vunpack.c.l.b16 %v2692
        %v2721 = vunpack.c.h.b16 %v2692
        %v2722 = vunpack.c.l.b16 %v2693
        %v2723 = vunpack.c.h.b16 %v2693
        %v2724 = vunpack.c.l.b16 %v2694
        %v2725 = vunpack.c.h.b16 %v2694
        %v2726 = vunpack.c.l.b16 %v2695
        %v2727 = vunpack.c.h.b16 %v2695
        %v2728 = vunpack.c.l.b16 %v2696
        %v2729 = vunpack.c.h.b16 %v2696
        %v2730 = vunpack.c.l.b16 %v2697
        %v2731 = vunpack.c.h.b16 %v2697
        %v2732 = vunpack.c.l.b16 %v2698
        %v2733 = vunpack.c.h.b16 %v2698
        %v2734 = vunpack.c.l.b16 %v2699
        %v2735 = vunpack.c.h.b16 %v2699
        %v2736 = vunpack.c.l.b16 %v2700
        %v2737 = vunpack.c.h.b16 %v2700
        %v2738 = vunpack.c.l.b16 %v2701
        %v2739 = vunpack.c.h.b16 %v2701
        %v2740 = vunpack.c.l.b16 %v2702
        %v2741 = vunpack.c.h.b16 %v2702
        %v2742 = vunpack.c.l.b16 %v2703
        %v2743 = vunpack.c.h.b16 %v2703
        %v2744 = vunpack.c.l.b16 %v2704
        %v2745 = vunpack.c.h.b16 %v2704
        %v2746 = vunpack.c.l.b16 %v2705
        %v2747 = vunpack.c.h.b16 %v2705
        %v2748 = vpack.c.b16 %v2720, %v2720
        %v2749 = vpack.c.b16 %v2721, %v2721
        %v2750 = vpack.c.b16 %v2722, %v2722
        %v2751 = vpack.c.b16 %v2723, %v2723
        %v2752 = vpack.c.b16 %v2724, %v2724
        %v2753 = vpack.c.b16 %v2725, %v2725
        %v2754 = vpack.c.b16 %v2726, %v2726
        %v2755 = vpack.c.b16 %v2727, %v2727
        %v2756 = vpack.c.b16 %v2728, %v2728
        %v2757 = vpack.c.b16 %v2729, %v2729
        %v2758 = vpack.c.b16 %v2730, %v2730
        %v2759 = vpack.c.b16 %v2731, %v2731
        %v2760 = vpack.c.b16 %v2732, %v2732
        %v2761 = vpack.c.b16 %v2733, %v2733
        %v2762 = vpack.c.b16 %v2734, %v2734
        %v2763 = vpack.c.b16 %v2735, %v2735
        %v2764 = vpack.c.b16 %v2736, %v2736
        %v2765 = vpack.c.b16 %v2737, %v2737
        %v2766 = vpack.c.b16 %v2738, %v2738
        %v2767 = vpack.c.b16 %v2739, %v2739
        %v2768 = vpack.c.b16 %v2740, %v2740
        %v2769 = vpack.c.b16 %v2741, %v2741
        %v2770 = vpack.c.b16 %v2742, %v2742
        %v2771 = vpack.c.b16 %v2743, %v2743
        %v2772 = vpack.c.b16 %v2744, %v2744
        %v2773 = vpack.c.b16 %v2745, %v2745
        %v2774 = vpack.c.b16 %v2746, %v2746
        %v2775 = vpack.c.b16 %v2747, %v2747
        %2804 = vst [vmem:[%s194] sm:$0xf] %v2748
        %2805 = vst [vmem:[%s194 + $0x4] sm:$0xf] %v2749
        %2806 = vst [vmem:[%s194 + $0x8] sm:$0xf] %v2750
        %2807 = vst [vmem:[%s194 + $0xc] sm:$0xf] %v2751
        %2808 = vst [vmem:[%s194 + $0x10] sm:$0xf] %v2752
        %2809 = vst [vmem:[%s194 + $0x14] sm:$0xf] %v2753
        %2810 = vst [vmem:[%s194 + $0x18] sm:$0xf] %v2754
        %2811 = vst [vmem:[%s194 + $0x1c] sm:$0xf] %v2755
        %2812 = vst [vmem:[%s194 + $0x20] sm:$0xf] %v2756
        %2813 = vst [vmem:[%s194 + $0x24] sm:$0xf] %v2757
        %2814 = vst [vmem:[%s194 + $0x28] sm:$0xf] %v2758
        %2815 = vst [vmem:[%s194 + $0x2c] sm:$0xf] %v2759
        %2816 = vst [vmem:[%s194 + $0x30] sm:$0xf] %v2760
        %2817 = vst [vmem:[%s194 + $0x34] sm:$0xf] %v2761
        %2818 = vst [vmem:[%s194 + $0x38] sm:$0xf] %v2762
        %2819 = vst [vmem:[%s194 + $0x3c] sm:$0xf] %v2763
        %2820 = vst [vmem:[%s194 + $0x40] sm:$0xf] %v2764
        %2821 = vst [vmem:[%s194 + $0x44] sm:$0xf] %v2765
        %2822 = vst [vmem:[%s194 + $0x48] sm:$0xf] %v2766
        %2823 = vst [vmem:[%s194 + $0x4c] sm:$0xf] %v2767
        %2824 = vst [vmem:[%s194 + $0x50] sm:$0xf] %v2768
        %2825 = vst [vmem:[%s194 + $0x54] sm:$0xf] %v2769
        %2826 = vst [vmem:[%s194 + $0x58] sm:$0xf] %v2770
        %2827 = vst [vmem:[%s194 + $0x5c] sm:$0xf] %v2771
        %2828 = vst [vmem:[%s194 + $0x60] sm:$0xf] %v2772
        %2829 = vst [vmem:[%s194 + $0x64] sm:$0xf] %v2773
        %2830 = vst [vmem:[%s194 + $0x68] sm:$0xf] %v2774
        %2831 = vst [vmem:[%s194 + $0x6c] sm:$0xf] %v2775
        %v2832 = vlaneseq
        %v2833 = vshrl.u32 %v2832, 7
        %v2834 = vadd.s32 %v2833, 8
        %v2835 = vadd.s32 %v2833, 16
        %v2836 = vadd.s32 %v2833, 24
        %v2837 = vadd.s32 %v2833, 32
        %v2838 = vadd.s32 %v2833, 40
        %v2839 = vadd.s32 %v2833, 48
        %v2840 = vadd.s32 %v2833, 56
        %v2841 = vadd.s32 %v2833, 64
        %v2842 = vadd.s32 %v2833, 72
        %v2843 = vadd.s32 %v2833, 80
        %v2844 = vadd.s32 %v2833, 88
        %v2845 = vadd.s32 %v2833, 96
        %v2846 = vadd.s32 %v2833, 104
        %v2847 = vadd.s32 %v2833, 112
        %v2848 = vadd.s32 %v2833, 120
        %v2849 = vadd.s32 %v2833, 128
        %v2850 = vadd.s32 %v2833, 136
        %v2851 = vadd.s32 %v2833, 144
        %v2852 = vadd.s32 %v2833, 152
        %v2853 = vadd.s32 %v2833, 160
        %v2854 = vadd.s32 %v2833, 168
        %v2855 = vadd.s32 %v2833, 176
        %v2856 = vadd.s32 %v2833, 184
        %v2857 = vadd.s32 %v2833, 192
        %v2858 = vadd.s32 %v2833, 200
        %v2859 = vadd.s32 %v2833, 208
        %v2860 = vadd.s32 %v2833, 216
        %vm2861 = vcmp.lt.s32.totalorder %v2833, 0
        %v2862 = vsub.s32 0, %v2833
        %v2863 = vsel %vm2861, %v2862, %v2833
        %v2864 = vshrl.u32 %v2863, 4
        %v2865 = vand.u32 %v2863, 15
        %v2866 = vsub.s32 0, %v2865
        %v2867 = vsel %vm2861, %v2866, %v2865
        %vm2868 = vcmp.lt.s32.totalorder %v2834, 0
        %v2869 = vsub.s32 0, %v2834
        %v2870 = vsel %vm2868, %v2869, %v2834
        %v2871 = vshrl.u32 %v2870, 4
        %v2872 = vand.u32 %v2870, 15
        %v2873 = vsub.s32 0, %v2872
        %v2874 = vsel %vm2868, %v2873, %v2872
        %vm2875 = vcmp.lt.s32.totalorder %v2835, 0
        %v2876 = vsub.s32 0, %v2835
        %v2877 = vsel %vm2875, %v2876, %v2835
        %v2878 = vshrl.u32 %v2877, 4
        %v2879 = vand.u32 %v2877, 15
        %v2880 = vsub.s32 0, %v2879
        %v2881 = vsel %vm2875, %v2880, %v2879
        %vm2882 = vcmp.lt.s32.totalorder %v2836, 0
        %v2883 = vsub.s32 0, %v2836
        %v2884 = vsel %vm2882, %v2883, %v2836
        %v2885 = vshrl.u32 %v2884, 4
        %v2886 = vand.u32 %v2884, 15
        %v2887 = vsub.s32 0, %v2886
        %v2888 = vsel %vm2882, %v2887, %v2886
        %vm2889 = vcmp.lt.s32.totalorder %v2837, 0
        %v2890 = vsub.s32 0, %v2837
        %v2891 = vsel %vm2889, %v2890, %v2837
        %v2892 = vshrl.u32 %v2891, 4
        %v2893 = vand.u32 %v2891, 15
        %v2894 = vsub.s32 0, %v2893
        %v2895 = vsel %vm2889, %v2894, %v2893
        %vm2896 = vcmp.lt.s32.totalorder %v2838, 0
        %v2897 = vsub.s32 0, %v2838
        %v2898 = vsel %vm2896, %v2897, %v2838
        %v2899 = vshrl.u32 %v2898, 4
        %v2900 = vand.u32 %v2898, 15
        %v2901 = vsub.s32 0, %v2900
        %v2902 = vsel %vm2896, %v2901, %v2900
        %vm2903 = vcmp.lt.s32.totalorder %v2839, 0
        %v2904 = vsub.s32 0, %v2839
        %v2905 = vsel %vm2903, %v2904, %v2839
        %v2906 = vshrl.u32 %v2905, 4
        %v2907 = vand.u32 %v2905, 15
        %v2908 = vsub.s32 0, %v2907
        %v2909 = vsel %vm2903, %v2908, %v2907
        %vm2910 = vcmp.lt.s32.totalorder %v2840, 0
        %v2911 = vsub.s32 0, %v2840
        %v2912 = vsel %vm2910, %v2911, %v2840
        %v2913 = vshrl.u32 %v2912, 4
        %v2914 = vand.u32 %v2912, 15
        %v2915 = vsub.s32 0, %v2914
        %v2916 = vsel %vm2910, %v2915, %v2914
        %vm2917 = vcmp.lt.s32.totalorder %v2841, 0
        %v2918 = vsub.s32 0, %v2841
        %v2919 = vsel %vm2917, %v2918, %v2841
        %v2920 = vshrl.u32 %v2919, 4
        %v2921 = vand.u32 %v2919, 15
        %v2922 = vsub.s32 0, %v2921
        %v2923 = vsel %vm2917, %v2922, %v2921
        %vm2924 = vcmp.lt.s32.totalorder %v2842, 0
        %v2925 = vsub.s32 0, %v2842
        %v2926 = vsel %vm2924, %v2925, %v2842
        %v2927 = vshrl.u32 %v2926, 4
        %v2928 = vand.u32 %v2926, 15
        %v2929 = vsub.s32 0, %v2928
        %v2930 = vsel %vm2924, %v2929, %v2928
        %vm2931 = vcmp.lt.s32.totalorder %v2843, 0
        %v2932 = vsub.s32 0, %v2843
        %v2933 = vsel %vm2931, %v2932, %v2843
        %v2934 = vshrl.u32 %v2933, 4
        %v2935 = vand.u32 %v2933, 15
        %v2936 = vsub.s32 0, %v2935
        %v2937 = vsel %vm2931, %v2936, %v2935
        %vm2938 = vcmp.lt.s32.totalorder %v2844, 0
        %v2939 = vsub.s32 0, %v2844
        %v2940 = vsel %vm2938, %v2939, %v2844
        %v2941 = vshrl.u32 %v2940, 4
        %v2942 = vand.u32 %v2940, 15
        %v2943 = vsub.s32 0, %v2942
        %v2944 = vsel %vm2938, %v2943, %v2942
        %vm2945 = vcmp.lt.s32.totalorder %v2845, 0
        %v2946 = vsub.s32 0, %v2845
        %v2947 = vsel %vm2945, %v2946, %v2845
        %v2948 = vshrl.u32 %v2947, 4
        %v2949 = vand.u32 %v2947, 15
        %v2950 = vsub.s32 0, %v2949
        %v2951 = vsel %vm2945, %v2950, %v2949
        %vm2952 = vcmp.lt.s32.totalorder %v2846, 0
        %v2953 = vsub.s32 0, %v2846
        %v2954 = vsel %vm2952, %v2953, %v2846
        %v2955 = vshrl.u32 %v2954, 4
        %v2956 = vand.u32 %v2954, 15
        %v2957 = vsub.s32 0, %v2956
        %v2958 = vsel %vm2952, %v2957, %v2956
        %vm2959 = vcmp.lt.s32.totalorder %v2847, 0
        %v2960 = vsub.s32 0, %v2847
        %v2961 = vsel %vm2959, %v2960, %v2847
        %v2962 = vshrl.u32 %v2961, 4
        %v2963 = vand.u32 %v2961, 15
        %v2964 = vsub.s32 0, %v2963
        %v2965 = vsel %vm2959, %v2964, %v2963
        %vm2966 = vcmp.lt.s32.totalorder %v2848, 0
        %v2967 = vsub.s32 0, %v2848
        %v2968 = vsel %vm2966, %v2967, %v2848
        %v2969 = vshrl.u32 %v2968, 4
        %v2970 = vand.u32 %v2968, 15
        %v2971 = vsub.s32 0, %v2970
        %v2972 = vsel %vm2966, %v2971, %v2970
        %vm2973 = vcmp.lt.s32.totalorder %v2849, 0
        %v2974 = vsub.s32 0, %v2849
        %v2975 = vsel %vm2973, %v2974, %v2849
        %v2976 = vshrl.u32 %v2975, 4
        %v2977 = vand.u32 %v2975, 15
        %v2978 = vsub.s32 0, %v2977
        %v2979 = vsel %vm2973, %v2978, %v2977
        %vm2980 = vcmp.lt.s32.totalorder %v2850, 0
        %v2981 = vsub.s32 0, %v2850
        %v2982 = vsel %vm2980, %v2981, %v2850
        %v2983 = vshrl.u32 %v2982, 4
        %v2984 = vand.u32 %v2982, 15
        %v2985 = vsub.s32 0, %v2984
        %v2986 = vsel %vm2980, %v2985, %v2984
        %vm2987 = vcmp.lt.s32.totalorder %v2851, 0
        %v2988 = vsub.s32 0, %v2851
        %v2989 = vsel %vm2987, %v2988, %v2851
        %v2990 = vshrl.u32 %v2989, 4
        %v2991 = vand.u32 %v2989, 15
        %v2992 = vsub.s32 0, %v2991
        %v2993 = vsel %vm2987, %v2992, %v2991
        %vm2994 = vcmp.lt.s32.totalorder %v2852, 0
        %v2995 = vsub.s32 0, %v2852
        %v2996 = vsel %vm2994, %v2995, %v2852
        %v2997 = vshrl.u32 %v2996, 4
        %v2998 = vand.u32 %v2996, 15
        %v2999 = vsub.s32 0, %v2998
        %v3000 = vsel %vm2994, %v2999, %v2998
        %vm3001 = vcmp.lt.s32.totalorder %v2853, 0
        %v3002 = vsub.s32 0, %v2853
        %v3003 = vsel %vm3001, %v3002, %v2853
        %v3004 = vshrl.u32 %v3003, 4
        %v3005 = vand.u32 %v3003, 15
        %v3006 = vsub.s32 0, %v3005
        %v3007 = vsel %vm3001, %v3006, %v3005
        %vm3008 = vcmp.lt.s32.totalorder %v2854, 0
        %v3009 = vsub.s32 0, %v2854
        %v3010 = vsel %vm3008, %v3009, %v2854
        %v3011 = vshrl.u32 %v3010, 4
        %v3012 = vand.u32 %v3010, 15
        %v3013 = vsub.s32 0, %v3012
        %v3014 = vsel %vm3008, %v3013, %v3012
        %vm3015 = vcmp.lt.s32.totalorder %v2855, 0
        %v3016 = vsub.s32 0, %v2855
        %v3017 = vsel %vm3015, %v3016, %v2855
        %v3018 = vshrl.u32 %v3017, 4
        %v3019 = vand.u32 %v3017, 15
        %v3020 = vsub.s32 0, %v3019
        %v3021 = vsel %vm3015, %v3020, %v3019
        %vm3022 = vcmp.lt.s32.totalorder %v2856, 0
        %v3023 = vsub.s32 0, %v2856
        %v3024 = vsel %vm3022, %v3023, %v2856
        %v3025 = vshrl.u32 %v3024, 4
        %v3026 = vand.u32 %v3024, 15
        %v3027 = vsub.s32 0, %v3026
        %v3028 = vsel %vm3022, %v3027, %v3026
        %vm3029 = vcmp.lt.s32.totalorder %v2857, 0
        %v3030 = vsub.s32 0, %v2857
        %v3031 = vsel %vm3029, %v3030, %v2857
        %v3032 = vshrl.u32 %v3031, 4
        %v3033 = vand.u32 %v3031, 15
        %v3034 = vsub.s32 0, %v3033
        %v3035 = vsel %vm3029, %v3034, %v3033
        %vm3036 = vcmp.lt.s32.totalorder %v2858, 0
        %v3037 = vsub.s32 0, %v2858
        %v3038 = vsel %vm3036, %v3037, %v2858
        %v3039 = vshrl.u32 %v3038, 4
        %v3040 = vand.u32 %v3038, 15
        %v3041 = vsub.s32 0, %v3040
        %v3042 = vsel %vm3036, %v3041, %v3040
        %vm3043 = vcmp.lt.s32.totalorder %v2859, 0
        %v3044 = vsub.s32 0, %v2859
        %v3045 = vsel %vm3043, %v3044, %v2859
        %v3046 = vshrl.u32 %v3045, 4
        %v3047 = vand.u32 %v3045, 15
        %v3048 = vsub.s32 0, %v3047
        %v3049 = vsel %vm3043, %v3048, %v3047
        %vm3050 = vcmp.lt.s32.totalorder %v2860, 0
        %v3051 = vsub.s32 0, %v2860
        %v3052 = vsel %vm3050, %v3051, %v2860
        %v3053 = vshrl.u32 %v3052, 4
        %v3054 = vand.u32 %v3052, 15
        %v3055 = vsub.s32 0, %v3054
        %v3056 = vsel %vm3050, %v3055, %v3054
        %vm3057 = vcmp.ne.s32.totalorder %v2867, 0
        %vm3058 = vcmp.ne.s32.totalorder %v2874, 0
        %vm3059 = vcmp.ne.s32.totalorder %v2881, 0
        %vm3060 = vcmp.ne.s32.totalorder %v2888, 0
        %vm3061 = vcmp.ne.s32.totalorder %v2895, 0
        %vm3062 = vcmp.ne.s32.totalorder %v2902, 0
        %vm3063 = vcmp.ne.s32.totalorder %v2909, 0
        %vm3064 = vcmp.ne.s32.totalorder %v2916, 0
        %vm3065 = vcmp.ne.s32.totalorder %v2923, 0
        %vm3066 = vcmp.ne.s32.totalorder %v2930, 0
        %vm3067 = vcmp.ne.s32.totalorder %v2937, 0
        %vm3068 = vcmp.ne.s32.totalorder %v2944, 0
        %vm3069 = vcmp.ne.s32.totalorder %v2951, 0
        %vm3070 = vcmp.ne.s32.totalorder %v2958, 0
        %vm3071 = vcmp.ne.s32.totalorder %v2965, 0
        %vm3072 = vcmp.ne.s32.totalorder %v2972, 0
        %vm3073 = vcmp.ne.s32.totalorder %v2979, 0
        %vm3074 = vcmp.ne.s32.totalorder %v2986, 0
        %vm3075 = vcmp.ne.s32.totalorder %v2993, 0
        %vm3076 = vcmp.ne.s32.totalorder %v3000, 0
        %vm3077 = vcmp.ne.s32.totalorder %v3007, 0
        %vm3078 = vcmp.ne.s32.totalorder %v3014, 0
        %vm3079 = vcmp.ne.s32.totalorder %v3021, 0
        %vm3080 = vcmp.ne.s32.totalorder %v3028, 0
        %vm3081 = vcmp.ne.s32.totalorder %v3035, 0
        %vm3082 = vcmp.ne.s32.totalorder %v3042, 0
        %vm3083 = vcmp.ne.s32.totalorder %v3049, 0
        %vm3084 = vcmp.ne.s32.totalorder %v3056, 0
        %vm3085 = vcmp.lt.s32.totalorder %v2867, 0
        %vm3086 = vcmp.lt.s32.totalorder %v2874, 0
        %vm3087 = vcmp.lt.s32.totalorder %v2881, 0
        %vm3088 = vcmp.lt.s32.totalorder %v2888, 0
        %vm3089 = vcmp.lt.s32.totalorder %v2895, 0
        %vm3090 = vcmp.lt.s32.totalorder %v2902, 0
        %vm3091 = vcmp.lt.s32.totalorder %v2909, 0
        %vm3092 = vcmp.lt.s32.totalorder %v2916, 0
        %vm3093 = vcmp.lt.s32.totalorder %v2923, 0
        %vm3094 = vcmp.lt.s32.totalorder %v2930, 0
        %vm3095 = vcmp.lt.s32.totalorder %v2937, 0
        %vm3096 = vcmp.lt.s32.totalorder %v2944, 0
        %vm3097 = vcmp.lt.s32.totalorder %v2951, 0
        %vm3098 = vcmp.lt.s32.totalorder %v2958, 0
        %vm3099 = vcmp.lt.s32.totalorder %v2965, 0
        %vm3100 = vcmp.lt.s32.totalorder %v2972, 0
        %vm3101 = vcmp.lt.s32.totalorder %v2979, 0
        %vm3102 = vcmp.lt.s32.totalorder %v2986, 0
        %vm3103 = vcmp.lt.s32.totalorder %v2993, 0
        %vm3104 = vcmp.lt.s32.totalorder %v3000, 0
        %vm3105 = vcmp.lt.s32.totalorder %v3007, 0
        %vm3106 = vcmp.lt.s32.totalorder %v3014, 0
        %vm3107 = vcmp.lt.s32.totalorder %v3021, 0
        %vm3108 = vcmp.lt.s32.totalorder %v3028, 0
        %vm3109 = vcmp.lt.s32.totalorder %v3035, 0
        %vm3110 = vcmp.lt.s32.totalorder %v3042, 0
        %vm3111 = vcmp.lt.s32.totalorder %v3049, 0
        %vm3112 = vcmp.lt.s32.totalorder %v3056, 0
        %vm3113 = vmand %vm3085, %vm3057
        %vm3114 = vmand %vm3086, %vm3058
        %vm3115 = vmand %vm3087, %vm3059
        %vm3116 = vmand %vm3088, %vm3060
        %vm3117 = vmand %vm3089, %vm3061
        %vm3118 = vmand %vm3090, %vm3062
        %vm3119 = vmand %vm3091, %vm3063
        %vm3120 = vmand %vm3092, %vm3064
        %vm3121 = vmand %vm3093, %vm3065
        %vm3122 = vmand %vm3094, %vm3066
        %vm3123 = vmand %vm3095, %vm3067
        %vm3124 = vmand %vm3096, %vm3068
        %vm3125 = vmand %vm3097, %vm3069
        %vm3126 = vmand %vm3098, %vm3070
        %vm3127 = vmand %vm3099, %vm3071
        %vm3128 = vmand %vm3100, %vm3072
        %vm3129 = vmand %vm3101, %vm3073
        %vm3130 = vmand %vm3102, %vm3074
        %vm3131 = vmand %vm3103, %vm3075
        %vm3132 = vmand %vm3104, %vm3076
        %vm3133 = vmand %vm3105, %vm3077
        %vm3134 = vmand %vm3106, %vm3078
        %vm3135 = vmand %vm3107, %vm3079
        %vm3136 = vmand %vm3108, %vm3080
        %vm3137 = vmand %vm3109, %vm3081
        %vm3138 = vmand %vm3110, %vm3082
        %vm3139 = vmand %vm3111, %vm3083
        %vm3140 = vmand %vm3112, %vm3084
        %v3141 = vadd.s32 %v2867, 16
        %v3142 = vadd.s32 %v2874, 16
        %v3143 = vadd.s32 %v2881, 16
        %v3144 = vadd.s32 %v2888, 16
        %v3145 = vadd.s32 %v2895, 16
        %v3146 = vadd.s32 %v2902, 16
        %v3147 = vadd.s32 %v2909, 16
        %v3148 = vadd.s32 %v2916, 16
        %v3149 = vadd.s32 %v2923, 16
        %v3150 = vadd.s32 %v2930, 16
        %v3151 = vadd.s32 %v2937, 16
        %v3152 = vadd.s32 %v2944, 16
        %v3153 = vadd.s32 %v2951, 16
        %v3154 = vadd.s32 %v2958, 16
        %v3155 = vadd.s32 %v2965, 16
        %v3156 = vadd.s32 %v2972, 16
        %v3157 = vadd.s32 %v2979, 16
        %v3158 = vadd.s32 %v2986, 16
        %v3159 = vadd.s32 %v2993, 16
        %v3160 = vadd.s32 %v3000, 16
        %v3161 = vadd.s32 %v3007, 16
        %v3162 = vadd.s32 %v3014, 16
        %v3163 = vadd.s32 %v3021, 16
        %v3164 = vadd.s32 %v3028, 16
        %v3165 = vadd.s32 %v3035, 16
        %v3166 = vadd.s32 %v3042, 16
        %v3167 = vadd.s32 %v3049, 16
        %v3168 = vadd.s32 %v3056, 16
        %v3169 = vsel %vm3113, %v3141, %v2867
        %v3170 = vsel %vm3114, %v3142, %v2874
        %v3171 = vsel %vm3115, %v3143, %v2881
        %v3172 = vsel %vm3116, %v3144, %v2888
        %v3173 = vsel %vm3117, %v3145, %v2895
        %v3174 = vsel %vm3118, %v3146, %v2902
        %v3175 = vsel %vm3119, %v3147, %v2909
        %v3176 = vsel %vm3120, %v3148, %v2916
        %v3177 = vsel %vm3121, %v3149, %v2923
        %v3178 = vsel %vm3122, %v3150, %v2930
        %v3179 = vsel %vm3123, %v3151, %v2937
        %v3180 = vsel %vm3124, %v3152, %v2944
        %v3181 = vsel %vm3125, %v3153, %v2951
        %v3182 = vsel %vm3126, %v3154, %v2958
        %v3183 = vsel %vm3127, %v3155, %v2965
        %v3184 = vsel %vm3128, %v3156, %v2972
        %v3185 = vsel %vm3129, %v3157, %v2979
        %v3186 = vsel %vm3130, %v3158, %v2986
        %v3187 = vsel %vm3131, %v3159, %v2993
        %v3188 = vsel %vm3132, %v3160, %v3000
        %v3189 = vsel %vm3133, %v3161, %v3007
        %v3190 = vsel %vm3134, %v3162, %v3014
        %v3191 = vsel %vm3135, %v3163, %v3021
        %v3192 = vsel %vm3136, %v3164, %v3028
        %v3193 = vsel %vm3137, %v3165, %v3035
        %v3194 = vsel %vm3138, %v3166, %v3042
        %v3195 = vsel %vm3139, %v3167, %v3049
        %v3196 = vsel %vm3140, %v3168, %v3056
        %vm3197 = vcmp.lt.s32.totalorder %v3169, 14
        %vm3198 = vcmp.lt.s32.totalorder %v3170, 14
        %vm3199 = vcmp.lt.s32.totalorder %v3171, 14
        %vm3200 = vcmp.lt.s32.totalorder %v3172, 14
        %vm3201 = vcmp.lt.s32.totalorder %v3173, 14
        %vm3202 = vcmp.lt.s32.totalorder %v3174, 14
        %vm3203 = vcmp.lt.s32.totalorder %v3175, 14
        %vm3204 = vcmp.lt.s32.totalorder %v3176, 14
        %vm3205 = vcmp.lt.s32.totalorder %v3177, 14
        %vm3206 = vcmp.lt.s32.totalorder %v3178, 14
        %vm3207 = vcmp.lt.s32.totalorder %v3179, 14
        %vm3208 = vcmp.lt.s32.totalorder %v3180, 14
        %vm3209 = vcmp.lt.s32.totalorder %v3181, 14
        %vm3210 = vcmp.lt.s32.totalorder %v3182, 14
        %vm3211 = vcmp.lt.s32.totalorder %v3183, 14
        %vm3212 = vcmp.lt.s32.totalorder %v3184, 14
        %vm3213 = vcmp.lt.s32.totalorder %v3185, 14
        %vm3214 = vcmp.lt.s32.totalorder %v3186, 14
        %vm3215 = vcmp.lt.s32.totalorder %v3187, 14
        %vm3216 = vcmp.lt.s32.totalorder %v3188, 14
        %vm3217 = vcmp.lt.s32.totalorder %v3189, 14
        %vm3218 = vcmp.lt.s32.totalorder %v3190, 14
        %vm3219 = vcmp.lt.s32.totalorder %v3191, 14
        %vm3220 = vcmp.lt.s32.totalorder %v3192, 14
        %vm3221 = vcmp.lt.s32.totalorder %v3193, 14
        %vm3222 = vcmp.lt.s32.totalorder %v3194, 14
        %vm3223 = vcmp.lt.s32.totalorder %v3195, 14
        %vm3224 = vcmp.lt.s32.totalorder %v3196, 14
        %v3225 = vsel %vm3197, 1, 0
        %v3226 = vsel %vm3198, 1, 0
        %v3227 = vsel %vm3199, 1, 0
        %v3228 = vsel %vm3200, 1, 0
        %v3229 = vsel %vm3201, 1, 0
        %v3230 = vsel %vm3202, 1, 0
        %v3231 = vsel %vm3203, 1, 0
        %v3232 = vsel %vm3204, 1, 0
        %v3233 = vsel %vm3205, 1, 0
        %v3234 = vsel %vm3206, 1, 0
        %v3235 = vsel %vm3207, 1, 0
        %v3236 = vsel %vm3208, 1, 0
        %v3237 = vsel %vm3209, 1, 0
        %v3238 = vsel %vm3210, 1, 0
        %v3239 = vsel %vm3211, 1, 0
        %v3240 = vsel %vm3212, 1, 0
        %v3241 = vsel %vm3213, 1, 0
        %v3242 = vsel %vm3214, 1, 0
        %v3243 = vsel %vm3215, 1, 0
        %v3244 = vsel %vm3216, 1, 0
        %v3245 = vsel %vm3217, 1, 0
        %v3246 = vsel %vm3218, 1, 0
        %v3247 = vsel %vm3219, 1, 0
        %v3248 = vsel %vm3220, 1, 0
        %v3249 = vsel %vm3221, 1, 0
        %v3250 = vsel %vm3222, 1, 0
        %v3251 = vsel %vm3223, 1, 0
        %v3252 = vsel %vm3224, 1, 0
        %vm3253 = vcmp.eq.s32.totalorder %v3225, 1
        %vm3254 = vcmp.eq.s32.totalorder %v3226, 1
        %vm3255 = vcmp.eq.s32.totalorder %v3227, 1
        %vm3256 = vcmp.eq.s32.totalorder %v3228, 1
        %vm3257 = vcmp.eq.s32.totalorder %v3229, 1
        %vm3258 = vcmp.eq.s32.totalorder %v3230, 1
        %vm3259 = vcmp.eq.s32.totalorder %v3231, 1
        %vm3260 = vcmp.eq.s32.totalorder %v3232, 1
        %vm3261 = vcmp.eq.s32.totalorder %v3233, 1
        %vm3262 = vcmp.eq.s32.totalorder %v3234, 1
        %vm3263 = vcmp.eq.s32.totalorder %v3235, 1
        %vm3264 = vcmp.eq.s32.totalorder %v3236, 1
        %vm3265 = vcmp.eq.s32.totalorder %v3237, 1
        %vm3266 = vcmp.eq.s32.totalorder %v3238, 1
        %vm3267 = vcmp.eq.s32.totalorder %v3239, 1
        %vm3268 = vcmp.eq.s32.totalorder %v3240, 1
        %vm3269 = vcmp.eq.s32.totalorder %v3241, 1
        %vm3270 = vcmp.eq.s32.totalorder %v3242, 1
        %vm3271 = vcmp.eq.s32.totalorder %v3243, 1
        %vm3272 = vcmp.eq.s32.totalorder %v3244, 1
        %vm3273 = vcmp.eq.s32.totalorder %v3245, 1
        %vm3274 = vcmp.eq.s32.totalorder %v3246, 1
        %vm3275 = vcmp.eq.s32.totalorder %v3247, 1
        %vm3276 = vcmp.eq.s32.totalorder %v3248, 1
        %vm3277 = vcmp.eq.s32.totalorder %v3249, 1
        %vm3278 = vcmp.eq.s32.totalorder %v3250, 1
        %vm3279 = vcmp.eq.s32.totalorder %v3251, 1
        %vm3280 = vcmp.eq.s32.totalorder %v3252, 1
        %v3281 = vsel %vm3253, %v2664, 0.0
        %v3282 = vsel %vm3254, %v2665, 0.0
        %v3283 = vsel %vm3255, %v2666, 0.0
        %v3284 = vsel %vm3256, %v2667, 0.0
        %v3285 = vsel %vm3257, %v2668, 0.0
        %v3286 = vsel %vm3258, %v2669, 0.0
        %v3287 = vsel %vm3259, %v2670, 0.0
        %v3288 = vsel %vm3260, %v2671, 0.0
        %v3289 = vsel %vm3261, %v2672, 0.0
        %v3290 = vsel %vm3262, %v2673, 0.0
        %v3291 = vsel %vm3263, %v2674, 0.0
        %v3292 = vsel %vm3264, %v2675, 0.0
        %v3293 = vsel %vm3265, %v2676, 0.0
        %v3294 = vsel %vm3266, %v2677, 0.0
        %v3295 = vsel %vm3267, %v2678, 0.0
        %v3296 = vsel %vm3268, %v2679, 0.0
        %v3297 = vsel %vm3269, %v2680, 0.0
        %v3298 = vsel %vm3270, %v2681, 0.0
        %v3299 = vsel %vm3271, %v2682, 0.0
        %v3300 = vsel %vm3272, %v2683, 0.0
        %v3301 = vsel %vm3273, %v2684, 0.0
        %v3302 = vsel %vm3274, %v2685, 0.0
        %v3303 = vsel %vm3275, %v2686, 0.0
        %v3304 = vsel %vm3276, %v2687, 0.0
        %v3305 = vsel %vm3277, %v2688, 0.0
        %v3306 = vsel %vm3278, %v2689, 0.0
        %v3307 = vsel %vm3279, %v2690, 0.0
        %v3308 = vsel %vm3280, %v2691, 0.0
        %v3309 = vadd.f32 %v3281, %v3282
        %v3310 = vadd.f32 %v3309, %v3283
        %v3311 = vadd.f32 %v3310, %v3284
        %v3312 = vadd.f32 %v3311, %v3285
        %v3313 = vadd.f32 %v3312, %v3286
        %v3314 = vadd.f32 %v3313, %v3287
        %v3315 = vadd.f32 %v3314, %v3288
        %v3316 = vadd.f32 %v3315, %v3289
        %v3317 = vadd.f32 %v3316, %v3290
        %v3318 = vadd.f32 %v3317, %v3291
        %v3319 = vadd.f32 %v3318, %v3292
        %v3320 = vadd.f32 %v3319, %v3293
        %v3321 = vadd.f32 %v3320, %v3294
        %v3322 = vadd.f32 %v3321, %v3295
        %v3323 = vadd.f32 %v3322, %v3296
        %v3324 = vadd.f32 %v3323, %v3297
        %v3325 = vadd.f32 %v3324, %v3298
        %v3326 = vadd.f32 %v3325, %v3299
        %v3327 = vadd.f32 %v3326, %v3300
        %v3328 = vadd.f32 %v3327, %v3301
        %v3329 = vadd.f32 %v3328, %v3302
        %v3330 = vadd.f32 %v3329, %v3303
        %v3331 = vadd.f32 %v3330, %v3304
        %v3332 = vadd.f32 %v3331, %v3305
        %v3333 = vadd.f32 %v3332, %v3306
        %v3334 = vadd.f32 %v3333, %v3307
        %v3335 = vadd.f32 %v3334, %v3308
        %v3336 = vrot.slane %v3335, 4
        %v3337 = vadd.f32 %v3335, %v3336
        %v3338 = vrot.slane %v3337, 2
        %v3339 = vadd.f32 %v3337, %v3338
        %v3340 = vrot.slane %v3339, 1
        %v3341 = vadd.f32 %v3339, %v3340
        %v3342 = vmul.f32 %v3281, %v3281
        %v3343 = vmul.f32 %v3282, %v3282
        %v3344 = vmul.f32 %v3283, %v3283
        %v3345 = vmul.f32 %v3284, %v3284
        %v3346 = vmul.f32 %v3285, %v3285
        %v3347 = vmul.f32 %v3286, %v3286
        %v3348 = vmul.f32 %v3287, %v3287
        %v3349 = vmul.f32 %v3288, %v3288
        %v3350 = vmul.f32 %v3289, %v3289
        %v3351 = vmul.f32 %v3290, %v3290
        %v3352 = vmul.f32 %v3291, %v3291
        %v3353 = vmul.f32 %v3292, %v3292
        %v3354 = vmul.f32 %v3293, %v3293
        %v3355 = vmul.f32 %v3294, %v3294
        %v3356 = vmul.f32 %v3295, %v3295
        %v3357 = vmul.f32 %v3296, %v3296
        %v3358 = vmul.f32 %v3297, %v3297
        %v3359 = vmul.f32 %v3298, %v3298
        %v3360 = vmul.f32 %v3299, %v3299
        %v3361 = vmul.f32 %v3300, %v3300
        %v3362 = vmul.f32 %v3301, %v3301
        %v3363 = vmul.f32 %v3302, %v3302
        %v3364 = vmul.f32 %v3303, %v3303
        %v3365 = vmul.f32 %v3304, %v3304
        %v3366 = vmul.f32 %v3305, %v3305
        %v3367 = vmul.f32 %v3306, %v3306
        %v3368 = vmul.f32 %v3307, %v3307
        %v3369 = vmul.f32 %v3308, %v3308
        %v3370 = vadd.f32 %v3342, %v3343
        %v3371 = vadd.f32 %v3370, %v3344
        %v3372 = vadd.f32 %v3371, %v3345
        %v3373 = vadd.f32 %v3372, %v3346
        %v3374 = vadd.f32 %v3373, %v3347
        %v3375 = vadd.f32 %v3374, %v3348
        %v3376 = vadd.f32 %v3375, %v3349
        %v3377 = vadd.f32 %v3376, %v3350
        %v3378 = vadd.f32 %v3377, %v3351
        %v3379 = vadd.f32 %v3378, %v3352
        %v3380 = vadd.f32 %v3379, %v3353
        %v3381 = vadd.f32 %v3380, %v3354
        %v3382 = vadd.f32 %v3381, %v3355
        %v3383 = vadd.f32 %v3382, %v3356
        %v3384 = vadd.f32 %v3383, %v3357
        %v3385 = vadd.f32 %v3384, %v3358
        %v3386 = vadd.f32 %v3385, %v3359
        %v3387 = vadd.f32 %v3386, %v3360
        %v3388 = vadd.f32 %v3387, %v3361
        %v3389 = vadd.f32 %v3388, %v3362
        %v3390 = vadd.f32 %v3389, %v3363
        %v3391 = vadd.f32 %v3390, %v3364
        %v3392 = vadd.f32 %v3391, %v3365
        %v3393 = vadd.f32 %v3392, %v3366
        %v3394 = vadd.f32 %v3393, %v3367
        %v3395 = vadd.f32 %v3394, %v3368
        %v3396 = vadd.f32 %v3395, %v3369
        %v3397 = vrot.slane %v3396, 4
        %v3398 = vadd.f32 %v3396, %v3397
        %v3399 = vrot.slane %v3398, 2
        %v3400 = vadd.f32 %v3398, %v3399
        %v3401 = vrot.slane %v3400, 1
        %v3402 = vadd.f32 %v3400, %v3401
        %3403 = vst [vmem:[%s201] sm:$0xff] %v3341
        %3404 = vst [vmem:[%s208] sm:$0xff] %v3402
        %s3405 = sand.u32 %s77, 1
        %s3406 = scalar_lea.sflag [#allocation3], %s3405
        %s3407 = sand.u32 %s77, 1
        %s3408 = smul.addr %s3407, 112
        %s3409 = scalar_lea.vmem [#allocation2], %s3408
        %s3410 = sand.u32 %s22, 1
        %s3411 = scalar_lea.sflag [#allocation5], %s3410
        %s3412 = sand.u32 %s103, 1
        %s3413 = smul.addr %s3412, 8
        %s3414 = scalar_lea.vmem [#allocation4], %s3413
        %s3415 = sand.u32 %s22, 1
        %s3416 = scalar_lea.sflag [#allocation5], %s3415
        %s3417 = sand.u32 %s129, 1
        %s3418 = smul.addr %s3417, 8
        %s3419 = scalar_lea.vmem [#allocation6], %s3418
        // Predicated region
        $region29: #{tpu_custom_call.1} parent=27 // pred_check
          %p3420 = pneg %p87
        $region30: #{tpu_custom_call.1} parent=27 // pred_check_branch
          %3422 = sbr.rel (%p3420) target = $region32
        $region31: #{tpu_custom_call.1} parent=27 // pred_region
          %s3423 = smul.u32 28, %s22
          %s3425 = ssub.s32 1792, 1792
          %3426 = vsyncadd %s3406, %s3425
          %s3427 = smul.addr %s3423, 64
          %s3428 = scalar_lea.hbm %s2, %s3427
          %s3429 = sshll.u32 %s3409, 4
          %s3430 = int_to_ptr.vmem [resolvable:$true] %s3429
          %3435 = dma.vmem_to_hbm [thread:$0]  %s3430, 1792, %s3428, %s3406, 64, 64, 4
        $region32: #{tpu_custom_call.1} parent=27 // pred_fallthru
          _
        // Predicated region
        $region33: #{tpu_custom_call.1} parent=27 // pred_check
          %p3436 = pneg %p113
        $region34: #{tpu_custom_call.1} parent=27 // pred_check_branch
          %3438 = sbr.rel (%p3436) target = $region36
        $region35: #{tpu_custom_call.1} parent=27 // pred_region
          %s3440 = ssub.s32 128, 128
          %3441 = vsyncadd %s3411, %s3440
          %s3442 = smul.addr %s22, 128
          %s3443 = scalar_lea.hbm %s3, %s3442
          %s3445 = sshll.u32 %s3414, 4
          %s3446 = int_to_ptr.vmem [resolvable:$true] %s3445
          %3448 = dma.vmem_to_hbm [thread:$0]  %s3446, 128, %s3443, %s3411
        $region36: #{tpu_custom_call.1} parent=27 // pred_fallthru
          _
        // Predicated region
        $region37: #{tpu_custom_call.1} parent=27 // pred_check
          %p3449 = pneg %p139
        $region38: #{tpu_custom_call.1} parent=27 // pred_check_branch
          %3451 = sbr.rel (%p3449) target = $region40
        $region39: #{tpu_custom_call.1} parent=27 // pred_region
          %s3453 = ssub.s32 128, 128
          %3454 = vsyncadd %s3416, %s3453
          %s3455 = smul.addr %s22, 128
          %s3456 = scalar_lea.hbm %s4, %s3455
          %s3458 = sshll.u32 %s3419, 4
          %s3459 = int_to_ptr.vmem [resolvable:$true] %s3458
          %3461 = dma.vmem_to_hbm [thread:$0]  %s3459, 128, %s3456, %s3416
        $region40: #{tpu_custom_call.1} parent=27 // pred_fallthru
          _
      $region28: #{tpu_custom_call.1} parent=5 // pred_fallthru
        _
      %p3462 = scmp.le.s32.totalorder 2, %s17
      // Predicated region
      $region41: #{tpu_custom_call.1} parent=5 // pred_check
        %p3463 = pneg %p3462
      $region42: #{tpu_custom_call.1} parent=5 // pred_check_branch
        %3465 = sbr.rel (%p3463) target = $region44
      $region43: #{tpu_custom_call.1} parent=5 // pred_region
        %s3466 = ssub.s32 %s17, 2
        // Predicated region
        $region45: #{tpu_custom_call.1} parent=43 // pred_check
          %p3467 = pneg %p93
        $region46: #{tpu_custom_call.1} parent=43 // pred_check_branch
          %3469 = sbr.rel (%p3467) target = $region48
        $region47: #{tpu_custom_call.1} parent=43 // pred_region
          %s3470 = sand.u32 %s78, 1
          %s3471 = scalar_lea.sflag [#allocation3], %s3470
          %s3472 = sand.u32 %s78, 1
          %s3473 = smul.addr %s3472, 112
          %s3474 = scalar_lea.vmem [#allocation2], %s3473
          %3475 = dma.done %s3471, 1792
        $region48: #{tpu_custom_call.1} parent=43 // pred_fallthru
          _
        // Predicated region
        $region49: #{tpu_custom_call.1} parent=43 // pred_check
          %p3476 = pneg %p119
        $region50: #{tpu_custom_call.1} parent=43 // pred_check_branch
          %3478 = sbr.rel (%p3476) target = $region52
        $region51: #{tpu_custom_call.1} parent=43 // pred_region
          %s3479 = sand.u32 %s23, 1
          %s3480 = scalar_lea.sflag [#allocation5], %s3479
          %s3481 = sand.u32 %s104, 1
          %s3482 = smul.addr %s3481, 8
          %s3483 = scalar_lea.vmem [#allocation4], %s3482
          %3484 = dma.done %s3480, 128
        $region52: #{tpu_custom_call.1} parent=43 // pred_fallthru
          _
        // Predicated region
        $region53: #{tpu_custom_call.1} parent=43 // pred_check
          %p3485 = pneg %p145
        $region54: #{tpu_custom_call.1} parent=43 // pred_check_branch
          %3487 = sbr.rel (%p3485) target = $region56
        $region55: #{tpu_custom_call.1} parent=43 // pred_region
          %s3488 = sand.u32 %s23, 1
          %s3489 = scalar_lea.sflag [#allocation5], %s3488
          %s3490 = sand.u32 %s130, 1
          %s3491 = smul.addr %s3490, 8
          %s3492 = scalar_lea.vmem [#allocation6], %s3491
          %3493 = dma.done %s3489, 128
        $region56: #{tpu_custom_call.1} parent=43 // pred_fallthru
          _
      $region44: #{tpu_custom_call.1} parent=5 // pred_fallthru
        _
    $region6: #{tpu_custom_call.1} parent=1 // loop_footer
      %s21 = sadd.s32 1, %s17
    $region7: #{tpu_custom_call.1} parent=1 // loop_footer_branch
      %16 = sbr.rel target = $region3
    $region8: #{tpu_custom_call.1} parent=1 // loop_exit
      _
    %3494 = vsyncpa [#allocation3], 1
    %s3495 = scalar_lea.sflag [#allocation3], 1
    %3496 = vsyncpa %s3495, 1
    %3497 = vsyncpa [#allocation5], 1
    %s3498 = scalar_lea.sflag [#allocation5], 1
    %3499 = vsyncpa %s3498, 1

</llo_original>
